<compile_context>
chip_gen: v7x
topology: tpu7x:2x2x1
jax: 0.10.0
libtpu: 0.0.40
codegen_flags: <defaults>
</compile_context>

<pallas_src>
import jax
import jax.numpy as jnp
from jax import lax
from jax.experimental import pallas as pl
from jax.experimental.pallas import tpu as pltpu


# ----------------------------------------------------------------------------
# Stage 1: backbone projection + position add + LSTM input projection, fused.
#   gates_x = (img_flat @ W_proj + b_proj + pos_emb) @ W_ih + (b_ih + b_hh)
# ----------------------------------------------------------------------------
def _gates_kernel(x_ref, pos_ref, wproj_ref, bproj_ref, wih_ref, bg_ref, g_ref):
    feat = (
        jnp.dot(x_ref[...], wproj_ref[...], preferred_element_type=jnp.float32)
        + bproj_ref[...]
    )
    lstmin = feat + pos_ref[...]
    g_ref[...] = (
        jnp.dot(lstmin, wih_ref[...], preferred_element_type=jnp.float32)
        + bg_ref[...]
    )


def gates_precompute(x_flat, pos_flat, w_proj, b_proj, wih, bias_gates,
                     *, tile_m=128):
    M, K = x_flat.shape
    D = w_proj.shape[1]
    G = wih.shape[1]
    tm = M if M <= tile_m else tile_m
    grid = (pl.cdiv(M, tm),)
    return pl.pallas_call(
        _gates_kernel,
        out_shape=jax.ShapeDtypeStruct((M, G), jnp.float32),
        grid=grid,
        in_specs=[
            pl.BlockSpec((tm, K), lambda i: (i, 0)),
            pl.BlockSpec((tm, D), lambda i: (i, 0)),
            pl.BlockSpec((K, D), lambda i: (0, 0)),
            pl.BlockSpec((1, D), lambda i: (0, 0)),
            pl.BlockSpec((D, G), lambda i: (0, 0)),
            pl.BlockSpec((1, G), lambda i: (0, 0)),
        ],
        out_specs=pl.BlockSpec((tm, G), lambda i: (i, 0)),
        compiler_params=pltpu.CompilerParams(
            dimension_semantics=("parallel",)),
    )(x_flat, pos_flat, w_proj, b_proj, wih, bias_gates)


# ----------------------------------------------------------------------------
# Stage 2: the recurrence with fused output heads. Single grid step;
# lax.fori_loop over frames with h/c carried in VMEM scratch. Per-frame outputs:
#   oh[t]    = [fc_pred(h_x) | fc_utility(h_x)]   -> [B, 3]
#   oc[t]    = fc_pred_c(c_new)                   -> [B, 2]
#   watch[t] = gumbel_softmax(fc_use(h_raw))      -> [B, 2]  (t >= 1)
# ----------------------------------------------------------------------------
def _recurrent_kernel(gx_ref, noise_ref, whh_ref, wuse_ref, buse_ref,
                      wh_ref, bh_ref, wc_ref, bc_ref,
                      oh_ref, oc_ref, watch_ref, h_scr, c_scr):
    nf = gx_ref.shape[0]
    B = gx_ref.shape[1]
    D = h_scr.shape[1]

    def cell_step(gates, c_prev):
        # PyTorch LSTMCell gate order: (i, f, g, o)
        i_g = jax.nn.sigmoid(gates[:, 0:D])
        f_g = jax.nn.sigmoid(gates[:, D:2 * D])
        g_g = jnp.tanh(gates[:, 2 * D:3 * D])
        o_g = jax.nn.sigmoid(gates[:, 3 * D:4 * D])
        c_new = f_g * c_prev + i_g * g_g
        h_raw = o_g * jnp.tanh(c_new)
        return h_raw, c_new

    def write_heads(t, h_x, c_new):
        oh_ref[t] = (
            jnp.dot(h_x, wh_ref[...], preferred_element_type=jnp.float32)
            + bh_ref[...]
        )
        oc_ref[t] = (
            jnp.dot(c_new, wc_ref[...], preferred_element_type=jnp.float32)
            + bc_ref[...]
        )

    # Frame 0: h_prev = c_prev = 0, so gates == gates_x[0] and h_x == h_raw.
    h0, c0 = cell_step(gx_ref[0], jnp.zeros((B, D), jnp.float32))
    write_heads(0, h0, c0)
    watch_ref[0] = jnp.zeros((B, 2), jnp.float32)   # placeholder, sliced off later
    h_scr[...] = h0
    c_scr[...] = c0

    def step(t, carry):
        h_prev = h_scr[...]
        c_prev = c_scr[...]
        gates = gx_ref[t] + jnp.dot(
            h_prev, whh_ref[...], preferred_element_type=jnp.float32)
        h_raw, c_new = cell_step(gates, c_prev)

        # fc_use + gumbel_softmax(tau=1, hard=False) = softmax(logits + noise)
        logits = (
            jnp.dot(h_raw, wuse_ref[...], preferred_element_type=jnp.float32)
            + buse_ref[...]
            + noise_ref[t]
        )
        z = logits - jnp.max(logits, axis=-1, keepdims=True)
        e = jnp.exp(z)
        use = e * pl.reciprocal(jnp.sum(e, axis=-1, keepdims=True), approx=True)

        # mixing (c_trans=False): h_x = h_prev*use[:,0] + h_raw*use[:,1]
        h_x = h_prev * use[:, 0:1] + h_raw * use[:, 1:2]

        watch_ref[t] = use
        write_heads(t, h_x, c_new)
        h_scr[...] = h_x
        c_scr[...] = c_new
        return carry

    lax.fori_loop(1, nf, step, 0)


def recurrence_fused(gates_tm, noise, whh, wuse, buse, w_h, b_h, w_c, b_c):
    F, B, G = gates_tm.shape
    D = whh.shape[0]
    Nh = w_h.shape[1]
    Nc = w_c.shape[1]
    grid_spec = pltpu.PrefetchScalarGridSpec(
        num_scalar_prefetch=0,
        grid=(1,),
        in_specs=[
            pl.BlockSpec((F, B, G), lambda i: (0, 0, 0)),   # precomputed gates_x
            pl.BlockSpec((F, B, 2), lambda i: (0, 0, 0)),   # gumbel noise
            pl.BlockSpec((D, G), lambda i: (0, 0)),         # W_hh^T
            pl.BlockSpec((D, 2), lambda i: (0, 0)),         # fc_use W^T
            pl.BlockSpec((1, 2), lambda i: (0, 0)),         # fc_use b
            pl.BlockSpec((D, Nh), lambda i: (0, 0)),        # [fc_pred | fc_utility] W^T
            pl.BlockSpec((1, Nh), lambda i: (0, 0)),        # [fc_pred | fc_utility] b
            pl.BlockSpec((D, Nc), lambda i: (0, 0)),        # fc_pred_c W^T
            pl.BlockSpec((1, Nc), lambda i: (0, 0)),        # fc_pred_c b
        ],
        out_specs=[
            pl.BlockSpec((F, B, Nh), lambda i: (0, 0, 0)),  # hidden|utility heads
            pl.BlockSpec((F, B, Nc), lambda i: (0, 0, 0)),  # cell heads
            pl.BlockSpec((F, B, 2), lambda i: (0, 0, 0)),   # watch (use)
        ],
        scratch_shapes=[
            pltpu.VMEM((B, D), jnp.float32),                # h carry
            pltpu.VMEM((B, D), jnp.float32),                # c carry
        ],
    )
    out_shapes = (
        jax.ShapeDtypeStruct((F, B, Nh), jnp.float32),
        jax.ShapeDtypeStruct((F, B, Nc), jnp.float32),
        jax.ShapeDtypeStruct((F, B, 2), jnp.float32),
    )
    return pl.pallas_call(
        _recurrent_kernel,
        grid_spec=grid_spec,
        out_shape=out_shapes,
        compiler_params=pltpu.CompilerParams(
            dimension_semantics=("arbitrary",)),
    )(gates_tm, noise, whh, wuse, buse, w_h, b_h, w_c, b_c)


# ----------------------------------------------------------------------------
# Ada forward (position_mode='add').
# ----------------------------------------------------------------------------
def ada_forward(params, img, position_idx, noise):
    B, F, C, H, W = img.shape
    K = C * H * W
    D = params["w_proj"].shape[1]

    x_flat = img.reshape(B * F, K).astype(jnp.float32)
    pos_emb = jnp.take(params["embedding"], position_idx, axis=0)   # [B, F, D]
    pos_flat = pos_emb.reshape(B * F, D)

    # Hoisted input projection: gates_x over all frames at once.
    bias_gates = params["bih"] + params["bhh"]                      # [1, 4D]
    gates = gates_precompute(x_flat, pos_flat, params["w_proj"],
                             params["b_proj"], params["wih"], bias_gates)
    gates_tm = jnp.transpose(gates.reshape(B, F, 4 * D), (1, 0, 2))  # [F, B, 4D]

    # Sequential recurrence with fused output heads (single kernel).
    w_h = jnp.concatenate([params["wpred"], params["wutil"]], axis=1)   # [D, 3]
    b_h = jnp.concatenate([params["bpred"], params["butil"]], axis=1)   # [1, 3]
    oh, oc, watch = recurrence_fused(gates_tm, noise, params["whh"],
                                     params["wuse"], params["buse"],
                                     w_h, b_h, params["wpredc"], params["bpredc"])

    hidden = oh[:, :, 0:2]                 # [F, B, 2]
    utility = oh[:, :, 2:3]                # [F, B, 1]
    cell = oc                              # [F, B, 2]
    # PyTorch returns `watch` only for frames 1..F-1.
    return hidden, cell, utility, watch[1:]


# ----------------------------------------------------------------------------
# Pure-JAX reference for correctness checking.
# ----------------------------------------------------------------------------
def lstm_ref(feature, p, noise):
    x = jnp.transpose(feature, (1, 0, 2))
    F, B, D = x.shape
    h = jnp.zeros((B, D), jnp.float32)
    c = jnp.zeros((B, D), jnp.float32)
    hs, cs, us, ws = [], [], [], []
    for t in range(F):
        gates = x[t] @ p["wih"] + p["bih"] + h @ p["whh"] + p["bhh"]
        i_g = jax.nn.sigmoid(gates[:, :D])
        f_g = jax.nn.sigmoid(gates[:, D:2 * D])
        g_g = jnp.tanh(gates[:, 2 * D:3 * D])
        o_g = jax.nn.sigmoid(gates[:, 3 * D:])
        c_new = f_g * c + i_g * g_g
        h_raw = o_g * jnp.tanh(c_new)
        if t == 0:
            h_x = h_raw
        else:
            use = jax.nn.softmax(h_raw @ p["wuse"] + p["buse"] + noise[t], axis=-1)
            h_x = h * use[:, 0:1] + h_raw * use[:, 1:2]
            ws.append(use)
        cs.append(c_new @ p["wpredc"] + p["bpredc"])
        hs.append(h_x @ p["wpred"] + p["bpred"])
        us.append(h_x @ p["wutil"] + p["butil"])
        h, c = h_x, c_new
    return jnp.stack(hs), jnp.stack(cs), jnp.stack(us), jnp.stack(ws)


# ----------------------------------------------------------------------------
# Deterministic parameter init + demo.
# ----------------------------------------------------------------------------
def init_params(key, D, in_pix, num_embeddings=4250):
    ks = jax.random.split(key, 16)
    u = lambda k, shape, s: jax.random.uniform(k, shape, jnp.float32, -s, s)
    s = 1.0 / jnp.sqrt(D)
    sp = 1.0 / jnp.sqrt(in_pix)
    return {
        # stand-in backbone projection [C*H*W -> D]
        "w_proj": u(ks[0], (in_pix, D), sp),
        "b_proj": u(ks[1], (1, D), sp),
        # embedding table
        "embedding": 0.02 * jax.random.normal(ks[2], (num_embeddings, D), jnp.float32),
        # LSTMCell (transposed: [in, 4D])
        "wih": u(ks[3], (D, 4 * D), s),
        "whh": u(ks[4], (D, 4 * D), s),
        "bih": u(ks[5], (1, 4 * D), s),
        "bhh": u(ks[6], (1, 4 * D), s),
        # heads (transposed: [D, out])
        "wuse": u(ks[7], (D, 2), s), "buse": u(ks[8], (1, 2), s),
        "wpred": u(ks[9], (D, 2), s), "bpred": u(ks[10], (1, 2), s),
        "wpredc": u(ks[11], (D, 2), s), "bpredc": u(ks[12], (1, 2), s),
        "wutil": u(ks[13], (D, 1), s), "butil": u(ks[14], (1, 1), s),
    }


if __name__ == "__main__":
    # Small shapes consistent with the module: img [B, F, C=1, H, W],
    # feature_len scaled down 2048 -> 256, num_frame 96 -> 8.
    B, F, C, H, W = 2, 8, 1, 16, 16
    D = 256

    key = jax.random.PRNGKey(0)
    k_par, k_img, k_pos, k_noise = jax.random.split(key, 4)

    params = init_params(k_par, D, C * H * W)
    img = jax.random.normal(k_img, (B, F, C, H, W), jnp.float32)
    position_idx = jax.random.randint(k_pos, (B, F), 0, 4250)
    noise = jax.random.gumbel(k_noise, (F, B, 2), dtype=jnp.float32)

    hidden, cell, utility, watch = jax.jit(ada_forward)(params, img,
                                                        position_idx, noise)
    jax.block_until_ready((hidden, cell, utility, watch))

    # Reference check (pure JAX, f32).
    feat_ref = (img.reshape(B * F, C * H * W) @ params["w_proj"]
                + params["b_proj"]).reshape(B, F, D)
    lstmin_ref = feat_ref + jnp.take(params["embedding"], position_idx, axis=0)
    h_r, c_r, u_r, w_r = lstm_ref(lstmin_ref, params, noise)

    assert hidden.shape == (F, B, 2) and cell.shape == (F, B, 2)
    assert utility.shape == (F, B, 1) and watch.shape == (F - 1, B, 2)
    ok = (jnp.allclose(hidden, h_r, atol=1e-2, rtol=1e-2)
          and jnp.allclose(cell, c_r, atol=1e-2, rtol=1e-2)
          and jnp.allclose(utility, u_r, atol=1e-2, rtol=1e-2)
          and jnp.allclose(watch, w_r, atol=1e-2, rtol=1e-2))
    assert bool(ok), "Pallas output does not match JAX reference"
    print("KERNEL_OK")
</pallas_src>

<mosaic_0001>
module attributes {stable_mosaic.version = 11 : i64} {
  func.func @_gates_kernel(%arg0: i32, %arg1: memref<16x256xf32, #tpu.memory_space<vmem>>, %arg2: memref<16x256xf32, #tpu.memory_space<vmem>>, %arg3: memref<256x256xf32, #tpu.memory_space<vmem>>, %arg4: memref<1x256xf32, #tpu.memory_space<vmem>>, %arg5: memref<256x1024xf32, #tpu.memory_space<vmem>>, %arg6: memref<1x1024xf32, #tpu.memory_space<vmem>>, %arg7: memref<16x1024xf32, #tpu.memory_space<vmem>>) attributes {dimension_semantics = [#tpu.dimension_semantics<parallel>], iteration_bounds = array<i64: 1>, scalar_prefetch = 0 : i64, scratch_operands = 0 : i64, tpu.core_type = #tpu.core_type<tc>, window_params = [{transform_indices = @transform_0, window_bounds = array<i64: 16, 256>}, {transform_indices = @transform_1, window_bounds = array<i64: 16, 256>}, {pipeline_mode = #tpu.pipeline_mode<synchronous>, transform_indices = @transform_2, window_bounds = array<i64: 256, 256>}, {pipeline_mode = #tpu.pipeline_mode<synchronous>, transform_indices = @transform_3, window_bounds = array<i64: 1, 256>}, {pipeline_mode = #tpu.pipeline_mode<synchronous>, transform_indices = @transform_4, window_bounds = array<i64: 256, 1024>}, {pipeline_mode = #tpu.pipeline_mode<synchronous>, transform_indices = @transform_5, window_bounds = array<i64: 1, 1024>}, {transform_indices = @transform_6, window_bounds = array<i64: 16, 1024>}]} {
    %c0 = arith.constant 0 : index
    %c0_0 = arith.constant 0 : index
    %0 = vector.load %arg1[%c0, %c0_0] : memref<16x256xf32, #tpu.memory_space<vmem>>, vector<16x256xf32>
    %c0_1 = arith.constant 0 : index
    %c0_2 = arith.constant 0 : index
    %1 = vector.load %arg3[%c0_1, %c0_2] : memref<256x256xf32, #tpu.memory_space<vmem>>, vector<256x256xf32>
    %cst = arith.constant dense<0.000000e+00> : vector<16x256xf32>
    %2 = tpu.matmul %0, %1, %cst {dimension_numbers = #tpu.dot_dimension_numbers<[1], [0], [0], [1], [0, 0, 1, 1], [], []>} : vector<16x256xf32>, vector<256x256xf32>, vector<16x256xf32> -> vector<16x256xf32>
    %c0_3 = arith.constant 0 : index
    %c0_4 = arith.constant 0 : index
    %3 = vector.load %arg4[%c0_3, %c0_4] : memref<1x256xf32, #tpu.memory_space<vmem>>, vector<1x256xf32>
    %4 = vector.broadcast %3 : vector<1x256xf32> to vector<16x256xf32>
    %5 = arith.addf %2, %4 : vector<16x256xf32>
    %c0_5 = arith.constant 0 : index
    %c0_6 = arith.constant 0 : index
    %6 = vector.load %arg2[%c0_5, %c0_6] : memref<16x256xf32, #tpu.memory_space<vmem>>, vector<16x256xf32>
    %7 = arith.addf %5, %6 : vector<16x256xf32>
    %c0_7 = arith.constant 0 : index
    %c0_8 = arith.constant 0 : index
    %8 = vector.load %arg5[%c0_7, %c0_8] : memref<256x1024xf32, #tpu.memory_space<vmem>>, vector<256x1024xf32>
    %cst_9 = arith.constant dense<0.000000e+00> : vector<16x1024xf32>
    %9 = tpu.matmul %7, %8, %cst_9 {dimension_numbers = #tpu.dot_dimension_numbers<[1], [0], [0], [1], [0, 0, 1, 1], [], []>} : vector<16x256xf32>, vector<256x1024xf32>, vector<16x1024xf32> -> vector<16x1024xf32>
    %c0_10 = arith.constant 0 : index
    %c0_11 = arith.constant 0 : index
    %10 = vector.load %arg6[%c0_10, %c0_11] : memref<1x1024xf32, #tpu.memory_space<vmem>>, vector<1x1024xf32>
    %11 = vector.broadcast %10 : vector<1x1024xf32> to vector<16x1024xf32>
    %12 = arith.addf %9, %11 : vector<16x1024xf32>
    %c0_12 = arith.constant 0 : index
    %c0_13 = arith.constant 0 : index
    %13 = vector.load %arg7[%c0_12, %c0_13] : memref<16x1024xf32, #tpu.memory_space<vmem>>, vector<16x1024xf32>
    tpu.vector_store %arg7[%c0_12, %c0_13], %12 {strides = array<i32>} : memref<16x1024xf32, #tpu.memory_space<vmem>>, vector<16x1024xf32>,
    return
  }
  func.func @transform_0(%arg0: i32) -> (i32, i32) {
    %c0_i32 = arith.constant 0 : i32
    %c0_i32_0 = arith.constant 0 : i32
    return %arg0, %c0_i32 : i32, i32
  }
  func.func @transform_1(%arg0: i32) -> (i32, i32) {
    %c0_i32 = arith.constant 0 : i32
    %c0_i32_0 = arith.constant 0 : i32
    return %arg0, %c0_i32 : i32, i32
  }
  func.func @transform_2(%arg0: i32) -> (i32, i32) {
    %c0_i32 = arith.constant 0 : i32
    %c0_i32_0 = arith.constant 0 : i32
    %c0_i32_1 = arith.constant 0 : i32
    return %c0_i32, %c0_i32_0 : i32, i32
  }
  func.func @transform_3(%arg0: i32) -> (i32, i32) {
    %c0_i32 = arith.constant 0 : i32
    %c0_i32_0 = arith.constant 0 : i32
    %c0_i32_1 = arith.constant 0 : i32
    return %c0_i32, %c0_i32_0 : i32, i32
  }
  func.func @transform_4(%arg0: i32) -> (i32, i32) {
    %c0_i32 = arith.constant 0 : i32
    %c0_i32_0 = arith.constant 0 : i32
    %c0_i32_1 = arith.constant 0 : i32
    return %c0_i32, %c0_i32_0 : i32, i32
  }
  func.func @transform_5(%arg0: i32) -> (i32, i32) {
    %c0_i32 = arith.constant 0 : i32
    %c0_i32_0 = arith.constant 0 : i32
    %c0_i32_1 = arith.constant 0 : i32
    return %c0_i32, %c0_i32_0 : i32, i32
  }
  func.func @transform_6(%arg0: i32) -> (i32, i32) {
    %c0_i32 = arith.constant 0 : i32
    %c0_i32_0 = arith.constant 0 : i32
    return %arg0, %c0_i32 : i32, i32
  }
}

module attributes {stable_mosaic.version = 11 : i64} {
  func.func @_recurrent_kernel(%arg0: i32, %arg1: memref<8x2x1024xf32, #tpu.memory_space<vmem>>, %arg2: memref<8x2x2xf32, #tpu.memory_space<vmem>>, %arg3: memref<256x1024xf32, #tpu.memory_space<vmem>>, %arg4: memref<256x2xf32, #tpu.memory_space<vmem>>, %arg5: memref<1x2xf32, #tpu.memory_space<vmem>>, %arg6: memref<256x3xf32, #tpu.memory_space<vmem>>, %arg7: memref<1x3xf32, #tpu.memory_space<vmem>>, %arg8: memref<256x2xf32, #tpu.memory_space<vmem>>, %arg9: memref<1x2xf32, #tpu.memory_space<vmem>>, %arg10: memref<8x2x3xf32, #tpu.memory_space<vmem>>, %arg11: memref<8x2x2xf32, #tpu.memory_space<vmem>>, %arg12: memref<8x2x2xf32, #tpu.memory_space<vmem>>, %arg13: memref<2x256xf32, #tpu.memory_space<vmem>>, %arg14: memref<2x256xf32, #tpu.memory_space<vmem>>) attributes {dimension_semantics = [#tpu.dimension_semantics<arbitrary>], iteration_bounds = array<i64: 1>, scalar_prefetch = 0 : i64, scratch_operands = 2 : i64, tpu.core_type = #tpu.core_type<tc>, window_params = [{pipeline_mode = #tpu.pipeline_mode<synchronous>, transform_indices = @transform_0, window_bounds = array<i64: 8, 2, 1024>}, {pipeline_mode = #tpu.pipeline_mode<synchronous>, transform_indices = @transform_1, window_bounds = array<i64: 8, 2, 2>}, {pipeline_mode = #tpu.pipeline_mode<synchronous>, transform_indices = @transform_2, window_bounds = array<i64: 256, 1024>}, {pipeline_mode = #tpu.pipeline_mode<synchronous>, transform_indices = @transform_3, window_bounds = array<i64: 256, 2>}, {pipeline_mode = #tpu.pipeline_mode<synchronous>, transform_indices = @transform_4, window_bounds = array<i64: 1, 2>}, {pipeline_mode = #tpu.pipeline_mode<synchronous>, transform_indices = @transform_5, window_bounds = array<i64: 256, 3>}, {pipeline_mode = #tpu.pipeline_mode<synchronous>, transform_indices = @transform_6, window_bounds = array<i64: 1, 3>}, {pipeline_mode = #tpu.pipeline_mode<synchronous>, transform_indices = @transform_7, window_bounds = array<i64: 256, 2>}, {pipeline_mode = #tpu.pipeline_mode<synchronous>, transform_indices = @transform_8, window_bounds = array<i64: 1, 2>}, {pipeline_mode = #tpu.pipeline_mode<synchronous>, transform_indices = @transform_9, window_bounds = array<i64: 8, 2, 3>}, {pipeline_mode = #tpu.pipeline_mode<synchronous>, transform_indices = @transform_10, window_bounds = array<i64: 8, 2, 2>}, {pipeline_mode = #tpu.pipeline_mode<synchronous>, transform_indices = @transform_11, window_bounds = array<i64: 8, 2, 2>}]} {
    %c0 = arith.constant 0 : index
    %c0_0 = arith.constant 0 : index
    %c0_1 = arith.constant 0 : index
    %0 = vector.load %arg1[%c0, %c0_0, %c0_1] : memref<8x2x1024xf32, #tpu.memory_space<vmem>>, vector<1x2x1024xf32>
    %1 = vector.shape_cast %0 : vector<1x2x1024xf32> to vector<2x1024xf32>
    %cst = arith.constant 0.000000e+00 : f32
    %2 = vector.broadcast %cst : f32 to vector<2x256xf32>
    %3 = vector.extract_strided_slice %1 {offsets = [0, 0], sizes = [2, 256], strides = [1, 1]} : vector<2x1024xf32> to vector<2x256xf32>
    %4 = arith.negf %3 : vector<2x256xf32>
    %5 = math.exp %4 : vector<2x256xf32>
    %cst_2 = arith.constant 1.000000e+00 : f32
    %6 = vector.broadcast %cst_2 : f32 to vector<2x256xf32>
    %7 = arith.addf %6, %5 : vector<2x256xf32>
    %8 = arith.divf %6, %7 : vector<2x256xf32>
    %9 = vector.extract_strided_slice %1 {offsets = [0, 256], sizes = [2, 256], strides = [1, 1]} : vector<2x1024xf32> to vector<2x256xf32>
    %10 = arith.negf %9 : vector<2x256xf32>
    %11 = math.exp %10 : vector<2x256xf32>
    %cst_3 = arith.constant 1.000000e+00 : f32
    %12 = vector.broadcast %cst_3 : f32 to vector<2x256xf32>
    %13 = arith.addf %12, %11 : vector<2x256xf32>
    %14 = arith.divf %12, %13 : vector<2x256xf32>
    %15 = vector.extract_strided_slice %1 {offsets = [0, 512], sizes = [2, 256], strides = [1, 1]} : vector<2x1024xf32> to vector<2x256xf32>
    %16 = math.tanh %15 : vector<2x256xf32>
    %17 = vector.extract_strided_slice %1 {offsets = [0, 768], sizes = [2, 256], strides = [1, 1]} : vector<2x1024xf32> to vector<2x256xf32>
    %18 = arith.negf %17 : vector<2x256xf32>
    %19 = math.exp %18 : vector<2x256xf32>
    %cst_4 = arith.constant 1.000000e+00 : f32
    %20 = vector.broadcast %cst_4 : f32 to vector<2x256xf32>
    %21 = arith.addf %20, %19 : vector<2x256xf32>
    %22 = arith.divf %20, %21 : vector<2x256xf32>
    %23 = arith.mulf %14, %2 : vector<2x256xf32>
    %24 = arith.mulf %8, %16 : vector<2x256xf32>
    %25 = arith.addf %23, %24 : vector<2x256xf32>
    %26 = math.tanh %25 : vector<2x256xf32>
    %27 = arith.mulf %22, %26 : vector<2x256xf32>
    %c0_5 = arith.constant 0 : index
    %c0_6 = arith.constant 0 : index
    %28 = vector.load %arg6[%c0_5, %c0_6] : memref<256x3xf32, #tpu.memory_space<vmem>>, vector<256x3xf32>
    %cst_7 = arith.constant dense<0.000000e+00> : vector<2x3xf32>
    %29 = tpu.matmul %27, %28, %cst_7 {dimension_numbers = #tpu.dot_dimension_numbers<[1], [0], [0], [1], [0, 0, 1, 1], [], []>} : vector<2x256xf32>, vector<256x3xf32>, vector<2x3xf32> -> vector<2x3xf32>
    %c0_8 = arith.constant 0 : index
    %c0_9 = arith.constant 0 : index
    %30 = vector.load %arg7[%c0_8, %c0_9] : memref<1x3xf32, #tpu.memory_space<vmem>>, vector<1x3xf32>
    %31 = vector.broadcast %30 : vector<1x3xf32> to vector<2x3xf32>
    %32 = arith.addf %29, %31 : vector<2x3xf32>
    %c0_10 = arith.constant 0 : index
    %c0_11 = arith.constant 0 : index
    %c0_12 = arith.constant 0 : index
    %33 = vector.load %arg10[%c0_10, %c0_11, %c0_12] : memref<8x2x3xf32, #tpu.memory_space<vmem>>, vector<1x2x3xf32>
    %34 = vector.shape_cast %33 : vector<1x2x3xf32> to vector<2x3xf32>
    %35 = vector.shape_cast %32 : vector<2x3xf32> to vector<1x2x3xf32>
    tpu.vector_store %arg10[%c0_10, %c0_11, %c0_12], %35 {strides = array<i32>} : memref<8x2x3xf32, #tpu.memory_space<vmem>>, vector<1x2x3xf32>,
    %c0_13 = arith.constant 0 : index
    %c0_14 = arith.constant 0 : index
    %36 = vector.load %arg8[%c0_13, %c0_14] : memref<256x2xf32, #tpu.memory_space<vmem>>, vector<256x2xf32>
    %cst_15 = arith.constant dense<0.000000e+00> : vector<2x2xf32>
    %37 = tpu.matmul %25, %36, %cst_15 {dimension_numbers = #tpu.dot_dimension_numbers<[1], [0], [0], [1], [0, 0, 1, 1], [], []>} : vector<2x256xf32>, vector<256x2xf32>, vector<2x2xf32> -> vector<2x2xf32>
    %c0_16 = arith.constant 0 : index
    %c0_17 = arith.constant 0 : index
    %38 = vector.load %arg9[%c0_16, %c0_17] : memref<1x2xf32, #tpu.memory_space<vmem>>, vector<1x2xf32>
    %39 = vector.broadcast %38 : vector<1x2xf32> to vector<2x2xf32>
    %40 = arith.addf %37, %39 : vector<2x2xf32>
    %c0_18 = arith.constant 0 : index
    %c0_19 = arith.constant 0 : index
    %c0_20 = arith.constant 0 : index
    %41 = vector.load %arg11[%c0_18, %c0_19, %c0_20] : memref<8x2x2xf32, #tpu.memory_space<vmem>>, vector<1x2x2xf32>
    %42 = vector.shape_cast %41 : vector<1x2x2xf32> to vector<2x2xf32>
    %43 = vector.shape_cast %40 : vector<2x2xf32> to vector<1x2x2xf32>
    tpu.vector_store %arg11[%c0_18, %c0_19, %c0_20], %43 {strides = array<i32>} : memref<8x2x2xf32, #tpu.memory_space<vmem>>, vector<1x2x2xf32>,
    %cst_21 = arith.constant 0.000000e+00 : f32
    %44 = vector.broadcast %cst_21 : f32 to vector<2x2xf32>
    %c0_22 = arith.constant 0 : index
    %c0_23 = arith.constant 0 : index
    %c0_24 = arith.constant 0 : index
    %45 = vector.load %arg12[%c0_22, %c0_23, %c0_24] : memref<8x2x2xf32, #tpu.memory_space<vmem>>, vector<1x2x2xf32>
    %46 = vector.shape_cast %45 : vector<1x2x2xf32> to vector<2x2xf32>
    %47 = vector.shape_cast %44 : vector<2x2xf32> to vector<1x2x2xf32>
    tpu.vector_store %arg12[%c0_22, %c0_23, %c0_24], %47 {strides = array<i32>} : memref<8x2x2xf32, #tpu.memory_space<vmem>>, vector<1x2x2xf32>,
    %c0_25 = arith.constant 0 : index
    %c0_26 = arith.constant 0 : index
    %48 = vector.load %arg13[%c0_25, %c0_26] : memref<2x256xf32, #tpu.memory_space<vmem>>, vector<2x256xf32>
    tpu.vector_store %arg13[%c0_25, %c0_26], %27 {strides = array<i32>} : memref<2x256xf32, #tpu.memory_space<vmem>>, vector<2x256xf32>,
    %c0_27 = arith.constant 0 : index
    %c0_28 = arith.constant 0 : index
    %49 = vector.load %arg14[%c0_27, %c0_28] : memref<2x256xf32, #tpu.memory_space<vmem>>, vector<2x256xf32>
    tpu.vector_store %arg14[%c0_27, %c0_28], %25 {strides = array<i32>} : memref<2x256xf32, #tpu.memory_space<vmem>>, vector<2x256xf32>,
    %c1_i32 = arith.constant 1 : i32
    %c7_i32 = arith.constant 7 : i32
    %50 = arith.addi %c1_i32, %c7_i32 : i32
    %c1_i32_29 = arith.constant 1 : i32
    scf.for %arg15 = %c1_i32 to %50 step %c1_i32_29  : i32 {
      %c0_31 = arith.constant 0 : index
      %c0_32 = arith.constant 0 : index
      %51 = vector.load %arg13[%c0_31, %c0_32] : memref<2x256xf32, #tpu.memory_space<vmem>>, vector<2x256xf32>
      %c0_33 = arith.constant 0 : index
      %c0_34 = arith.constant 0 : index
      %52 = vector.load %arg14[%c0_33, %c0_34] : memref<2x256xf32, #tpu.memory_space<vmem>>, vector<2x256xf32>
      %53 = arith.index_cast %arg15 : i32 to index
      %c0_35 = arith.constant 0 : index
      %c0_36 = arith.constant 0 : index
      %54 = vector.load %arg1[%53, %c0_35, %c0_36] : memref<8x2x1024xf32, #tpu.memory_space<vmem>>, vector<1x2x1024xf32>
      %55 = vector.shape_cast %54 : vector<1x2x1024xf32> to vector<2x1024xf32>
      %c0_37 = arith.constant 0 : index
      %c0_38 = arith.constant 0 : index
      %56 = vector.load %arg3[%c0_37, %c0_38] : memref<256x1024xf32, #tpu.memory_space<vmem>>, vector<256x1024xf32>
      %cst_39 = arith.constant dense<0.000000e+00> : vector<2x1024xf32>
      %57 = tpu.matmul %51, %56, %cst_39 {dimension_numbers = #tpu.dot_dimension_numbers<[1], [0], [0], [1], [0, 0, 1, 1], [], []>} : vector<2x256xf32>, vector<256x1024xf32>, vector<2x1024xf32> -> vector<2x1024xf32>
      %58 = arith.addf %55, %57 : vector<2x1024xf32>
      %59 = vector.extract_strided_slice %58 {offsets = [0, 0], sizes = [2, 256], strides = [1, 1]} : vector<2x1024xf32> to vector<2x256xf32>
      %60 = arith.negf %59 : vector<2x256xf32>
      %61 = math.exp %60 : vector<2x256xf32>
      %cst_40 = arith.constant 1.000000e+00 : f32
      %62 = vector.broadcast %cst_40 : f32 to vector<2x256xf32>
      %63 = arith.addf %62, %61 : vector<2x256xf32>
      %64 = arith.divf %62, %63 : vector<2x256xf32>
      %65 = vector.extract_strided_slice %58 {offsets = [0, 256], sizes = [2, 256], strides = [1, 1]} : vector<2x1024xf32> to vector<2x256xf32>
      %66 = arith.negf %65 : vector<2x256xf32>
      %67 = math.exp %66 : vector<2x256xf32>
      %cst_41 = arith.constant 1.000000e+00 : f32
      %68 = vector.broadcast %cst_41 : f32 to vector<2x256xf32>
      %69 = arith.addf %68, %67 : vector<2x256xf32>
      %70 = arith.divf %68, %69 : vector<2x256xf32>
      %71 = vector.extract_strided_slice %58 {offsets = [0, 512], sizes = [2, 256], strides = [1, 1]} : vector<2x1024xf32> to vector<2x256xf32>
      %72 = math.tanh %71 : vector<2x256xf32>
      %73 = vector.extract_strided_slice %58 {offsets = [0, 768], sizes = [2, 256], strides = [1, 1]} : vector<2x1024xf32> to vector<2x256xf32>
      %74 = arith.negf %73 : vector<2x256xf32>
      %75 = math.exp %74 : vector<2x256xf32>
      %cst_42 = arith.constant 1.000000e+00 : f32
      %76 = vector.broadcast %cst_42 : f32 to vector<2x256xf32>
      %77 = arith.addf %76, %75 : vector<2x256xf32>
      %78 = arith.divf %76, %77 : vector<2x256xf32>
      %79 = arith.mulf %70, %52 : vector<2x256xf32>
      %80 = arith.mulf %64, %72 : vector<2x256xf32>
      %81 = arith.addf %79, %80 : vector<2x256xf32>
      %82 = math.tanh %81 : vector<2x256xf32>
      %83 = arith.mulf %78, %82 : vector<2x256xf32>
      %c0_43 = arith.constant 0 : index
      %c0_44 = arith.constant 0 : index
      %84 = vector.load %arg4[%c0_43, %c0_44] : memref<256x2xf32, #tpu.memory_space<vmem>>, vector<256x2xf32>
      %cst_45 = arith.constant dense<0.000000e+00> : vector<2x2xf32>
      %85 = tpu.matmul %83, %84, %cst_45 {dimension_numbers = #tpu.dot_dimension_numbers<[1], [0], [0], [1], [0, 0, 1, 1], [], []>} : vector<2x256xf32>, vector<256x2xf32>, vector<2x2xf32> -> vector<2x2xf32>
      %c0_46 = arith.constant 0 : index
      %c0_47 = arith.constant 0 : index
      %86 = vector.load %arg5[%c0_46, %c0_47] : memref<1x2xf32, #tpu.memory_space<vmem>>, vector<1x2xf32>
      %87 = vector.broadcast %86 : vector<1x2xf32> to vector<2x2xf32>
      %88 = arith.addf %85, %87 : vector<2x2xf32>
      %89 = arith.index_cast %arg15 : i32 to index
      %c0_48 = arith.constant 0 : index
      %c0_49 = arith.constant 0 : index
      %90 = vector.load %arg2[%89, %c0_48, %c0_49] : memref<8x2x2xf32, #tpu.memory_space<vmem>>, vector<1x2x2xf32>
      %91 = vector.shape_cast %90 : vector<1x2x2xf32> to vector<2x2xf32>
      %92 = arith.addf %88, %91 : vector<2x2xf32>
      %cst_50 = arith.constant dense<0xFF800000> : vector<2xf32>
      %93 = vector.multi_reduction <maximumf>, %92, %cst_50 [1] : vector<2x2xf32> to vector<2xf32>
      %94 = vector.shape_cast %93 : vector<2xf32> to vector<2x1xf32>
      %95 = vector.broadcast %94 : vector<2x1xf32> to vector<2x2xf32>
      %96 = arith.subf %92, %95 : vector<2x2xf32>
      %97 = math.exp %96 : vector<2x2xf32>
      %cst_51 = arith.constant dense<0.000000e+00> : vector<2xf32>
      %98 = vector.multi_reduction <add>, %97, %cst_51 [1] : vector<2x2xf32> to vector<2xf32>
      %99 = vector.shape_cast %98 : vector<2xf32> to vector<2x1xf32>
      %100 = tpu.reciprocal %99 {approx = true} : vector<2x1xf32> -> vector<2x1xf32>
      %101 = vector.broadcast %100 : vector<2x1xf32> to vector<2x2xf32>
      %102 = arith.mulf %97, %101 : vector<2x2xf32>
      %103 = vector.extract_strided_slice %102 {offsets = [0, 0], sizes = [2, 1], strides = [1, 1]} : vector<2x2xf32> to vector<2x1xf32>
      %104 = vector.broadcast %103 : vector<2x1xf32> to vector<2x256xf32>
      %105 = arith.mulf %51, %104 : vector<2x256xf32>
      %106 = vector.extract_strided_slice %102 {offsets = [0, 1], sizes = [2, 1], strides = [1, 1]} : vector<2x2xf32> to vector<2x1xf32>
      %107 = vector.broadcast %106 : vector<2x1xf32> to vector<2x256xf32>
      %108 = arith.mulf %83, %107 : vector<2x256xf32>
      %109 = arith.addf %105, %108 : vector<2x256xf32>
      %110 = arith.index_cast %arg15 : i32 to index
      %c0_52 = arith.constant 0 : index
      %c0_53 = arith.constant 0 : index
      %111 = vector.load %arg12[%110, %c0_52, %c0_53] : memref<8x2x2xf32, #tpu.memory_space<vmem>>, vector<1x2x2xf32>
      %112 = vector.shape_cast %111 : vector<1x2x2xf32> to vector<2x2xf32>
      %113 = vector.shape_cast %102 : vector<2x2xf32> to vector<1x2x2xf32>
      tpu.vector_store %arg12[%110, %c0_52, %c0_53], %113 {strides = array<i32>} : memref<8x2x2xf32, #tpu.memory_space<vmem>>, vector<1x2x2xf32>,
      %c0_54 = arith.constant 0 : index
      %c0_55 = arith.constant 0 : index
      %114 = vector.load %arg6[%c0_54, %c0_55] : memref<256x3xf32, #tpu.memory_space<vmem>>, vector<256x3xf32>
      %cst_56 = arith.constant dense<0.000000e+00> : vector<2x3xf32>
      %115 = tpu.matmul %109, %114, %cst_56 {dimension_numbers = #tpu.dot_dimension_numbers<[1], [0], [0], [1], [0, 0, 1, 1], [], []>} : vector<2x256xf32>, vector<256x3xf32>, vector<2x3xf32> -> vector<2x3xf32>
      %c0_57 = arith.constant 0 : index
      %c0_58 = arith.constant 0 : index
      %116 = vector.load %arg7[%c0_57, %c0_58] : memref<1x3xf32, #tpu.memory_space<vmem>>, vector<1x3xf32>
      %117 = vector.broadcast %116 : vector<1x3xf32> to vector<2x3xf32>
      %118 = arith.addf %115, %117 : vector<2x3xf32>
      %119 = arith.index_cast %arg15 : i32 to index
      %c0_59 = arith.constant 0 : index
      %c0_60 = arith.constant 0 : index
      %120 = vector.load %arg10[%119, %c0_59, %c0_60] : memref<8x2x3xf32, #tpu.memory_space<vmem>>, vector<1x2x3xf32>
      %121 = vector.shape_cast %120 : vector<1x2x3xf32> to vector<2x3xf32>
      %122 = vector.shape_cast %118 : vector<2x3xf32> to vector<1x2x3xf32>
      tpu.vector_store %arg10[%119, %c0_59, %c0_60], %122 {strides = array<i32>} : memref<8x2x3xf32, #tpu.memory_space<vmem>>, vector<1x2x3xf32>,
      %c0_61 = arith.constant 0 : index
      %c0_62 = arith.constant 0 : index
      %123 = vector.load %arg8[%c0_61, %c0_62] : memref<256x2xf32, #tpu.memory_space<vmem>>, vector<256x2xf32>
      %cst_63 = arith.constant dense<0.000000e+00> : vector<2x2xf32>
      %124 = tpu.matmul %81, %123, %cst_63 {dimension_numbers = #tpu.dot_dimension_numbers<[1], [0], [0], [1], [0, 0, 1, 1], [], []>} : vector<2x256xf32>, vector<256x2xf32>, vector<2x2xf32> -> vector<2x2xf32>
      %c0_64 = arith.constant 0 : index
      %c0_65 = arith.constant 0 : index
      %125 = vector.load %arg9[%c0_64, %c0_65] : memref<1x2xf32, #tpu.memory_space<vmem>>, vector<1x2xf32>
      %126 = vector.broadcast %125 : vector<1x2xf32> to vector<2x2xf32>
      %127 = arith.addf %124, %126 : vector<2x2xf32>
      %128 = arith.index_cast %arg15 : i32 to index
      %c0_66 = arith.constant 0 : index
      %c0_67 = arith.constant 0 : index
      %129 = vector.load %arg11[%128, %c0_66, %c0_67] : memref<8x2x2xf32, #tpu.memory_space<vmem>>, vector<1x2x2xf32>
      %130 = vector.shape_cast %129 : vector<1x2x2xf32> to vector<2x2xf32>
      %131 = vector.shape_cast %127 : vector<2x2xf32> to vector<1x2x2xf32>
      tpu.vector_store %arg11[%128, %c0_66, %c0_67], %131 {strides = array<i32>} : memref<8x2x2xf32, #tpu.memory_space<vmem>>, vector<1x2x2xf32>,
      %c0_68 = arith.constant 0 : index
      %c0_69 = arith.constant 0 : index
      %132 = vector.load %arg13[%c0_68, %c0_69] : memref<2x256xf32, #tpu.memory_space<vmem>>, vector<2x256xf32>
      tpu.vector_store %arg13[%c0_68, %c0_69], %109 {strides = array<i32>} : memref<2x256xf32, #tpu.memory_space<vmem>>, vector<2x256xf32>,
      %c0_70 = arith.constant 0 : index
      %c0_71 = arith.constant 0 : index
      %133 = vector.load %arg14[%c0_70, %c0_71] : memref<2x256xf32, #tpu.memory_space<vmem>>, vector<2x256xf32>
      tpu.vector_store %arg14[%c0_70, %c0_71], %81 {strides = array<i32>} : memref<2x256xf32, #tpu.memory_space<vmem>>, vector<2x256xf32>,
    }
    %c7_i32_30 = arith.constant 7 : i32
    return
  }
  func.func @transform_0(%arg0: i32) -> (i32, i32, i32) {
    %c0_i32 = arith.constant 0 : i32
    %c0_i32_0 = arith.constant 0 : i32
    %c0_i32_1 = arith.constant 0 : i32
    %c0_i32_2 = arith.constant 0 : i32
    return %c0_i32, %c0_i32_0, %c0_i32_1 : i32, i32, i32
  }
  func.func @transform_1(%arg0: i32) -> (i32, i32, i32) {
    %c0_i32 = arith.constant 0 : i32
    %c0_i32_0 = arith.constant 0 : i32
    %c0_i32_1 = arith.constant 0 : i32
    %c0_i32_2 = arith.constant 0 : i32
    return %c0_i32, %c0_i32_0, %c0_i32_1 : i32, i32, i32
  }
  func.func @transform_2(%arg0: i32) -> (i32, i32) {
    %c0_i32 = arith.constant 0 : i32
    %c0_i32_0 = arith.constant 0 : i32
    %c0_i32_1 = arith.constant 0 : i32
    return %c0_i32, %c0_i32_0 : i32, i32
  }
  func.func @transform_3(%arg0: i32) -> (i32, i32) {
    %c0_i32 = arith.constant 0 : i32
    %c0_i32_0 = arith.constant 0 : i32
    %c0_i32_1 = arith.constant 0 : i32
    return %c0_i32, %c0_i32_0 : i32, i32
  }
  func.func @transform_4(%arg0: i32) -> (i32, i32) {
    %c0_i32 = arith.constant 0 : i32
    %c0_i32_0 = arith.constant 0 : i32
    %c0_i32_1 = arith.constant 0 : i32
    return %c0_i32, %c0_i32_0 : i32, i32
  }
  func.func @transform_5(%arg0: i32) -> (i32, i32) {
    %c0_i32 = arith.constant 0 : i32
    %c0_i32_0 = arith.constant 0 : i32
    %c0_i32_1 = arith.constant 0 : i32
    return %c0_i32, %c0_i32_0 : i32, i32
  }
  func.func @transform_6(%arg0: i32) -> (i32, i32) {
    %c0_i32 = arith.constant 0 : i32
    %c0_i32_0 = arith.constant 0 : i32
    %c0_i32_1 = arith.constant 0 : i32
    return %c0_i32, %c0_i32_0 : i32, i32
  }
  func.func @transform_7(%arg0: i32) -> (i32, i32) {
    %c0_i32 = arith.constant 0 : i32
    %c0_i32_0 = arith.constant 0 : i32
    %c0_i32_1 = arith.constant 0 : i32
    return %c0_i32, %c0_i32_0 : i32, i32
  }
  func.func @transform_8(%arg0: i32) -> (i32, i32) {
    %c0_i32 = arith.constant 0 : i32
    %c0_i32_0 = arith.constant 0 : i32
    %c0_i32_1 = arith.constant 0 : i32
    return %c0_i32, %c0_i32_0 : i32, i32
  }
  func.func @transform_9(%arg0: i32) -> (i32, i32, i32) {
    %c0_i32 = arith.constant 0 : i32
    %c0_i32_0 = arith.constant 0 : i32
    %c0_i32_1 = arith.constant 0 : i32
    %c0_i32_2 = arith.constant 0 : i32
    return %c0_i32, %c0_i32_0, %c0_i32_1 : i32, i32, i32
  }
  func.func @transform_10(%arg0: i32) -> (i32, i32, i32) {
    %c0_i32 = arith.constant 0 : i32
    %c0_i32_0 = arith.constant 0 : i32
    %c0_i32_1 = arith.constant 0 : i32
    %c0_i32_2 = arith.constant 0 : i32
    return %c0_i32, %c0_i32_0, %c0_i32_1 : i32, i32, i32
  }
  func.func @transform_11(%arg0: i32) -> (i32, i32, i32) {
    %c0_i32 = arith.constant 0 : i32
    %c0_i32_0 = arith.constant 0 : i32
    %c0_i32_1 = arith.constant 0 : i32
    %c0_i32_2 = arith.constant 0 : i32
    return %c0_i32, %c0_i32_0, %c0_i32_1 : i32, i32, i32
  }
}

</mosaic_0001>

<llo_original>
// kernel: ada_forward.2
$region0: #{ada_forward.2}
  #allocation0 [shape = 'u32[]', space=smem, size = 0x4, offset = 0x4, fixed_abs, tag = 'smem constant byte address 0x4 - core index']
  #allocation1 [shape = 'u32[144,128]{1,0:T(1,128)}', space=vmem, size = 0x12000, scoped, tag = 'internal scratch']
  %s0 = inlined_call_operand.vmem [shape: f32[16,256], index: 0, kind: input, shape index: {}]
  %s1 = inlined_call_operand.vmem [shape: f32[16,256], index: 1, kind: input, shape index: {}]
  %s2 = inlined_call_operand.hbm [shape: f32[256,256], index: 2, kind: input, shape index: {}]
  %s3 = inlined_call_operand.hbm [shape: f32[1,256], index: 3, kind: input, shape index: {}]
  %s4 = inlined_call_operand.hbm [shape: f32[256,1024], index: 4, kind: input, shape index: {}]
  %s5 = inlined_call_operand.vmem [shape: f32[1,1024], index: 5, kind: input, shape index: {}]
  %s6 = inlined_call_operand.vmem [shape: f32[16,1024], index: 6, kind: output, shape index: {}]
  %s7 = sld [smem:[#allocation0]]
  $region46: #{ada_forward.2} parent=0
    _
  %s9 = ssub.s32 1, %s7
  %s10 = scalar_select 0, %s9, %s7
  $region1: #{ada_forward.2} parent=0
    #allocation2 [shape = 'u8[262144]{0}', space=vmem, size = 0x40000, scoped, tag = 'input window, operand 2, single buffered']
    #allocation3 [shape = 's32[1]{0}', space=sflag, size = 0x4, scoped, tag = 'scoped memory for ada_forward.2']
    #allocation4 [shape = 'u8[1024]{0}', space=vmem, size = 0x400, scoped, tag = 'input window, operand 3, single buffered']
    #allocation5 [shape = 's32[1]{0}', space=sflag, size = 0x4, scoped, tag = 'scoped memory for ada_forward.2']
    #allocation6 [shape = 'u8[1048576]{0}', space=vmem, size = 0x100000, scoped, tag = 'input window, operand 4, single buffered']
    %11 = vsyncpa [#allocation3], 0
    %12 = vsyncpa [#allocation5], 0
    // Predicated region
    $region2: #{ada_forward.2} parent=1 // pred_check
      _
    $region3: #{ada_forward.2} parent=1 // pred_check_branch
      %14 = sbr.rel (0) target = $region5
    $region4: #{ada_forward.2} parent=1 // pred_region
      _
    $region5: #{ada_forward.2} parent=1 // pred_fallthru
      _
    // Predicated region
    $region6: #{ada_forward.2} parent=1 // pred_check
      _
    $region7: #{ada_forward.2} parent=1 // pred_check_branch
      %16 = sbr.rel (0) target = $region9
    $region8: #{ada_forward.2} parent=1 // pred_region
      _
    $region9: #{ada_forward.2} parent=1 // pred_fallthru
      _
    // Predicated region
    $region10: #{ada_forward.2} parent=1 // pred_check
      _
    $region11: #{ada_forward.2} parent=1 // pred_check_branch
      %18 = sbr.rel (0) target = $region13
    $region12: #{ada_forward.2} parent=1 // pred_region
      %s20 = ssub.s32 8192, 8192
      %21 = vsyncadd [#allocation3], %s20
      %s22 = sshll.u32 [#allocation2], 4
      %s23 = int_to_ptr.vmem [resolvable:$true] %s22
      %28 = dma.hbm_to_vmem [thread:$0]  %s2, 8192, %s23, [#allocation3], 256, 256, 16
    $region13: #{ada_forward.2} parent=1 // pred_fallthru
      _
    // Predicated region
    $region14: #{ada_forward.2} parent=1 // pred_check
      _
    $region15: #{ada_forward.2} parent=1 // pred_check_branch
      %30 = sbr.rel (0) target = $region17
    $region16: #{ada_forward.2} parent=1 // pred_region
      %s32 = ssub.s32 32, 32
      %33 = vsyncadd [#allocation5], %s32
      %s35 = sshll.u32 [#allocation4], 4
      %s36 = int_to_ptr.vmem [resolvable:$true] %s35
      %38 = dma.hbm_to_vmem [thread:$0]  %s3, 32, %s36, [#allocation5]
    $region17: #{ada_forward.2} parent=1 // pred_fallthru
      _
    // Predicated region
    $region18: #{ada_forward.2} parent=1 // pred_check
      _
    $region19: #{ada_forward.2} parent=1 // pred_check_branch
      %40 = sbr.rel (0) target = $region21
    $region20: #{ada_forward.2} parent=1 // pred_region
      %s42 = ssub.s32 32768, 32768
      %43 = vsyncadd [#allocation5], %s42
      %s44 = sshll.u32 [#allocation6], 4
      %s45 = int_to_ptr.vmem [resolvable:$true] %s44
      %50 = dma.hbm_to_vmem [thread:$0]  %s4, 32768, %s45, [#allocation5], 1024, 1024, 64
    $region21: #{ada_forward.2} parent=1 // pred_fallthru
      _
    // Predicated region
    $region22: #{ada_forward.2} parent=1 // pred_check
      _
    $region23: #{ada_forward.2} parent=1 // pred_check_branch
      %52 = sbr.rel (0) target = $region25
    $region24: #{ada_forward.2} parent=1 // pred_region
      _
    $region25: #{ada_forward.2} parent=1 // pred_fallthru
      _
    // Predicated region
    $region26: #{ada_forward.2} parent=1 // pred_check
      _
    $region27: #{ada_forward.2} parent=1 // pred_check_branch
      %54 = sbr.rel (0) target = $region29
    $region28: #{ada_forward.2} parent=1 // pred_region
      %55 = dma.done [#allocation3], 8192
    $region29: #{ada_forward.2} parent=1 // pred_fallthru
      _
    // Predicated region
    $region30: #{ada_forward.2} parent=1 // pred_check
      _
    $region31: #{ada_forward.2} parent=1 // pred_check_branch
      %57 = sbr.rel (0) target = $region33
    $region32: #{ada_forward.2} parent=1 // pred_region
      %58 = dma.done [#allocation5], 32
    $region33: #{ada_forward.2} parent=1 // pred_fallthru
      _
    // Predicated region
    $region34: #{ada_forward.2} parent=1 // pred_check
      _
    $region35: #{ada_forward.2} parent=1 // pred_check_branch
      %60 = sbr.rel (0) target = $region37
    $region36: #{ada_forward.2} parent=1 // pred_region
      %61 = dma.done [#allocation5], 32768
    $region37: #{ada_forward.2} parent=1 // pred_fallthru
      _
    %v62 = vld [vmem:[%s0] sm:$0xff]
    %v63 = vld [vmem:[%s0 + $0x8] sm:$0xff]
    %v64 = vld [vmem:[%s0 + $0x10] sm:$0xff]
    %v65 = vld [vmem:[%s0 + $0x18] sm:$0xff]
    %v66 = vld [vmem:[#allocation2] sm:$0xff]
    %v67 = vld [vmem:[#allocation2 + $0x8] sm:$0xff]
    %v68 = vld [vmem:[#allocation2 + $0x10] sm:$0xff]
    %v69 = vld [vmem:[#allocation2 + $0x18] sm:$0xff]
    %v70 = vld [vmem:[#allocation2 + $0x20] sm:$0xff]
    %v71 = vld [vmem:[#allocation2 + $0x28] sm:$0xff]
    %v72 = vld [vmem:[#allocation2 + $0x30] sm:$0xff]
    %v73 = vld [vmem:[#allocation2 + $0x38] sm:$0xff]
    %v74 = vld [vmem:[#allocation2 + $0x40] sm:$0xff]
    %v75 = vld [vmem:[#allocation2 + $0x48] sm:$0xff]
    %v76 = vld [vmem:[#allocation2 + $0x50] sm:$0xff]
    %v77 = vld [vmem:[#allocation2 + $0x58] sm:$0xff]
    %v78 = vld [vmem:[#allocation2 + $0x60] sm:$0xff]
    %v79 = vld [vmem:[#allocation2 + $0x68] sm:$0xff]
    %v80 = vld [vmem:[#allocation2 + $0x70] sm:$0xff]
    %v81 = vld [vmem:[#allocation2 + $0x78] sm:$0xff]
    %v82 = vld [vmem:[#allocation2 + $0x80] sm:$0xff]
    %v83 = vld [vmem:[#allocation2 + $0x88] sm:$0xff]
    %v84 = vld [vmem:[#allocation2 + $0x90] sm:$0xff]
    %v85 = vld [vmem:[#allocation2 + $0x98] sm:$0xff]
    %v86 = vld [vmem:[#allocation2 + $0xa0] sm:$0xff]
    %v87 = vld [vmem:[#allocation2 + $0xa8] sm:$0xff]
    %v88 = vld [vmem:[#allocation2 + $0xb0] sm:$0xff]
    %v89 = vld [vmem:[#allocation2 + $0xb8] sm:$0xff]
    %v90 = vld [vmem:[#allocation2 + $0xc0] sm:$0xff]
    %v91 = vld [vmem:[#allocation2 + $0xc8] sm:$0xff]
    %v92 = vld [vmem:[#allocation2 + $0xd0] sm:$0xff]
    %v93 = vld [vmem:[#allocation2 + $0xd8] sm:$0xff]
    %v94 = vld [vmem:[#allocation2 + $0xe0] sm:$0xff]
    %v95 = vld [vmem:[#allocation2 + $0xe8] sm:$0xff]
    %v96 = vld [vmem:[#allocation2 + $0xf0] sm:$0xff]
    %v97 = vld [vmem:[#allocation2 + $0xf8] sm:$0xff]
    %v98 = vld [vmem:[#allocation2 + $0x100] sm:$0xff]
    %v99 = vld [vmem:[#allocation2 + $0x108] sm:$0xff]
    %v100 = vld [vmem:[#allocation2 + $0x110] sm:$0xff]
    %v101 = vld [vmem:[#allocation2 + $0x118] sm:$0xff]
    %v102 = vld [vmem:[#allocation2 + $0x120] sm:$0xff]
    %v103 = vld [vmem:[#allocation2 + $0x128] sm:$0xff]
    %v104 = vld [vmem:[#allocation2 + $0x130] sm:$0xff]
    %v105 = vld [vmem:[#allocation2 + $0x138] sm:$0xff]
    %v106 = vld [vmem:[#allocation2 + $0x140] sm:$0xff]
    %v107 = vld [vmem:[#allocation2 + $0x148] sm:$0xff]
    %v108 = vld [vmem:[#allocation2 + $0x150] sm:$0xff]
    %v109 = vld [vmem:[#allocation2 + $0x158] sm:$0xff]
    %v110 = vld [vmem:[#allocation2 + $0x160] sm:$0xff]
    %v111 = vld [vmem:[#allocation2 + $0x168] sm:$0xff]
    %v112 = vld [vmem:[#allocation2 + $0x170] sm:$0xff]
    %v113 = vld [vmem:[#allocation2 + $0x178] sm:$0xff]
    %v114 = vld [vmem:[#allocation2 + $0x180] sm:$0xff]
    %v115 = vld [vmem:[#allocation2 + $0x188] sm:$0xff]
    %v116 = vld [vmem:[#allocation2 + $0x190] sm:$0xff]
    %v117 = vld [vmem:[#allocation2 + $0x198] sm:$0xff]
    %v118 = vld [vmem:[#allocation2 + $0x1a0] sm:$0xff]
    %v119 = vld [vmem:[#allocation2 + $0x1a8] sm:$0xff]
    %v120 = vld [vmem:[#allocation2 + $0x1b0] sm:$0xff]
    %v121 = vld [vmem:[#allocation2 + $0x1b8] sm:$0xff]
    %v122 = vld [vmem:[#allocation2 + $0x1c0] sm:$0xff]
    %v123 = vld [vmem:[#allocation2 + $0x1c8] sm:$0xff]
    %v124 = vld [vmem:[#allocation2 + $0x1d0] sm:$0xff]
    %v125 = vld [vmem:[#allocation2 + $0x1d8] sm:$0xff]
    %v126 = vld [vmem:[#allocation2 + $0x1e0] sm:$0xff]
    %v127 = vld [vmem:[#allocation2 + $0x1e8] sm:$0xff]
    %v128 = vld [vmem:[#allocation2 + $0x1f0] sm:$0xff]
    %v129 = vld [vmem:[#allocation2 + $0x1f8] sm:$0xff]
    %v130 = vld [vmem:[#allocation4] sm:$0x3]
    %v132 = vlaneseq
    %v133 = vshrl.u32 %v132, 7
    %v134 = vsub.s32 0, %v133
    %v135 = vrot.slane %v130, %v134
    %v136 = vlaneseq
    %v137 = vshrl.u32 %v136, 7
    %v138 = vsub.s32 1, %v137
    %v139 = vrot.slane %v130, %v138
    %142 = vmatprep.subr.mxu0 %v67
    %143 = vmatpush1.msra.mxu0 %v66
    %144 = vmatprep.subr.mxu0 %v69
    %145 = vmatpush1.msra.mxu0 %v68
    %146 = vmatprep.subr.mxu0 %v71
    %147 = vmatpush1.msra.mxu0 %v70
    %148 = vmatprep.subr.mxu0 %v73
    %149 = vmatpush1.msra.mxu0 %v72
    %150 = vmatprep.subr.mxu0 %v75
    %151 = vmatpush1.msra.mxu0 %v74
    %152 = vmatprep.subr.mxu0 %v77
    %153 = vmatpush1.msra.mxu0 %v76
    %154 = vmatprep.subr.mxu0 %v79
    %155 = vmatpush1.msra.mxu0 %v78
    %156 = vmatprep.subr.mxu0 %v81
    %157 = vmatpush1.msra.mxu0 %v80
    %158 = vmatprep.subr.mxu0 %v83
    %159 = vmatpush1.msra.mxu0 %v82
    %160 = vmatprep.subr.mxu0 %v85
    %161 = vmatpush1.msra.mxu0 %v84
    %162 = vmatprep.subr.mxu0 %v87
    %163 = vmatpush1.msra.mxu0 %v86
    %164 = vmatprep.subr.mxu0 %v89
    %165 = vmatpush1.msra.mxu0 %v88
    %166 = vmatprep.subr.mxu0 %v91
    %167 = vmatpush1.msra.mxu0 %v90
    %168 = vmatprep.subr.mxu0 %v93
    %169 = vmatpush1.msra.mxu0 %v92
    %170 = vmatprep.subr.mxu0 %v95
    %171 = vmatpush1.msra.mxu0 %v94
    %172 = vmatprep.subr.mxu0 %v97
    %173 = vmatpush1.msra.mxu0 %v96
    %174 = vmatprep.subr.mxu0 %v99
    %175 = vmatpush1.msra.mxu0 %v98
    %176 = vmatprep.subr.mxu0 %v101
    %177 = vmatpush1.msra.mxu0 %v100
    %178 = vmatprep.subr.mxu0 %v103
    %179 = vmatpush1.msra.mxu0 %v102
    %180 = vmatprep.subr.mxu0 %v105
    %181 = vmatpush1.msra.mxu0 %v104
    %182 = vmatprep.subr.mxu0 %v107
    %183 = vmatpush1.msra.mxu0 %v106
    %184 = vmatprep.subr.mxu0 %v109
    %185 = vmatpush1.msra.mxu0 %v108
    %186 = vmatprep.subr.mxu0 %v111
    %187 = vmatpush1.msra.mxu0 %v110
    %188 = vmatprep.subr.mxu0 %v113
    %189 = vmatpush1.msra.mxu0 %v112
    %190 = vmatprep.subr.mxu0 %v115
    %191 = vmatpush1.msra.mxu0 %v114
    %192 = vmatprep.subr.mxu0 %v117
    %193 = vmatpush1.msra.mxu0 %v116
    %194 = vmatprep.subr.mxu0 %v119
    %195 = vmatpush1.msra.mxu0 %v118
    %196 = vmatprep.subr.mxu0 %v121
    %197 = vmatpush1.msra.mxu0 %v120
    %198 = vmatprep.subr.mxu0 %v123
    %199 = vmatpush1.msra.mxu0 %v122
    %200 = vmatprep.subr.mxu0 %v125
    %201 = vmatpush1.msra.mxu0 %v124
    %202 = vmatprep.subr.mxu0 %v127
    %203 = vmatpush1.msra.mxu0 %v126
    %204 = vmatprep.subr.mxu0 %v129
    %205 = vmatpush1.msra.mxu0 %v128
    %206 = vmatprep.mubr.f32.mxu0 %v63
    %207 = vmatmul.mubr.f32.gmra.mrb[0].mxu0 %v62
    %v208 = vpop.f32.mrb[0].mxu0
    %v209 = vadd.f32 %v135, %v208
    %v210 = vpop.f32.mrb[0].mxu0
    %v211 = vadd.f32 %v139, %v210
    %212 = vmatprep.mubr.f32.mxu0 %v65
    %213 = vmatmul.mubr.f32.gmra.mrb[0].mxu0 %v64
    %v214 = vpop.f32.mrb[0].mxu0
    %v215 = vadd.f32 %v135, %v214
    %v216 = vpop.f32.mrb[0].mxu0
    %v217 = vadd.f32 %v139, %v216
    %218 = vdwg.mxu0
    %v219 = vld [vmem:[%s1] sm:$0xff]
    %v220 = vld [vmem:[%s1 + $0x8] sm:$0xff]
    %v221 = vld [vmem:[%s1 + $0x10] sm:$0xff]
    %v222 = vld [vmem:[%s1 + $0x18] sm:$0xff]
    %v223 = vadd.f32 %v209, %v219
    %v224 = vadd.f32 %v211, %v220
    %v225 = vadd.f32 %v215, %v221
    %v226 = vadd.f32 %v217, %v222
    %v227 = vld [vmem:[#allocation6] sm:$0xff]
    %v228 = vld [vmem:[#allocation6 + $0x8] sm:$0xff]
    %v229 = vld [vmem:[#allocation6 + $0x10] sm:$0xff]
    %v230 = vld [vmem:[#allocation6 + $0x18] sm:$0xff]
    %v231 = vld [vmem:[#allocation6 + $0x20] sm:$0xff]
    %v232 = vld [vmem:[#allocation6 + $0x28] sm:$0xff]
    %v233 = vld [vmem:[#allocation6 + $0x30] sm:$0xff]
    %v234 = vld [vmem:[#allocation6 + $0x38] sm:$0xff]
    %v235 = vld [vmem:[#allocation6 + $0x40] sm:$0xff]
    %v236 = vld [vmem:[#allocation6 + $0x48] sm:$0xff]
    %v237 = vld [vmem:[#allocation6 + $0x50] sm:$0xff]
    %v238 = vld [vmem:[#allocation6 + $0x58] sm:$0xff]
    %v239 = vld [vmem:[#allocation6 + $0x60] sm:$0xff]
    %v240 = vld [vmem:[#allocation6 + $0x68] sm:$0xff]
    %v241 = vld [vmem:[#allocation6 + $0x70] sm:$0xff]
    %v242 = vld [vmem:[#allocation6 + $0x78] sm:$0xff]
    %v243 = vld [vmem:[#allocation6 + $0x80] sm:$0xff]
    %v244 = vld [vmem:[#allocation6 + $0x88] sm:$0xff]
    %v245 = vld [vmem:[#allocation6 + $0x90] sm:$0xff]
    %v246 = vld [vmem:[#allocation6 + $0x98] sm:$0xff]
    %v247 = vld [vmem:[#allocation6 + $0xa0] sm:$0xff]
    %v248 = vld [vmem:[#allocation6 + $0xa8] sm:$0xff]
    %v249 = vld [vmem:[#allocation6 + $0xb0] sm:$0xff]
    %v250 = vld [vmem:[#allocation6 + $0xb8] sm:$0xff]
    %v251 = vld [vmem:[#allocation6 + $0xc0] sm:$0xff]
    %v252 = vld [vmem:[#allocation6 + $0xc8] sm:$0xff]
    %v253 = vld [vmem:[#allocation6 + $0xd0] sm:$0xff]
    %v254 = vld [vmem:[#allocation6 + $0xd8] sm:$0xff]
    %v255 = vld [vmem:[#allocation6 + $0xe0] sm:$0xff]
    %v256 = vld [vmem:[#allocation6 + $0xe8] sm:$0xff]
    %v257 = vld [vmem:[#allocation6 + $0xf0] sm:$0xff]
    %v258 = vld [vmem:[#allocation6 + $0xf8] sm:$0xff]
    %v259 = vld [vmem:[#allocation6 + $0x100] sm:$0xff]
    %v260 = vld [vmem:[#allocation6 + $0x108] sm:$0xff]
    %v261 = vld [vmem:[#allocation6 + $0x110] sm:$0xff]
    %v262 = vld [vmem:[#allocation6 + $0x118] sm:$0xff]
    %v263 = vld [vmem:[#allocation6 + $0x120] sm:$0xff]
    %v264 = vld [vmem:[#allocation6 + $0x128] sm:$0xff]
    %v265 = vld [vmem:[#allocation6 + $0x130] sm:$0xff]
    %v266 = vld [vmem:[#allocation6 + $0x138] sm:$0xff]
    %v267 = vld [vmem:[#allocation6 + $0x140] sm:$0xff]
    %v268 = vld [vmem:[#allocation6 + $0x148] sm:$0xff]
    %v269 = vld [vmem:[#allocation6 + $0x150] sm:$0xff]
    %v270 = vld [vmem:[#allocation6 + $0x158] sm:$0xff]
    %v271 = vld [vmem:[#allocation6 + $0x160] sm:$0xff]
    %v272 = vld [vmem:[#allocation6 + $0x168] sm:$0xff]
    %v273 = vld [vmem:[#allocation6 + $0x170] sm:$0xff]
    %v274 = vld [vmem:[#allocation6 + $0x178] sm:$0xff]
    %v275 = vld [vmem:[#allocation6 + $0x180] sm:$0xff]
    %v276 = vld [vmem:[#allocation6 + $0x188] sm:$0xff]
    %v277 = vld [vmem:[#allocation6 + $0x190] sm:$0xff]
    %v278 = vld [vmem:[#allocation6 + $0x198] sm:$0xff]
    %v279 = vld [vmem:[#allocation6 + $0x1a0] sm:$0xff]
    %v280 = vld [vmem:[#allocation6 + $0x1a8] sm:$0xff]
    %v281 = vld [vmem:[#allocation6 + $0x1b0] sm:$0xff]
    %v282 = vld [vmem:[#allocation6 + $0x1b8] sm:$0xff]
    %v283 = vld [vmem:[#allocation6 + $0x1c0] sm:$0xff]
    %v284 = vld [vmem:[#allocation6 + $0x1c8] sm:$0xff]
    %v285 = vld [vmem:[#allocation6 + $0x1d0] sm:$0xff]
    %v286 = vld [vmem:[#allocation6 + $0x1d8] sm:$0xff]
    %v287 = vld [vmem:[#allocation6 + $0x1e0] sm:$0xff]
    %v288 = vld [vmem:[#allocation6 + $0x1e8] sm:$0xff]
    %v289 = vld [vmem:[#allocation6 + $0x1f0] sm:$0xff]
    %v290 = vld [vmem:[#allocation6 + $0x1f8] sm:$0xff]
    %v291 = vld [vmem:[#allocation6 + $0x200] sm:$0xff]
    %v292 = vld [vmem:[#allocation6 + $0x208] sm:$0xff]
    %v293 = vld [vmem:[#allocation6 + $0x210] sm:$0xff]
    %v294 = vld [vmem:[#allocation6 + $0x218] sm:$0xff]
    %v295 = vld [vmem:[#allocation6 + $0x220] sm:$0xff]
    %v296 = vld [vmem:[#allocation6 + $0x228] sm:$0xff]
    %v297 = vld [vmem:[#allocation6 + $0x230] sm:$0xff]
    %v298 = vld [vmem:[#allocation6 + $0x238] sm:$0xff]
    %v299 = vld [vmem:[#allocation6 + $0x240] sm:$0xff]
    %v300 = vld [vmem:[#allocation6 + $0x248] sm:$0xff]
    %v301 = vld [vmem:[#allocation6 + $0x250] sm:$0xff]
    %v302 = vld [vmem:[#allocation6 + $0x258] sm:$0xff]
    %v303 = vld [vmem:[#allocation6 + $0x260] sm:$0xff]
    %v304 = vld [vmem:[#allocation6 + $0x268] sm:$0xff]
    %v305 = vld [vmem:[#allocation6 + $0x270] sm:$0xff]
    %v306 = vld [vmem:[#allocation6 + $0x278] sm:$0xff]
    %v307 = vld [vmem:[#allocation6 + $0x280] sm:$0xff]
    %v308 = vld [vmem:[#allocation6 + $0x288] sm:$0xff]
    %v309 = vld [vmem:[#allocation6 + $0x290] sm:$0xff]
    %v310 = vld [vmem:[#allocation6 + $0x298] sm:$0xff]
    %v311 = vld [vmem:[#allocation6 + $0x2a0] sm:$0xff]
    %v312 = vld [vmem:[#allocation6 + $0x2a8] sm:$0xff]
    %v313 = vld [vmem:[#allocation6 + $0x2b0] sm:$0xff]
    %v314 = vld [vmem:[#allocation6 + $0x2b8] sm:$0xff]
    %v315 = vld [vmem:[#allocation6 + $0x2c0] sm:$0xff]
    %v316 = vld [vmem:[#allocation6 + $0x2c8] sm:$0xff]
    %v317 = vld [vmem:[#allocation6 + $0x2d0] sm:$0xff]
    %v318 = vld [vmem:[#allocation6 + $0x2d8] sm:$0xff]
    %v319 = vld [vmem:[#allocation6 + $0x2e0] sm:$0xff]
    %v320 = vld [vmem:[#allocation6 + $0x2e8] sm:$0xff]
    %v321 = vld [vmem:[#allocation6 + $0x2f0] sm:$0xff]
    %v322 = vld [vmem:[#allocation6 + $0x2f8] sm:$0xff]
    %v323 = vld [vmem:[#allocation6 + $0x300] sm:$0xff]
    %v324 = vld [vmem:[#allocation6 + $0x308] sm:$0xff]
    %v325 = vld [vmem:[#allocation6 + $0x310] sm:$0xff]
    %v326 = vld [vmem:[#allocation6 + $0x318] sm:$0xff]
    %v327 = vld [vmem:[#allocation6 + $0x320] sm:$0xff]
    %v328 = vld [vmem:[#allocation6 + $0x328] sm:$0xff]
    %v329 = vld [vmem:[#allocation6 + $0x330] sm:$0xff]
    %v330 = vld [vmem:[#allocation6 + $0x338] sm:$0xff]
    %v331 = vld [vmem:[#allocation6 + $0x340] sm:$0xff]
    %v332 = vld [vmem:[#allocation6 + $0x348] sm:$0xff]
    %v333 = vld [vmem:[#allocation6 + $0x350] sm:$0xff]
    %v334 = vld [vmem:[#allocation6 + $0x358] sm:$0xff]
    %v335 = vld [vmem:[#allocation6 + $0x360] sm:$0xff]
    %v336 = vld [vmem:[#allocation6 + $0x368] sm:$0xff]
    %v337 = vld [vmem:[#allocation6 + $0x370] sm:$0xff]
    %v338 = vld [vmem:[#allocation6 + $0x378] sm:$0xff]
    %v339 = vld [vmem:[#allocation6 + $0x380] sm:$0xff]
    %v340 = vld [vmem:[#allocation6 + $0x388] sm:$0xff]
    %v341 = vld [vmem:[#allocation6 + $0x390] sm:$0xff]
    %v342 = vld [vmem:[#allocation6 + $0x398] sm:$0xff]
    %v343 = vld [vmem:[#allocation6 + $0x3a0] sm:$0xff]
    %v344 = vld [vmem:[#allocation6 + $0x3a8] sm:$0xff]
    %v345 = vld [vmem:[#allocation6 + $0x3b0] sm:$0xff]
    %v346 = vld [vmem:[#allocation6 + $0x3b8] sm:$0xff]
    %v347 = vld [vmem:[#allocation6 + $0x3c0] sm:$0xff]
    %v348 = vld [vmem:[#allocation6 + $0x3c8] sm:$0xff]
    %v349 = vld [vmem:[#allocation6 + $0x3d0] sm:$0xff]
    %v350 = vld [vmem:[#allocation6 + $0x3d8] sm:$0xff]
    %v351 = vld [vmem:[#allocation6 + $0x3e0] sm:$0xff]
    %v352 = vld [vmem:[#allocation6 + $0x3e8] sm:$0xff]
    %v353 = vld [vmem:[#allocation6 + $0x3f0] sm:$0xff]
    %v354 = vld [vmem:[#allocation6 + $0x3f8] sm:$0xff]
    %v355 = vld [vmem:[#allocation6 + $0x400] sm:$0xff]
    %v356 = vld [vmem:[#allocation6 + $0x408] sm:$0xff]
    %v357 = vld [vmem:[#allocation6 + $0x410] sm:$0xff]
    %v358 = vld [vmem:[#allocation6 + $0x418] sm:$0xff]
    %v359 = vld [vmem:[#allocation6 + $0x420] sm:$0xff]
    %v360 = vld [vmem:[#allocation6 + $0x428] sm:$0xff]
    %v361 = vld [vmem:[#allocation6 + $0x430] sm:$0xff]
    %v362 = vld [vmem:[#allocation6 + $0x438] sm:$0xff]
    %v363 = vld [vmem:[#allocation6 + $0x440] sm:$0xff]
    %v364 = vld [vmem:[#allocation6 + $0x448] sm:$0xff]
    %v365 = vld [vmem:[#allocation6 + $0x450] sm:$0xff]
    %v366 = vld [vmem:[#allocation6 + $0x458] sm:$0xff]
    %v367 = vld [vmem:[#allocation6 + $0x460] sm:$0xff]
    %v368 = vld [vmem:[#allocation6 + $0x468] sm:$0xff]
    %v369 = vld [vmem:[#allocation6 + $0x470] sm:$0xff]
    %v370 = vld [vmem:[#allocation6 + $0x478] sm:$0xff]
    %v371 = vld [vmem:[#allocation6 + $0x480] sm:$0xff]
    %v372 = vld [vmem:[#allocation6 + $0x488] sm:$0xff]
    %v373 = vld [vmem:[#allocation6 + $0x490] sm:$0xff]
    %v374 = vld [vmem:[#allocation6 + $0x498] sm:$0xff]
    %v375 = vld [vmem:[#allocation6 + $0x4a0] sm:$0xff]
    %v376 = vld [vmem:[#allocation6 + $0x4a8] sm:$0xff]
    %v377 = vld [vmem:[#allocation6 + $0x4b0] sm:$0xff]
    %v378 = vld [vmem:[#allocation6 + $0x4b8] sm:$0xff]
    %v379 = vld [vmem:[#allocation6 + $0x4c0] sm:$0xff]
    %v380 = vld [vmem:[#allocation6 + $0x4c8] sm:$0xff]
    %v381 = vld [vmem:[#allocation6 + $0x4d0] sm:$0xff]
    %v382 = vld [vmem:[#allocation6 + $0x4d8] sm:$0xff]
    %v383 = vld [vmem:[#allocation6 + $0x4e0] sm:$0xff]
    %v384 = vld [vmem:[#allocation6 + $0x4e8] sm:$0xff]
    %v385 = vld [vmem:[#allocation6 + $0x4f0] sm:$0xff]
    %v386 = vld [vmem:[#allocation6 + $0x4f8] sm:$0xff]
    %v387 = vld [vmem:[#allocation6 + $0x500] sm:$0xff]
    %v388 = vld [vmem:[#allocation6 + $0x508] sm:$0xff]
    %v389 = vld [vmem:[#allocation6 + $0x510] sm:$0xff]
    %v390 = vld [vmem:[#allocation6 + $0x518] sm:$0xff]
    %v391 = vld [vmem:[#allocation6 + $0x520] sm:$0xff]
    %v392 = vld [vmem:[#allocation6 + $0x528] sm:$0xff]
    %v393 = vld [vmem:[#allocation6 + $0x530] sm:$0xff]
    %v394 = vld [vmem:[#allocation6 + $0x538] sm:$0xff]
    %v395 = vld [vmem:[#allocation6 + $0x540] sm:$0xff]
    %v396 = vld [vmem:[#allocation6 + $0x548] sm:$0xff]
    %v397 = vld [vmem:[#allocation6 + $0x550] sm:$0xff]
    %v398 = vld [vmem:[#allocation6 + $0x558] sm:$0xff]
    %v399 = vld [vmem:[#allocation6 + $0x560] sm:$0xff]
    %v400 = vld [vmem:[#allocation6 + $0x568] sm:$0xff]
    %v401 = vld [vmem:[#allocation6 + $0x570] sm:$0xff]
    %v402 = vld [vmem:[#allocation6 + $0x578] sm:$0xff]
    %v403 = vld [vmem:[#allocation6 + $0x580] sm:$0xff]
    %v404 = vld [vmem:[#allocation6 + $0x588] sm:$0xff]
    %v405 = vld [vmem:[#allocation6 + $0x590] sm:$0xff]
    %v406 = vld [vmem:[#allocation6 + $0x598] sm:$0xff]
    %v407 = vld [vmem:[#allocation6 + $0x5a0] sm:$0xff]
    %v408 = vld [vmem:[#allocation6 + $0x5a8] sm:$0xff]
    %v409 = vld [vmem:[#allocation6 + $0x5b0] sm:$0xff]
    %v410 = vld [vmem:[#allocation6 + $0x5b8] sm:$0xff]
    %v411 = vld [vmem:[#allocation6 + $0x5c0] sm:$0xff]
    %v412 = vld [vmem:[#allocation6 + $0x5c8] sm:$0xff]
    %v413 = vld [vmem:[#allocation6 + $0x5d0] sm:$0xff]
    %v414 = vld [vmem:[#allocation6 + $0x5d8] sm:$0xff]
    %v415 = vld [vmem:[#allocation6 + $0x5e0] sm:$0xff]
    %v416 = vld [vmem:[#allocation6 + $0x5e8] sm:$0xff]
    %v417 = vld [vmem:[#allocation6 + $0x5f0] sm:$0xff]
    %v418 = vld [vmem:[#allocation6 + $0x5f8] sm:$0xff]
    %v419 = vld [vmem:[#allocation6 + $0x600] sm:$0xff]
    %v420 = vld [vmem:[#allocation6 + $0x608] sm:$0xff]
    %v421 = vld [vmem:[#allocation6 + $0x610] sm:$0xff]
    %v422 = vld [vmem:[#allocation6 + $0x618] sm:$0xff]
    %v423 = vld [vmem:[#allocation6 + $0x620] sm:$0xff]
    %v424 = vld [vmem:[#allocation6 + $0x628] sm:$0xff]
    %v425 = vld [vmem:[#allocation6 + $0x630] sm:$0xff]
    %v426 = vld [vmem:[#allocation6 + $0x638] sm:$0xff]
    %v427 = vld [vmem:[#allocation6 + $0x640] sm:$0xff]
    %v428 = vld [vmem:[#allocation6 + $0x648] sm:$0xff]
    %v429 = vld [vmem:[#allocation6 + $0x650] sm:$0xff]
    %v430 = vld [vmem:[#allocation6 + $0x658] sm:$0xff]
    %v431 = vld [vmem:[#allocation6 + $0x660] sm:$0xff]
    %v432 = vld [vmem:[#allocation6 + $0x668] sm:$0xff]
    %v433 = vld [vmem:[#allocation6 + $0x670] sm:$0xff]
    %v434 = vld [vmem:[#allocation6 + $0x678] sm:$0xff]
    %v435 = vld [vmem:[#allocation6 + $0x680] sm:$0xff]
    %v436 = vld [vmem:[#allocation6 + $0x688] sm:$0xff]
    %v437 = vld [vmem:[#allocation6 + $0x690] sm:$0xff]
    %v438 = vld [vmem:[#allocation6 + $0x698] sm:$0xff]
    %v439 = vld [vmem:[#allocation6 + $0x6a0] sm:$0xff]
    %v440 = vld [vmem:[#allocation6 + $0x6a8] sm:$0xff]
    %v441 = vld [vmem:[#allocation6 + $0x6b0] sm:$0xff]
    %v442 = vld [vmem:[#allocation6 + $0x6b8] sm:$0xff]
    %v443 = vld [vmem:[#allocation6 + $0x6c0] sm:$0xff]
    %v444 = vld [vmem:[#allocation6 + $0x6c8] sm:$0xff]
    %v445 = vld [vmem:[#allocation6 + $0x6d0] sm:$0xff]
    %v446 = vld [vmem:[#allocation6 + $0x6d8] sm:$0xff]
    %v447 = vld [vmem:[#allocation6 + $0x6e0] sm:$0xff]
    %v448 = vld [vmem:[#allocation6 + $0x6e8] sm:$0xff]
    %v449 = vld [vmem:[#allocation6 + $0x6f0] sm:$0xff]
    %v450 = vld [vmem:[#allocation6 + $0x6f8] sm:$0xff]
    %v451 = vld [vmem:[#allocation6 + $0x700] sm:$0xff]
    %v452 = vld [vmem:[#allocation6 + $0x708] sm:$0xff]
    %v453 = vld [vmem:[#allocation6 + $0x710] sm:$0xff]
    %v454 = vld [vmem:[#allocation6 + $0x718] sm:$0xff]
    %v455 = vld [vmem:[#allocation6 + $0x720] sm:$0xff]
    %v456 = vld [vmem:[#allocation6 + $0x728] sm:$0xff]
    %v457 = vld [vmem:[#allocation6 + $0x730] sm:$0xff]
    %v458 = vld [vmem:[#allocation6 + $0x738] sm:$0xff]
    %v459 = vld [vmem:[#allocation6 + $0x740] sm:$0xff]
    %v460 = vld [vmem:[#allocation6 + $0x748] sm:$0xff]
    %v461 = vld [vmem:[#allocation6 + $0x750] sm:$0xff]
    %v462 = vld [vmem:[#allocation6 + $0x758] sm:$0xff]
    %v463 = vld [vmem:[#allocation6 + $0x760] sm:$0xff]
    %v464 = vld [vmem:[#allocation6 + $0x768] sm:$0xff]
    %v465 = vld [vmem:[#allocation6 + $0x770] sm:$0xff]
    %v466 = vld [vmem:[#allocation6 + $0x778] sm:$0xff]
    %v467 = vld [vmem:[#allocation6 + $0x780] sm:$0xff]
    %v468 = vld [vmem:[#allocation6 + $0x788] sm:$0xff]
    %v469 = vld [vmem:[#allocation6 + $0x790] sm:$0xff]
    %v470 = vld [vmem:[#allocation6 + $0x798] sm:$0xff]
    %v471 = vld [vmem:[#allocation6 + $0x7a0] sm:$0xff]
    %v472 = vld [vmem:[#allocation6 + $0x7a8] sm:$0xff]
    %v473 = vld [vmem:[#allocation6 + $0x7b0] sm:$0xff]
    %v474 = vld [vmem:[#allocation6 + $0x7b8] sm:$0xff]
    %v475 = vld [vmem:[#allocation6 + $0x7c0] sm:$0xff]
    %v476 = vld [vmem:[#allocation6 + $0x7c8] sm:$0xff]
    %v477 = vld [vmem:[#allocation6 + $0x7d0] sm:$0xff]
    %v478 = vld [vmem:[#allocation6 + $0x7d8] sm:$0xff]
    %v479 = vld [vmem:[#allocation6 + $0x7e0] sm:$0xff]
    %v480 = vld [vmem:[#allocation6 + $0x7e8] sm:$0xff]
    %v481 = vld [vmem:[#allocation6 + $0x7f0] sm:$0xff]
    %v482 = vld [vmem:[#allocation6 + $0x7f8] sm:$0xff]
    %v483 = vld [vmem:[%s5] sm:$0xff]
    %v485 = vlaneseq
    %v486 = vshrl.u32 %v485, 7
    %v487 = vsub.s32 0, %v486
    %v488 = vrot.slane %v483, %v487
    %v489 = vlaneseq
    %v490 = vshrl.u32 %v489, 7
    %v491 = vsub.s32 1, %v490
    %v492 = vrot.slane %v483, %v491
    %v493 = vlaneseq
    %v494 = vshrl.u32 %v493, 7
    %v495 = vsub.s32 2, %v494
    %v496 = vrot.slane %v483, %v495
    %v497 = vlaneseq
    %v498 = vshrl.u32 %v497, 7
    %v499 = vsub.s32 3, %v498
    %v500 = vrot.slane %v483, %v499
    %v501 = vlaneseq
    %v502 = vshrl.u32 %v501, 7
    %v503 = vsub.s32 4, %v502
    %v504 = vrot.slane %v483, %v503
    %v505 = vlaneseq
    %v506 = vshrl.u32 %v505, 7
    %v507 = vsub.s32 5, %v506
    %v508 = vrot.slane %v483, %v507
    %v509 = vlaneseq
    %v510 = vshrl.u32 %v509, 7
    %v511 = vsub.s32 6, %v510
    %v512 = vrot.slane %v483, %v511
    %v513 = vlaneseq
    %v514 = vshrl.u32 %v513, 7
    %v515 = vsub.s32 7, %v514
    %v516 = vrot.slane %v483, %v515
    %525 = vmatprep.subr.mxu0 %v228
    %526 = vmatpush1.msra.mxu0 %v227
    %527 = vmatprep.subr.mxu0 %v236
    %528 = vmatpush1.msra.mxu0 %v235
    %529 = vmatprep.subr.mxu0 %v244
    %530 = vmatpush1.msra.mxu0 %v243
    %531 = vmatprep.subr.mxu0 %v252
    %532 = vmatpush1.msra.mxu0 %v251
    %533 = vmatprep.subr.mxu0 %v260
    %534 = vmatpush1.msra.mxu0 %v259
    %535 = vmatprep.subr.mxu0 %v268
    %536 = vmatpush1.msra.mxu0 %v267
    %537 = vmatprep.subr.mxu0 %v276
    %538 = vmatpush1.msra.mxu0 %v275
    %539 = vmatprep.subr.mxu0 %v284
    %540 = vmatpush1.msra.mxu0 %v283
    %541 = vmatprep.subr.mxu0 %v292
    %542 = vmatpush1.msra.mxu0 %v291
    %543 = vmatprep.subr.mxu0 %v300
    %544 = vmatpush1.msra.mxu0 %v299
    %545 = vmatprep.subr.mxu0 %v308
    %546 = vmatpush1.msra.mxu0 %v307
    %547 = vmatprep.subr.mxu0 %v316
    %548 = vmatpush1.msra.mxu0 %v315
    %549 = vmatprep.subr.mxu0 %v324
    %550 = vmatpush1.msra.mxu0 %v323
    %551 = vmatprep.subr.mxu0 %v332
    %552 = vmatpush1.msra.mxu0 %v331
    %553 = vmatprep.subr.mxu0 %v340
    %554 = vmatpush1.msra.mxu0 %v339
    %555 = vmatprep.subr.mxu0 %v348
    %556 = vmatpush1.msra.mxu0 %v347
    %557 = vmatprep.subr.mxu0 %v356
    %558 = vmatpush1.msra.mxu0 %v355
    %559 = vmatprep.subr.mxu0 %v364
    %560 = vmatpush1.msra.mxu0 %v363
    %561 = vmatprep.subr.mxu0 %v372
    %562 = vmatpush1.msra.mxu0 %v371
    %563 = vmatprep.subr.mxu0 %v380
    %564 = vmatpush1.msra.mxu0 %v379
    %565 = vmatprep.subr.mxu0 %v388
    %566 = vmatpush1.msra.mxu0 %v387
    %567 = vmatprep.subr.mxu0 %v396
    %568 = vmatpush1.msra.mxu0 %v395
    %569 = vmatprep.subr.mxu0 %v404
    %570 = vmatpush1.msra.mxu0 %v403
    %571 = vmatprep.subr.mxu0 %v412
    %572 = vmatpush1.msra.mxu0 %v411
    %573 = vmatprep.subr.mxu0 %v420
    %574 = vmatpush1.msra.mxu0 %v419
    %575 = vmatprep.subr.mxu0 %v428
    %576 = vmatpush1.msra.mxu0 %v427
    %577 = vmatprep.subr.mxu0 %v436
    %578 = vmatpush1.msra.mxu0 %v435
    %579 = vmatprep.subr.mxu0 %v444
    %580 = vmatpush1.msra.mxu0 %v443
    %581 = vmatprep.subr.mxu0 %v452
    %582 = vmatpush1.msra.mxu0 %v451
    %583 = vmatprep.subr.mxu0 %v460
    %584 = vmatpush1.msra.mxu0 %v459
    %585 = vmatprep.subr.mxu0 %v468
    %586 = vmatpush1.msra.mxu0 %v467
    %587 = vmatprep.subr.mxu0 %v476
    %588 = vmatpush1.msra.mxu0 %v475
    %589 = vmatprep.mubr.f32.mxu0 %v224
    %590 = vmatmul.mubr.f32.gmra.mrb[0].mxu0 %v223
    %v591 = vpop.f32.mrb[0].mxu0
    %v592 = vadd.f32 %v488, %v591
    %v593 = vpop.f32.mrb[0].mxu0
    %v594 = vadd.f32 %v492, %v593
    %595 = vmatprep.mubr.f32.mxu0 %v226
    %596 = vmatmul.mubr.f32.gmra.mrb[0].mxu0 %v225
    %v597 = vpop.f32.mrb[0].mxu0
    %v598 = vadd.f32 %v488, %v597
    %v599 = vpop.f32.mrb[0].mxu0
    %v600 = vadd.f32 %v492, %v599
    %601 = vdwg.mxu0
    %602 = vmatprep.subr.mxu0 %v230
    %603 = vmatpush1.msra.mxu0 %v229
    %604 = vmatprep.subr.mxu0 %v238
    %605 = vmatpush1.msra.mxu0 %v237
    %606 = vmatprep.subr.mxu0 %v246
    %607 = vmatpush1.msra.mxu0 %v245
    %608 = vmatprep.subr.mxu0 %v254
    %609 = vmatpush1.msra.mxu0 %v253
    %610 = vmatprep.subr.mxu0 %v262
    %611 = vmatpush1.msra.mxu0 %v261
    %612 = vmatprep.subr.mxu0 %v270
    %613 = vmatpush1.msra.mxu0 %v269
    %614 = vmatprep.subr.mxu0 %v278
    %615 = vmatpush1.msra.mxu0 %v277
    %616 = vmatprep.subr.mxu0 %v286
    %617 = vmatpush1.msra.mxu0 %v285
    %618 = vmatprep.subr.mxu0 %v294
    %619 = vmatpush1.msra.mxu0 %v293
    %620 = vmatprep.subr.mxu0 %v302
    %621 = vmatpush1.msra.mxu0 %v301
    %622 = vmatprep.subr.mxu0 %v310
    %623 = vmatpush1.msra.mxu0 %v309
    %624 = vmatprep.subr.mxu0 %v318
    %625 = vmatpush1.msra.mxu0 %v317
    %626 = vmatprep.subr.mxu0 %v326
    %627 = vmatpush1.msra.mxu0 %v325
    %628 = vmatprep.subr.mxu0 %v334
    %629 = vmatpush1.msra.mxu0 %v333
    %630 = vmatprep.subr.mxu0 %v342
    %631 = vmatpush1.msra.mxu0 %v341
    %632 = vmatprep.subr.mxu0 %v350
    %633 = vmatpush1.msra.mxu0 %v349
    %634 = vmatprep.subr.mxu0 %v358
    %635 = vmatpush1.msra.mxu0 %v357
    %636 = vmatprep.subr.mxu0 %v366
    %637 = vmatpush1.msra.mxu0 %v365
    %638 = vmatprep.subr.mxu0 %v374
    %639 = vmatpush1.msra.mxu0 %v373
    %640 = vmatprep.subr.mxu0 %v382
    %641 = vmatpush1.msra.mxu0 %v381
    %642 = vmatprep.subr.mxu0 %v390
    %643 = vmatpush1.msra.mxu0 %v389
    %644 = vmatprep.subr.mxu0 %v398
    %645 = vmatpush1.msra.mxu0 %v397
    %646 = vmatprep.subr.mxu0 %v406
    %647 = vmatpush1.msra.mxu0 %v405
    %648 = vmatprep.subr.mxu0 %v414
    %649 = vmatpush1.msra.mxu0 %v413
    %650 = vmatprep.subr.mxu0 %v422
    %651 = vmatpush1.msra.mxu0 %v421
    %652 = vmatprep.subr.mxu0 %v430
    %653 = vmatpush1.msra.mxu0 %v429
    %654 = vmatprep.subr.mxu0 %v438
    %655 = vmatpush1.msra.mxu0 %v437
    %656 = vmatprep.subr.mxu0 %v446
    %657 = vmatpush1.msra.mxu0 %v445
    %658 = vmatprep.subr.mxu0 %v454
    %659 = vmatpush1.msra.mxu0 %v453
    %660 = vmatprep.subr.mxu0 %v462
    %661 = vmatpush1.msra.mxu0 %v461
    %662 = vmatprep.subr.mxu0 %v470
    %663 = vmatpush1.msra.mxu0 %v469
    %664 = vmatprep.subr.mxu0 %v478
    %665 = vmatpush1.msra.mxu0 %v477
    %666 = vmatprep.mubr.f32.mxu0 %v224
    %667 = vmatmul.mubr.f32.gmra.mrb[0].mxu0 %v223
    %v668 = vpop.f32.mrb[0].mxu0
    %v669 = vadd.f32 %v496, %v668
    %v670 = vpop.f32.mrb[0].mxu0
    %v671 = vadd.f32 %v500, %v670
    %672 = vmatprep.mubr.f32.mxu0 %v226
    %673 = vmatmul.mubr.f32.gmra.mrb[0].mxu0 %v225
    %v674 = vpop.f32.mrb[0].mxu0
    %v675 = vadd.f32 %v496, %v674
    %v676 = vpop.f32.mrb[0].mxu0
    %v677 = vadd.f32 %v500, %v676
    %678 = vdwg.mxu0
    %679 = vmatprep.subr.mxu0 %v232
    %680 = vmatpush1.msra.mxu0 %v231
    %681 = vmatprep.subr.mxu0 %v240
    %682 = vmatpush1.msra.mxu0 %v239
    %683 = vmatprep.subr.mxu0 %v248
    %684 = vmatpush1.msra.mxu0 %v247
    %685 = vmatprep.subr.mxu0 %v256
    %686 = vmatpush1.msra.mxu0 %v255
    %687 = vmatprep.subr.mxu0 %v264
    %688 = vmatpush1.msra.mxu0 %v263
    %689 = vmatprep.subr.mxu0 %v272
    %690 = vmatpush1.msra.mxu0 %v271
    %691 = vmatprep.subr.mxu0 %v280
    %692 = vmatpush1.msra.mxu0 %v279
    %693 = vmatprep.subr.mxu0 %v288
    %694 = vmatpush1.msra.mxu0 %v287
    %695 = vmatprep.subr.mxu0 %v296
    %696 = vmatpush1.msra.mxu0 %v295
    %697 = vmatprep.subr.mxu0 %v304
    %698 = vmatpush1.msra.mxu0 %v303
    %699 = vmatprep.subr.mxu0 %v312
    %700 = vmatpush1.msra.mxu0 %v311
    %701 = vmatprep.subr.mxu0 %v320
    %702 = vmatpush1.msra.mxu0 %v319
    %703 = vmatprep.subr.mxu0 %v328
    %704 = vmatpush1.msra.mxu0 %v327
    %705 = vmatprep.subr.mxu0 %v336
    %706 = vmatpush1.msra.mxu0 %v335
    %707 = vmatprep.subr.mxu0 %v344
    %708 = vmatpush1.msra.mxu0 %v343
    %709 = vmatprep.subr.mxu0 %v352
    %710 = vmatpush1.msra.mxu0 %v351
    %711 = vmatprep.subr.mxu0 %v360
    %712 = vmatpush1.msra.mxu0 %v359
    %713 = vmatprep.subr.mxu0 %v368
    %714 = vmatpush1.msra.mxu0 %v367
    %715 = vmatprep.subr.mxu0 %v376
    %716 = vmatpush1.msra.mxu0 %v375
    %717 = vmatprep.subr.mxu0 %v384
    %718 = vmatpush1.msra.mxu0 %v383
    %719 = vmatprep.subr.mxu0 %v392
    %720 = vmatpush1.msra.mxu0 %v391
    %721 = vmatprep.subr.mxu0 %v400
    %722 = vmatpush1.msra.mxu0 %v399
    %723 = vmatprep.subr.mxu0 %v408
    %724 = vmatpush1.msra.mxu0 %v407
    %725 = vmatprep.subr.mxu0 %v416
    %726 = vmatpush1.msra.mxu0 %v415
    %727 = vmatprep.subr.mxu0 %v424
    %728 = vmatpush1.msra.mxu0 %v423
    %729 = vmatprep.subr.mxu0 %v432
    %730 = vmatpush1.msra.mxu0 %v431
    %731 = vmatprep.subr.mxu0 %v440
    %732 = vmatpush1.msra.mxu0 %v439
    %733 = vmatprep.subr.mxu0 %v448
    %734 = vmatpush1.msra.mxu0 %v447
    %735 = vmatprep.subr.mxu0 %v456
    %736 = vmatpush1.msra.mxu0 %v455
    %737 = vmatprep.subr.mxu0 %v464
    %738 = vmatpush1.msra.mxu0 %v463
    %739 = vmatprep.subr.mxu0 %v472
    %740 = vmatpush1.msra.mxu0 %v471
    %741 = vmatprep.subr.mxu0 %v480
    %742 = vmatpush1.msra.mxu0 %v479
    %743 = vmatprep.mubr.f32.mxu0 %v224
    %744 = vmatmul.mubr.f32.gmra.mrb[0].mxu0 %v223
    %v745 = vpop.f32.mrb[0].mxu0
    %v746 = vadd.f32 %v504, %v745
    %v747 = vpop.f32.mrb[0].mxu0
    %v748 = vadd.f32 %v508, %v747
    %749 = vmatprep.mubr.f32.mxu0 %v226
    %750 = vmatmul.mubr.f32.gmra.mrb[0].mxu0 %v225
    %v751 = vpop.f32.mrb[0].mxu0
    %v752 = vadd.f32 %v504, %v751
    %v753 = vpop.f32.mrb[0].mxu0
    %v754 = vadd.f32 %v508, %v753
    %755 = vdwg.mxu0
    %756 = vmatprep.subr.mxu0 %v234
    %757 = vmatpush1.msra.mxu0 %v233
    %758 = vmatprep.subr.mxu0 %v242
    %759 = vmatpush1.msra.mxu0 %v241
    %760 = vmatprep.subr.mxu0 %v250
    %761 = vmatpush1.msra.mxu0 %v249
    %762 = vmatprep.subr.mxu0 %v258
    %763 = vmatpush1.msra.mxu0 %v257
    %764 = vmatprep.subr.mxu0 %v266
    %765 = vmatpush1.msra.mxu0 %v265
    %766 = vmatprep.subr.mxu0 %v274
    %767 = vmatpush1.msra.mxu0 %v273
    %768 = vmatprep.subr.mxu0 %v282
    %769 = vmatpush1.msra.mxu0 %v281
    %770 = vmatprep.subr.mxu0 %v290
    %771 = vmatpush1.msra.mxu0 %v289
    %772 = vmatprep.subr.mxu0 %v298
    %773 = vmatpush1.msra.mxu0 %v297
    %774 = vmatprep.subr.mxu0 %v306
    %775 = vmatpush1.msra.mxu0 %v305
    %776 = vmatprep.subr.mxu0 %v314
    %777 = vmatpush1.msra.mxu0 %v313
    %778 = vmatprep.subr.mxu0 %v322
    %779 = vmatpush1.msra.mxu0 %v321
    %780 = vmatprep.subr.mxu0 %v330
    %781 = vmatpush1.msra.mxu0 %v329
    %782 = vmatprep.subr.mxu0 %v338
    %783 = vmatpush1.msra.mxu0 %v337
    %784 = vmatprep.subr.mxu0 %v346
    %785 = vmatpush1.msra.mxu0 %v345
    %786 = vmatprep.subr.mxu0 %v354
    %787 = vmatpush1.msra.mxu0 %v353
    %788 = vmatprep.subr.mxu0 %v362
    %789 = vmatpush1.msra.mxu0 %v361
    %790 = vmatprep.subr.mxu0 %v370
    %791 = vmatpush1.msra.mxu0 %v369
    %792 = vmatprep.subr.mxu0 %v378
    %793 = vmatpush1.msra.mxu0 %v377
    %794 = vmatprep.subr.mxu0 %v386
    %795 = vmatpush1.msra.mxu0 %v385
    %796 = vmatprep.subr.mxu0 %v394
    %797 = vmatpush1.msra.mxu0 %v393
    %798 = vmatprep.subr.mxu0 %v402
    %799 = vmatpush1.msra.mxu0 %v401
    %800 = vmatprep.subr.mxu0 %v410
    %801 = vmatpush1.msra.mxu0 %v409
    %802 = vmatprep.subr.mxu0 %v418
    %803 = vmatpush1.msra.mxu0 %v417
    %804 = vmatprep.subr.mxu0 %v426
    %805 = vmatpush1.msra.mxu0 %v425
    %806 = vmatprep.subr.mxu0 %v434
    %807 = vmatpush1.msra.mxu0 %v433
    %808 = vmatprep.subr.mxu0 %v442
    %809 = vmatpush1.msra.mxu0 %v441
    %810 = vmatprep.subr.mxu0 %v450
    %811 = vmatpush1.msra.mxu0 %v449
    %812 = vmatprep.subr.mxu0 %v458
    %813 = vmatpush1.msra.mxu0 %v457
    %814 = vmatprep.subr.mxu0 %v466
    %815 = vmatpush1.msra.mxu0 %v465
    %816 = vmatprep.subr.mxu0 %v474
    %817 = vmatpush1.msra.mxu0 %v473
    %818 = vmatprep.subr.mxu0 %v482
    %819 = vmatpush1.msra.mxu0 %v481
    %820 = vmatprep.mubr.f32.mxu0 %v224
    %821 = vmatmul.mubr.f32.gmra.mrb[0].mxu0 %v223
    %v822 = vpop.f32.mrb[0].mxu0
    %v823 = vadd.f32 %v512, %v822
    %v824 = vpop.f32.mrb[0].mxu0
    %v825 = vadd.f32 %v516, %v824
    %826 = vmatprep.mubr.f32.mxu0 %v226
    %827 = vmatmul.mubr.f32.gmra.mrb[0].mxu0 %v225
    %v828 = vpop.f32.mrb[0].mxu0
    %v829 = vadd.f32 %v512, %v828
    %v830 = vpop.f32.mrb[0].mxu0
    %v831 = vadd.f32 %v516, %v830
    %832 = vdwg.mxu0
    %833 = vst [vmem:[%s6] sm:$0xff] %v592
    %834 = vst [vmem:[%s6 + $0x8] sm:$0xff] %v594
    %835 = vst [vmem:[%s6 + $0x10] sm:$0xff] %v669
    %836 = vst [vmem:[%s6 + $0x18] sm:$0xff] %v671
    %837 = vst [vmem:[%s6 + $0x20] sm:$0xff] %v746
    %838 = vst [vmem:[%s6 + $0x28] sm:$0xff] %v748
    %839 = vst [vmem:[%s6 + $0x30] sm:$0xff] %v823
    %840 = vst [vmem:[%s6 + $0x38] sm:$0xff] %v825
    %841 = vst [vmem:[%s6 + $0x40] sm:$0xff] %v598
    %842 = vst [vmem:[%s6 + $0x48] sm:$0xff] %v600
    %843 = vst [vmem:[%s6 + $0x50] sm:$0xff] %v675
    %844 = vst [vmem:[%s6 + $0x58] sm:$0xff] %v677
    %845 = vst [vmem:[%s6 + $0x60] sm:$0xff] %v752
    %846 = vst [vmem:[%s6 + $0x68] sm:$0xff] %v754
    %847 = vst [vmem:[%s6 + $0x70] sm:$0xff] %v829
    %848 = vst [vmem:[%s6 + $0x78] sm:$0xff] %v831
    // Predicated region
    $region38: #{ada_forward.2} parent=1 // pred_check
      _
    $region39: #{ada_forward.2} parent=1 // pred_check_branch
      %850 = sbr.rel (0) target = $region41
    $region40: #{ada_forward.2} parent=1 // pred_region
      _
    $region41: #{ada_forward.2} parent=1 // pred_fallthru
      _
    // Predicated region
    $region42: #{ada_forward.2} parent=1 // pred_check
      _
    $region43: #{ada_forward.2} parent=1 // pred_check_branch
      %852 = sbr.rel (0) target = $region45
    $region44: #{ada_forward.2} parent=1 // pred_region
      _
    $region45: #{ada_forward.2} parent=1 // pred_fallthru
      _
    %853 = vsyncpa [#allocation3], 1
    %854 = vsyncpa [#allocation5], 1

// kernel: ada_forward.3
$region0: #{ada_forward.3}
  #allocation0 [shape = 'u32[]', space=smem, size = 0x4, offset = 0x4, fixed_abs, tag = 'smem constant byte address 0x4 - core index']
  #allocation1 [shape = 'u32[144,128]{1,0:T(1,128)}', space=vmem, size = 0x12000, scoped, tag = 'internal scratch']
  #allocation2 [shape = 'f32[2,256]{1,0:T(2,128)}', space=vmem, size = 0x800, scoped, tag = 'scratch operand']
  #allocation3 [shape = 'f32[2,256]{1,0:T(2,128)}', space=vmem, size = 0x800, scoped, tag = 'scratch operand']
  %s0 = inlined_call_operand.vmem [shape: f32[8,2,1024], index: 0, kind: input, shape index: {}]
  %s1 = inlined_call_operand.vmem [shape: f32[8,2,2], index: 1, kind: input, shape index: {}]
  %s2 = inlined_call_operand.hbm [shape: f32[256,1024], index: 2, kind: input, shape index: {}]
  %s3 = inlined_call_operand.vmem [shape: f32[256,2], index: 3, kind: input, shape index: {}]
  %s4 = inlined_call_operand.hbm [shape: f32[1,2], index: 4, kind: input, shape index: {}]
  %s5 = inlined_call_operand.vmem [shape: f32[256,3], index: 5, kind: input, shape index: {}]
  %s6 = inlined_call_operand.vmem [shape: f32[1,3], index: 6, kind: input, shape index: {}]
  %s7 = inlined_call_operand.vmem [shape: f32[256,2], index: 7, kind: input, shape index: {}]
  %s8 = inlined_call_operand.hbm [shape: f32[1,2], index: 8, kind: input, shape index: {}]
  %s9 = inlined_call_operand.vmem [shape: f32[8,2,3], index: 9, kind: output, shape index: {0}]
  %s10 = inlined_call_operand.vmem [shape: f32[8,2,2], index: 10, kind: output, shape index: {1}]
  %s11 = inlined_call_operand.vmem [shape: f32[8,2,2], index: 11, kind: output, shape index: {2}]
  %12 = xla_tuple %s9, %s10, %s11
  %s13 = sld [smem:[#allocation0]]
  $region81: #{ada_forward.3} parent=0
    _
  %s15 = ssub.s32 1, %s13
  %s16 = scalar_select 0, %s15, %s13
  $region1: #{ada_forward.3} parent=0
    #allocation4 [shape = 'u8[1048576]{0}', space=vmem, size = 0x100000, scoped, tag = 'input window, operand 2, single buffered']
    #allocation5 [shape = 's32[1]{0}', space=sflag, size = 0x4, scoped, tag = 'scoped memory for ada_forward.3']
    #allocation6 [shape = 'u8[512]{0}', space=vmem, size = 0x400, scoped, tag = 'input window, operand 4, single buffered']
    #allocation7 [shape = 's32[1]{0}', space=sflag, size = 0x4, scoped, tag = 'scoped memory for ada_forward.3']
    #allocation8 [shape = 'u8[512]{0}', space=vmem, size = 0x400, scoped, tag = 'input window, operand 8, single buffered']
    %17 = vsyncpa [#allocation5], 0
    %18 = vsyncpa [#allocation7], 0
    // Predicated region
    $region2: #{ada_forward.3} parent=1 // pred_check
      _
    $region3: #{ada_forward.3} parent=1 // pred_check_branch
      %20 = sbr.rel (0) target = $region5
    $region4: #{ada_forward.3} parent=1 // pred_region
      _
    $region5: #{ada_forward.3} parent=1 // pred_fallthru
      _
    // Predicated region
    $region6: #{ada_forward.3} parent=1 // pred_check
      _
    $region7: #{ada_forward.3} parent=1 // pred_check_branch
      %22 = sbr.rel (0) target = $region9
    $region8: #{ada_forward.3} parent=1 // pred_region
      _
    $region9: #{ada_forward.3} parent=1 // pred_fallthru
      _
    // Predicated region
    $region10: #{ada_forward.3} parent=1 // pred_check
      _
    $region11: #{ada_forward.3} parent=1 // pred_check_branch
      %24 = sbr.rel (0) target = $region13
    $region12: #{ada_forward.3} parent=1 // pred_region
      %s26 = ssub.s32 32768, 32768
      %27 = vsyncadd [#allocation5], %s26
      %s28 = sshll.u32 [#allocation4], 4
      %s29 = int_to_ptr.vmem [resolvable:$true] %s28
      %34 = dma.hbm_to_vmem [thread:$0]  %s2, 32768, %s29, [#allocation5], 1024, 1024, 64
    $region13: #{ada_forward.3} parent=1 // pred_fallthru
      _
    // Predicated region
    $region14: #{ada_forward.3} parent=1 // pred_check
      _
    $region15: #{ada_forward.3} parent=1 // pred_check_branch
      %36 = sbr.rel (0) target = $region17
    $region16: #{ada_forward.3} parent=1 // pred_region
      _
    $region17: #{ada_forward.3} parent=1 // pred_fallthru
      _
    // Predicated region
    $region18: #{ada_forward.3} parent=1 // pred_check
      _
    $region19: #{ada_forward.3} parent=1 // pred_check_branch
      %38 = sbr.rel (0) target = $region21
    $region20: #{ada_forward.3} parent=1 // pred_region
      %s40 = ssub.s32 16, 16
      %41 = vsyncadd [#allocation7], %s40
      %s43 = sshll.u32 [#allocation6], 4
      %s44 = int_to_ptr.vmem [resolvable:$true] %s43
      %46 = dma.hbm_to_vmem [thread:$0]  %s4, 16, %s44, [#allocation7]
    $region21: #{ada_forward.3} parent=1 // pred_fallthru
      _
    // Predicated region
    $region22: #{ada_forward.3} parent=1 // pred_check
      _
    $region23: #{ada_forward.3} parent=1 // pred_check_branch
      %48 = sbr.rel (0) target = $region25
    $region24: #{ada_forward.3} parent=1 // pred_region
      _
    $region25: #{ada_forward.3} parent=1 // pred_fallthru
      _
    // Predicated region
    $region26: #{ada_forward.3} parent=1 // pred_check
      _
    $region27: #{ada_forward.3} parent=1 // pred_check_branch
      %50 = sbr.rel (0) target = $region29
    $region28: #{ada_forward.3} parent=1 // pred_region
      _
    $region29: #{ada_forward.3} parent=1 // pred_fallthru
      _
    // Predicated region
    $region30: #{ada_forward.3} parent=1 // pred_check
      _
    $region31: #{ada_forward.3} parent=1 // pred_check_branch
      %52 = sbr.rel (0) target = $region33
    $region32: #{ada_forward.3} parent=1 // pred_region
      _
    $region33: #{ada_forward.3} parent=1 // pred_fallthru
      _
    // Predicated region
    $region34: #{ada_forward.3} parent=1 // pred_check
      _
    $region35: #{ada_forward.3} parent=1 // pred_check_branch
      %54 = sbr.rel (0) target = $region37
    $region36: #{ada_forward.3} parent=1 // pred_region
      %s56 = ssub.s32 16, 16
      %57 = vsyncadd [#allocation7], %s56
      %s59 = sshll.u32 [#allocation8], 4
      %s60 = int_to_ptr.vmem [resolvable:$true] %s59
      %62 = dma.hbm_to_vmem [thread:$0]  %s8, 16, %s60, [#allocation7]
    $region37: #{ada_forward.3} parent=1 // pred_fallthru
      _
    // Predicated region
    $region38: #{ada_forward.3} parent=1 // pred_check
      _
    $region39: #{ada_forward.3} parent=1 // pred_check_branch
      %64 = sbr.rel (0) target = $region41
    $region40: #{ada_forward.3} parent=1 // pred_region
      %65 = dma.done [#allocation5], 32768
    $region41: #{ada_forward.3} parent=1 // pred_fallthru
      _
    // Predicated region
    $region42: #{ada_forward.3} parent=1 // pred_check
      _
    $region43: #{ada_forward.3} parent=1 // pred_check_branch
      %67 = sbr.rel (0) target = $region45
    $region44: #{ada_forward.3} parent=1 // pred_region
      %68 = dma.done [#allocation7], 16
    $region45: #{ada_forward.3} parent=1 // pred_fallthru
      _
    // Predicated region
    $region46: #{ada_forward.3} parent=1 // pred_check
      _
    $region47: #{ada_forward.3} parent=1 // pred_check_branch
      %70 = sbr.rel (0) target = $region49
    $region48: #{ada_forward.3} parent=1 // pred_region
      %71 = dma.done [#allocation7], 16
    $region49: #{ada_forward.3} parent=1 // pred_fallthru
      _
    %v72 = vld [vmem:[%s0] sm:$0xff]
    %v73 = vld [vmem:[%s0 + $0x8] sm:$0xff]
    %v74 = vxor.u32 %v72, 2147483648
    %v75 = vmul.f32 %v74, 1.442695
    %v76 = vpow.pop %v75
    %v77 = vadd.f32 %v76, 1.0
    %v78 = vrcp.pop %v77
    %v79 = vmul.f32 1.0, %v78
    %v81 = vrot.slane %v72, 4
    %v83 = vxor.u32 %v81, 2147483648
    %v84 = vmul.f32 %v83, 1.442695
    %v85 = vpow.pop %v84
    %v86 = vadd.f32 %v85, 1.0
    %v87 = vrcp.pop %v86
    %v88 = vmul.f32 1.0, %v87
    %v89 = vtanh.pop %v73
    %v91 = vrot.slane %v73, 4
    %v93 = vxor.u32 %v91, 2147483648
    %v94 = vmul.f32 %v93, 1.442695
    %v95 = vpow.pop %v94
    %v96 = vadd.f32 %v95, 1.0
    %v97 = vrcp.pop %v96
    %v98 = vmul.f32 1.0, %v97
    %v99 = vmul.f32 %v88, 0.0
    %v100 = vmul.f32 %v79, %v89
    %v101 = vadd.f32 %v99, %v100
    %v102 = vtanh.pop %v101
    %v103 = vmul.f32 %v98, %v102
    %v104 = vld [vmem:[%s5] sm:$0xff]
    %v105 = vld [vmem:[%s5 + $0x8] sm:$0xff]
    %v106 = vld [vmem:[%s5 + $0x10] sm:$0xff]
    %v107 = vld [vmem:[%s5 + $0x18] sm:$0xff]
    %v108 = vld [vmem:[%s5 + $0x20] sm:$0xff]
    %v109 = vld [vmem:[%s5 + $0x28] sm:$0xff]
    %v110 = vld [vmem:[%s5 + $0x30] sm:$0xff]
    %v111 = vld [vmem:[%s5 + $0x38] sm:$0xff]
    %v112 = vld [vmem:[%s5 + $0x40] sm:$0xff]
    %v113 = vld [vmem:[%s5 + $0x48] sm:$0xff]
    %v114 = vld [vmem:[%s5 + $0x50] sm:$0xff]
    %v115 = vld [vmem:[%s5 + $0x58] sm:$0xff]
    %v116 = vld [vmem:[%s5 + $0x60] sm:$0xff]
    %v117 = vld [vmem:[%s5 + $0x68] sm:$0xff]
    %v118 = vld [vmem:[%s5 + $0x70] sm:$0xff]
    %v119 = vld [vmem:[%s5 + $0x78] sm:$0xff]
    %v120 = vld [vmem:[%s5 + $0x80] sm:$0xff]
    %v121 = vld [vmem:[%s5 + $0x88] sm:$0xff]
    %v122 = vld [vmem:[%s5 + $0x90] sm:$0xff]
    %v123 = vld [vmem:[%s5 + $0x98] sm:$0xff]
    %v124 = vld [vmem:[%s5 + $0xa0] sm:$0xff]
    %v125 = vld [vmem:[%s5 + $0xa8] sm:$0xff]
    %v126 = vld [vmem:[%s5 + $0xb0] sm:$0xff]
    %v127 = vld [vmem:[%s5 + $0xb8] sm:$0xff]
    %v128 = vld [vmem:[%s5 + $0xc0] sm:$0xff]
    %v129 = vld [vmem:[%s5 + $0xc8] sm:$0xff]
    %v130 = vld [vmem:[%s5 + $0xd0] sm:$0xff]
    %v131 = vld [vmem:[%s5 + $0xd8] sm:$0xff]
    %v132 = vld [vmem:[%s5 + $0xe0] sm:$0xff]
    %v133 = vld [vmem:[%s5 + $0xe8] sm:$0xff]
    %v134 = vld [vmem:[%s5 + $0xf0] sm:$0xff]
    %v135 = vld [vmem:[%s5 + $0xf8] sm:$0xff]
    %v136 = vld [vmem:[%s6] sm:$0x1]
    %v138 = vlaneseq
    %v139 = vshrl.u32 %v138, 7
    %v140 = vsub.s32 0, %v139
    %v141 = vrot.slane %v136, %v140
    %v145 = vunpack.c.l.s4 1983009808
    %v146 = vunpack.c.0.s8 %v145
    %v147 = vlaneseq
    %v148 = vshrl.u32 %v147, 7
    %v149 = vsub.s32 %v146, %v148
    %v150 = vrot.slane %v103, %v149
    %v151 = vcombine.high %v150, %v150
    %154 = vmatprep.subr.mxu0 0.0
    %155 = vmatpush1.msra.mxu0 %v104
    %156 = vmatprep.subr.mxu0 0.0
    %157 = vmatpush1.msra.mxu0 %v105
    %158 = vmatprep.subr.mxu0 0.0
    %159 = vmatpush1.msra.mxu0 %v106
    %160 = vmatprep.subr.mxu0 0.0
    %161 = vmatpush1.msra.mxu0 %v107
    %162 = vmatprep.subr.mxu0 0.0
    %163 = vmatpush1.msra.mxu0 %v108
    %164 = vmatprep.subr.mxu0 0.0
    %165 = vmatpush1.msra.mxu0 %v109
    %166 = vmatprep.subr.mxu0 0.0
    %167 = vmatpush1.msra.mxu0 %v110
    %168 = vmatprep.subr.mxu0 0.0
    %169 = vmatpush1.msra.mxu0 %v111
    %170 = vmatprep.subr.mxu0 0.0
    %171 = vmatpush1.msra.mxu0 %v112
    %172 = vmatprep.subr.mxu0 0.0
    %173 = vmatpush1.msra.mxu0 %v113
    %174 = vmatprep.subr.mxu0 0.0
    %175 = vmatpush1.msra.mxu0 %v114
    %176 = vmatprep.subr.mxu0 0.0
    %177 = vmatpush1.msra.mxu0 %v115
    %178 = vmatprep.subr.mxu0 0.0
    %179 = vmatpush1.msra.mxu0 %v116
    %180 = vmatprep.subr.mxu0 0.0
    %181 = vmatpush1.msra.mxu0 %v117
    %182 = vmatprep.subr.mxu0 0.0
    %183 = vmatpush1.msra.mxu0 %v118
    %184 = vmatprep.subr.mxu0 0.0
    %185 = vmatpush1.msra.mxu0 %v119
    %186 = vmatprep.subr.mxu0 0.0
    %187 = vmatpush1.msra.mxu0 %v120
    %188 = vmatprep.subr.mxu0 0.0
    %189 = vmatpush1.msra.mxu0 %v121
    %190 = vmatprep.subr.mxu0 0.0
    %191 = vmatpush1.msra.mxu0 %v122
    %192 = vmatprep.subr.mxu0 0.0
    %193 = vmatpush1.msra.mxu0 %v123
    %194 = vmatprep.subr.mxu0 0.0
    %195 = vmatpush1.msra.mxu0 %v124
    %196 = vmatprep.subr.mxu0 0.0
    %197 = vmatpush1.msra.mxu0 %v125
    %198 = vmatprep.subr.mxu0 0.0
    %199 = vmatpush1.msra.mxu0 %v126
    %200 = vmatprep.subr.mxu0 0.0
    %201 = vmatpush1.msra.mxu0 %v127
    %202 = vmatprep.subr.mxu0 0.0
    %203 = vmatpush1.msra.mxu0 %v128
    %204 = vmatprep.subr.mxu0 0.0
    %205 = vmatpush1.msra.mxu0 %v129
    %206 = vmatprep.subr.mxu0 0.0
    %207 = vmatpush1.msra.mxu0 %v130
    %208 = vmatprep.subr.mxu0 0.0
    %209 = vmatpush1.msra.mxu0 %v131
    %210 = vmatprep.subr.mxu0 0.0
    %211 = vmatpush1.msra.mxu0 %v132
    %212 = vmatprep.subr.mxu0 0.0
    %213 = vmatpush1.msra.mxu0 %v133
    %214 = vmatprep.subr.mxu0 0.0
    %215 = vmatpush1.msra.mxu0 %v134
    %216 = vmatprep.subr.mxu0 0.0
    %217 = vmatpush1.msra.mxu0 %v135
    %218 = vmatprep.mubr.f32.mxu0 %v151
    %219 = vmatmul.mubr.f32.gmra.mrb[0].mxu0 %v150
    %v220 = vpop.f32.mrb[0].mxu0
    %v221 = vadd.f32 %v141, %v220
    %v222 = vpop.f32.mrb[0].mxu0
    %223 = vdwg.mxu0
    %vm224 = vcmask 17408
    %225 = vst.msk [vmem:[%s9] sm:$0x3] %vm224, %v221
    %v226 = vld [vmem:[%s7] sm:$0xff]
    %v227 = vld [vmem:[%s7 + $0x8] sm:$0xff]
    %v228 = vld [vmem:[%s7 + $0x10] sm:$0xff]
    %v229 = vld [vmem:[%s7 + $0x18] sm:$0xff]
    %v230 = vld [vmem:[%s7 + $0x20] sm:$0xff]
    %v231 = vld [vmem:[%s7 + $0x28] sm:$0xff]
    %v232 = vld [vmem:[%s7 + $0x30] sm:$0xff]
    %v233 = vld [vmem:[%s7 + $0x38] sm:$0xff]
    %v234 = vld [vmem:[%s7 + $0x40] sm:$0xff]
    %v235 = vld [vmem:[%s7 + $0x48] sm:$0xff]
    %v236 = vld [vmem:[%s7 + $0x50] sm:$0xff]
    %v237 = vld [vmem:[%s7 + $0x58] sm:$0xff]
    %v238 = vld [vmem:[%s7 + $0x60] sm:$0xff]
    %v239 = vld [vmem:[%s7 + $0x68] sm:$0xff]
    %v240 = vld [vmem:[%s7 + $0x70] sm:$0xff]
    %v241 = vld [vmem:[%s7 + $0x78] sm:$0xff]
    %v242 = vld [vmem:[%s7 + $0x80] sm:$0xff]
    %v243 = vld [vmem:[%s7 + $0x88] sm:$0xff]
    %v244 = vld [vmem:[%s7 + $0x90] sm:$0xff]
    %v245 = vld [vmem:[%s7 + $0x98] sm:$0xff]
    %v246 = vld [vmem:[%s7 + $0xa0] sm:$0xff]
    %v247 = vld [vmem:[%s7 + $0xa8] sm:$0xff]
    %v248 = vld [vmem:[%s7 + $0xb0] sm:$0xff]
    %v249 = vld [vmem:[%s7 + $0xb8] sm:$0xff]
    %v250 = vld [vmem:[%s7 + $0xc0] sm:$0xff]
    %v251 = vld [vmem:[%s7 + $0xc8] sm:$0xff]
    %v252 = vld [vmem:[%s7 + $0xd0] sm:$0xff]
    %v253 = vld [vmem:[%s7 + $0xd8] sm:$0xff]
    %v254 = vld [vmem:[%s7 + $0xe0] sm:$0xff]
    %v255 = vld [vmem:[%s7 + $0xe8] sm:$0xff]
    %v256 = vld [vmem:[%s7 + $0xf0] sm:$0xff]
    %v257 = vld [vmem:[%s7 + $0xf8] sm:$0xff]
    %v258 = vld [vmem:[#allocation8] sm:$0x1]
    %v260 = vlaneseq
    %v261 = vshrl.u32 %v260, 7
    %v262 = vsub.s32 0, %v261
    %v263 = vrot.slane %v258, %v262
    %v267 = vunpack.c.l.s4 1983009808
    %v268 = vunpack.c.0.s8 %v267
    %v269 = vlaneseq
    %v270 = vshrl.u32 %v269, 7
    %v271 = vsub.s32 %v268, %v270
    %v272 = vrot.slane %v101, %v271
    %v273 = vcombine.high %v272, %v272
    %276 = vmatprep.subr.mxu0 0.0
    %277 = vmatpush1.msra.mxu0 %v226
    %278 = vmatprep.subr.mxu0 0.0
    %279 = vmatpush1.msra.mxu0 %v227
    %280 = vmatprep.subr.mxu0 0.0
    %281 = vmatpush1.msra.mxu0 %v228
    %282 = vmatprep.subr.mxu0 0.0
    %283 = vmatpush1.msra.mxu0 %v229
    %284 = vmatprep.subr.mxu0 0.0
    %285 = vmatpush1.msra.mxu0 %v230
    %286 = vmatprep.subr.mxu0 0.0
    %287 = vmatpush1.msra.mxu0 %v231
    %288 = vmatprep.subr.mxu0 0.0
    %289 = vmatpush1.msra.mxu0 %v232
    %290 = vmatprep.subr.mxu0 0.0
    %291 = vmatpush1.msra.mxu0 %v233
    %292 = vmatprep.subr.mxu0 0.0
    %293 = vmatpush1.msra.mxu0 %v234
    %294 = vmatprep.subr.mxu0 0.0
    %295 = vmatpush1.msra.mxu0 %v235
    %296 = vmatprep.subr.mxu0 0.0
    %297 = vmatpush1.msra.mxu0 %v236
    %298 = vmatprep.subr.mxu0 0.0
    %299 = vmatpush1.msra.mxu0 %v237
    %300 = vmatprep.subr.mxu0 0.0
    %301 = vmatpush1.msra.mxu0 %v238
    %302 = vmatprep.subr.mxu0 0.0
    %303 = vmatpush1.msra.mxu0 %v239
    %304 = vmatprep.subr.mxu0 0.0
    %305 = vmatpush1.msra.mxu0 %v240
    %306 = vmatprep.subr.mxu0 0.0
    %307 = vmatpush1.msra.mxu0 %v241
    %308 = vmatprep.subr.mxu0 0.0
    %309 = vmatpush1.msra.mxu0 %v242
    %310 = vmatprep.subr.mxu0 0.0
    %311 = vmatpush1.msra.mxu0 %v243
    %312 = vmatprep.subr.mxu0 0.0
    %313 = vmatpush1.msra.mxu0 %v244
    %314 = vmatprep.subr.mxu0 0.0
    %315 = vmatpush1.msra.mxu0 %v245
    %316 = vmatprep.subr.mxu0 0.0
    %317 = vmatpush1.msra.mxu0 %v246
    %318 = vmatprep.subr.mxu0 0.0
    %319 = vmatpush1.msra.mxu0 %v247
    %320 = vmatprep.subr.mxu0 0.0
    %321 = vmatpush1.msra.mxu0 %v248
    %322 = vmatprep.subr.mxu0 0.0
    %323 = vmatpush1.msra.mxu0 %v249
    %324 = vmatprep.subr.mxu0 0.0
    %325 = vmatpush1.msra.mxu0 %v250
    %326 = vmatprep.subr.mxu0 0.0
    %327 = vmatpush1.msra.mxu0 %v251
    %328 = vmatprep.subr.mxu0 0.0
    %329 = vmatpush1.msra.mxu0 %v252
    %330 = vmatprep.subr.mxu0 0.0
    %331 = vmatpush1.msra.mxu0 %v253
    %332 = vmatprep.subr.mxu0 0.0
    %333 = vmatpush1.msra.mxu0 %v254
    %334 = vmatprep.subr.mxu0 0.0
    %335 = vmatpush1.msra.mxu0 %v255
    %336 = vmatprep.subr.mxu0 0.0
    %337 = vmatpush1.msra.mxu0 %v256
    %338 = vmatprep.subr.mxu0 0.0
    %339 = vmatpush1.msra.mxu0 %v257
    %340 = vmatprep.mubr.f32.mxu0 %v273
    %341 = vmatmul.mubr.f32.gmra.mrb[0].mxu0 %v272
    %v342 = vpop.f32.mrb[0].mxu0
    %v343 = vadd.f32 %v263, %v342
    %v344 = vpop.f32.mrb[0].mxu0
    %345 = vdwg.mxu0
    %vm346 = vcmask 9216
    %347 = vst.msk [vmem:[%s10] sm:$0x3] %vm346, %v343
    %348 = vst.msk [vmem:[%s11] sm:$0x3] %vm346, 0.0
    %349 = vst [vmem:[#allocation2] sm:$0xf] %v103
    %350 = vst [vmem:[#allocation3] sm:$0xf] %v101
    loop: start=1, step=1, limit=8
    $region50: #{ada_forward.3} parent=1 // loop_pre_header
      _
    $region51: #{ada_forward.3} parent=1 // loop_header
      %s352 = sphi 1, %s356
      %p353 = scmp.ge.s32.totalorder %s352, 8
    $region52: #{ada_forward.3} parent=1 // loop_header_branch
      %355 = sbr.rel (%p353) target = $region56
    $region53: #{ada_forward.3} parent=1 // loop_body
      %v357 = vld [vmem:[#allocation2] sm:$0xf]
      %v358 = vld [vmem:[#allocation3] sm:$0xf]
      %s359 = smul.u32 %s352, 8
      %s360 = smul.addr %s359, 2
      %s361 = scalar_lea.vmem %s0, %s360
      %v362 = vld [vmem:[%s361] sm:$0xff]
      %v363 = vld [vmem:[%s361 + $0x8] sm:$0xff]
      %v364 = vld [vmem:[#allocation4] sm:$0xff]
      %v365 = vld [vmem:[#allocation4 + $0x8] sm:$0xff]
      %v366 = vld [vmem:[#allocation4 + $0x10] sm:$0xff]
      %v367 = vld [vmem:[#allocation4 + $0x18] sm:$0xff]
      %v368 = vld [vmem:[#allocation4 + $0x20] sm:$0xff]
      %v369 = vld [vmem:[#allocation4 + $0x28] sm:$0xff]
      %v370 = vld [vmem:[#allocation4 + $0x30] sm:$0xff]
      %v371 = vld [vmem:[#allocation4 + $0x38] sm:$0xff]
      %v372 = vld [vmem:[#allocation4 + $0x40] sm:$0xff]
      %v373 = vld [vmem:[#allocation4 + $0x48] sm:$0xff]
      %v374 = vld [vmem:[#allocation4 + $0x50] sm:$0xff]
      %v375 = vld [vmem:[#allocation4 + $0x58] sm:$0xff]
      %v376 = vld [vmem:[#allocation4 + $0x60] sm:$0xff]
      %v377 = vld [vmem:[#allocation4 + $0x68] sm:$0xff]
      %v378 = vld [vmem:[#allocation4 + $0x70] sm:$0xff]
      %v379 = vld [vmem:[#allocation4 + $0x78] sm:$0xff]
      %v380 = vld [vmem:[#allocation4 + $0x80] sm:$0xff]
      %v381 = vld [vmem:[#allocation4 + $0x88] sm:$0xff]
      %v382 = vld [vmem:[#allocation4 + $0x90] sm:$0xff]
      %v383 = vld [vmem:[#allocation4 + $0x98] sm:$0xff]
      %v384 = vld [vmem:[#allocation4 + $0xa0] sm:$0xff]
      %v385 = vld [vmem:[#allocation4 + $0xa8] sm:$0xff]
      %v386 = vld [vmem:[#allocation4 + $0xb0] sm:$0xff]
      %v387 = vld [vmem:[#allocation4 + $0xb8] sm:$0xff]
      %v388 = vld [vmem:[#allocation4 + $0xc0] sm:$0xff]
      %v389 = vld [vmem:[#allocation4 + $0xc8] sm:$0xff]
      %v390 = vld [vmem:[#allocation4 + $0xd0] sm:$0xff]
      %v391 = vld [vmem:[#allocation4 + $0xd8] sm:$0xff]
      %v392 = vld [vmem:[#allocation4 + $0xe0] sm:$0xff]
      %v393 = vld [vmem:[#allocation4 + $0xe8] sm:$0xff]
      %v394 = vld [vmem:[#allocation4 + $0xf0] sm:$0xff]
      %v395 = vld [vmem:[#allocation4 + $0xf8] sm:$0xff]
      %v396 = vld [vmem:[#allocation4 + $0x100] sm:$0xff]
      %v397 = vld [vmem:[#allocation4 + $0x108] sm:$0xff]
      %v398 = vld [vmem:[#allocation4 + $0x110] sm:$0xff]
      %v399 = vld [vmem:[#allocation4 + $0x118] sm:$0xff]
      %v400 = vld [vmem:[#allocation4 + $0x120] sm:$0xff]
      %v401 = vld [vmem:[#allocation4 + $0x128] sm:$0xff]
      %v402 = vld [vmem:[#allocation4 + $0x130] sm:$0xff]
      %v403 = vld [vmem:[#allocation4 + $0x138] sm:$0xff]
      %v404 = vld [vmem:[#allocation4 + $0x140] sm:$0xff]
      %v405 = vld [vmem:[#allocation4 + $0x148] sm:$0xff]
      %v406 = vld [vmem:[#allocation4 + $0x150] sm:$0xff]
      %v407 = vld [vmem:[#allocation4 + $0x158] sm:$0xff]
      %v408 = vld [vmem:[#allocation4 + $0x160] sm:$0xff]
      %v409 = vld [vmem:[#allocation4 + $0x168] sm:$0xff]
      %v410 = vld [vmem:[#allocation4 + $0x170] sm:$0xff]
      %v411 = vld [vmem:[#allocation4 + $0x178] sm:$0xff]
      %v412 = vld [vmem:[#allocation4 + $0x180] sm:$0xff]
      %v413 = vld [vmem:[#allocation4 + $0x188] sm:$0xff]
      %v414 = vld [vmem:[#allocation4 + $0x190] sm:$0xff]
      %v415 = vld [vmem:[#allocation4 + $0x198] sm:$0xff]
      %v416 = vld [vmem:[#allocation4 + $0x1a0] sm:$0xff]
      %v417 = vld [vmem:[#allocation4 + $0x1a8] sm:$0xff]
      %v418 = vld [vmem:[#allocation4 + $0x1b0] sm:$0xff]
      %v419 = vld [vmem:[#allocation4 + $0x1b8] sm:$0xff]
      %v420 = vld [vmem:[#allocation4 + $0x1c0] sm:$0xff]
      %v421 = vld [vmem:[#allocation4 + $0x1c8] sm:$0xff]
      %v422 = vld [vmem:[#allocation4 + $0x1d0] sm:$0xff]
      %v423 = vld [vmem:[#allocation4 + $0x1d8] sm:$0xff]
      %v424 = vld [vmem:[#allocation4 + $0x1e0] sm:$0xff]
      %v425 = vld [vmem:[#allocation4 + $0x1e8] sm:$0xff]
      %v426 = vld [vmem:[#allocation4 + $0x1f0] sm:$0xff]
      %v427 = vld [vmem:[#allocation4 + $0x1f8] sm:$0xff]
      %v428 = vld [vmem:[#allocation4 + $0x200] sm:$0xff]
      %v429 = vld [vmem:[#allocation4 + $0x208] sm:$0xff]
      %v430 = vld [vmem:[#allocation4 + $0x210] sm:$0xff]
      %v431 = vld [vmem:[#allocation4 + $0x218] sm:$0xff]
      %v432 = vld [vmem:[#allocation4 + $0x220] sm:$0xff]
      %v433 = vld [vmem:[#allocation4 + $0x228] sm:$0xff]
      %v434 = vld [vmem:[#allocation4 + $0x230] sm:$0xff]
      %v435 = vld [vmem:[#allocation4 + $0x238] sm:$0xff]
      %v436 = vld [vmem:[#allocation4 + $0x240] sm:$0xff]
      %v437 = vld [vmem:[#allocation4 + $0x248] sm:$0xff]
      %v438 = vld [vmem:[#allocation4 + $0x250] sm:$0xff]
      %v439 = vld [vmem:[#allocation4 + $0x258] sm:$0xff]
      %v440 = vld [vmem:[#allocation4 + $0x260] sm:$0xff]
      %v441 = vld [vmem:[#allocation4 + $0x268] sm:$0xff]
      %v442 = vld [vmem:[#allocation4 + $0x270] sm:$0xff]
      %v443 = vld [vmem:[#allocation4 + $0x278] sm:$0xff]
      %v444 = vld [vmem:[#allocation4 + $0x280] sm:$0xff]
      %v445 = vld [vmem:[#allocation4 + $0x288] sm:$0xff]
      %v446 = vld [vmem:[#allocation4 + $0x290] sm:$0xff]
      %v447 = vld [vmem:[#allocation4 + $0x298] sm:$0xff]
      %v448 = vld [vmem:[#allocation4 + $0x2a0] sm:$0xff]
      %v449 = vld [vmem:[#allocation4 + $0x2a8] sm:$0xff]
      %v450 = vld [vmem:[#allocation4 + $0x2b0] sm:$0xff]
      %v451 = vld [vmem:[#allocation4 + $0x2b8] sm:$0xff]
      %v452 = vld [vmem:[#allocation4 + $0x2c0] sm:$0xff]
      %v453 = vld [vmem:[#allocation4 + $0x2c8] sm:$0xff]
      %v454 = vld [vmem:[#allocation4 + $0x2d0] sm:$0xff]
      %v455 = vld [vmem:[#allocation4 + $0x2d8] sm:$0xff]
      %v456 = vld [vmem:[#allocation4 + $0x2e0] sm:$0xff]
      %v457 = vld [vmem:[#allocation4 + $0x2e8] sm:$0xff]
      %v458 = vld [vmem:[#allocation4 + $0x2f0] sm:$0xff]
      %v459 = vld [vmem:[#allocation4 + $0x2f8] sm:$0xff]
      %v460 = vld [vmem:[#allocation4 + $0x300] sm:$0xff]
      %v461 = vld [vmem:[#allocation4 + $0x308] sm:$0xff]
      %v462 = vld [vmem:[#allocation4 + $0x310] sm:$0xff]
      %v463 = vld [vmem:[#allocation4 + $0x318] sm:$0xff]
      %v464 = vld [vmem:[#allocation4 + $0x320] sm:$0xff]
      %v465 = vld [vmem:[#allocation4 + $0x328] sm:$0xff]
      %v466 = vld [vmem:[#allocation4 + $0x330] sm:$0xff]
      %v467 = vld [vmem:[#allocation4 + $0x338] sm:$0xff]
      %v468 = vld [vmem:[#allocation4 + $0x340] sm:$0xff]
      %v469 = vld [vmem:[#allocation4 + $0x348] sm:$0xff]
      %v470 = vld [vmem:[#allocation4 + $0x350] sm:$0xff]
      %v471 = vld [vmem:[#allocation4 + $0x358] sm:$0xff]
      %v472 = vld [vmem:[#allocation4 + $0x360] sm:$0xff]
      %v473 = vld [vmem:[#allocation4 + $0x368] sm:$0xff]
      %v474 = vld [vmem:[#allocation4 + $0x370] sm:$0xff]
      %v475 = vld [vmem:[#allocation4 + $0x378] sm:$0xff]
      %v476 = vld [vmem:[#allocation4 + $0x380] sm:$0xff]
      %v477 = vld [vmem:[#allocation4 + $0x388] sm:$0xff]
      %v478 = vld [vmem:[#allocation4 + $0x390] sm:$0xff]
      %v479 = vld [vmem:[#allocation4 + $0x398] sm:$0xff]
      %v480 = vld [vmem:[#allocation4 + $0x3a0] sm:$0xff]
      %v481 = vld [vmem:[#allocation4 + $0x3a8] sm:$0xff]
      %v482 = vld [vmem:[#allocation4 + $0x3b0] sm:$0xff]
      %v483 = vld [vmem:[#allocation4 + $0x3b8] sm:$0xff]
      %v484 = vld [vmem:[#allocation4 + $0x3c0] sm:$0xff]
      %v485 = vld [vmem:[#allocation4 + $0x3c8] sm:$0xff]
      %v486 = vld [vmem:[#allocation4 + $0x3d0] sm:$0xff]
      %v487 = vld [vmem:[#allocation4 + $0x3d8] sm:$0xff]
      %v488 = vld [vmem:[#allocation4 + $0x3e0] sm:$0xff]
      %v489 = vld [vmem:[#allocation4 + $0x3e8] sm:$0xff]
      %v490 = vld [vmem:[#allocation4 + $0x3f0] sm:$0xff]
      %v491 = vld [vmem:[#allocation4 + $0x3f8] sm:$0xff]
      %v492 = vld [vmem:[#allocation4 + $0x400] sm:$0xff]
      %v493 = vld [vmem:[#allocation4 + $0x408] sm:$0xff]
      %v494 = vld [vmem:[#allocation4 + $0x410] sm:$0xff]
      %v495 = vld [vmem:[#allocation4 + $0x418] sm:$0xff]
      %v496 = vld [vmem:[#allocation4 + $0x420] sm:$0xff]
      %v497 = vld [vmem:[#allocation4 + $0x428] sm:$0xff]
      %v498 = vld [vmem:[#allocation4 + $0x430] sm:$0xff]
      %v499 = vld [vmem:[#allocation4 + $0x438] sm:$0xff]
      %v500 = vld [vmem:[#allocation4 + $0x440] sm:$0xff]
      %v501 = vld [vmem:[#allocation4 + $0x448] sm:$0xff]
      %v502 = vld [vmem:[#allocation4 + $0x450] sm:$0xff]
      %v503 = vld [vmem:[#allocation4 + $0x458] sm:$0xff]
      %v504 = vld [vmem:[#allocation4 + $0x460] sm:$0xff]
      %v505 = vld [vmem:[#allocation4 + $0x468] sm:$0xff]
      %v506 = vld [vmem:[#allocation4 + $0x470] sm:$0xff]
      %v507 = vld [vmem:[#allocation4 + $0x478] sm:$0xff]
      %v508 = vld [vmem:[#allocation4 + $0x480] sm:$0xff]
      %v509 = vld [vmem:[#allocation4 + $0x488] sm:$0xff]
      %v510 = vld [vmem:[#allocation4 + $0x490] sm:$0xff]
      %v511 = vld [vmem:[#allocation4 + $0x498] sm:$0xff]
      %v512 = vld [vmem:[#allocation4 + $0x4a0] sm:$0xff]
      %v513 = vld [vmem:[#allocation4 + $0x4a8] sm:$0xff]
      %v514 = vld [vmem:[#allocation4 + $0x4b0] sm:$0xff]
      %v515 = vld [vmem:[#allocation4 + $0x4b8] sm:$0xff]
      %v516 = vld [vmem:[#allocation4 + $0x4c0] sm:$0xff]
      %v517 = vld [vmem:[#allocation4 + $0x4c8] sm:$0xff]
      %v518 = vld [vmem:[#allocation4 + $0x4d0] sm:$0xff]
      %v519 = vld [vmem:[#allocation4 + $0x4d8] sm:$0xff]
      %v520 = vld [vmem:[#allocation4 + $0x4e0] sm:$0xff]
      %v521 = vld [vmem:[#allocation4 + $0x4e8] sm:$0xff]
      %v522 = vld [vmem:[#allocation4 + $0x4f0] sm:$0xff]
      %v523 = vld [vmem:[#allocation4 + $0x4f8] sm:$0xff]
      %v524 = vld [vmem:[#allocation4 + $0x500] sm:$0xff]
      %v525 = vld [vmem:[#allocation4 + $0x508] sm:$0xff]
      %v526 = vld [vmem:[#allocation4 + $0x510] sm:$0xff]
      %v527 = vld [vmem:[#allocation4 + $0x518] sm:$0xff]
      %v528 = vld [vmem:[#allocation4 + $0x520] sm:$0xff]
      %v529 = vld [vmem:[#allocation4 + $0x528] sm:$0xff]
      %v530 = vld [vmem:[#allocation4 + $0x530] sm:$0xff]
      %v531 = vld [vmem:[#allocation4 + $0x538] sm:$0xff]
      %v532 = vld [vmem:[#allocation4 + $0x540] sm:$0xff]
      %v533 = vld [vmem:[#allocation4 + $0x548] sm:$0xff]
      %v534 = vld [vmem:[#allocation4 + $0x550] sm:$0xff]
      %v535 = vld [vmem:[#allocation4 + $0x558] sm:$0xff]
      %v536 = vld [vmem:[#allocation4 + $0x560] sm:$0xff]
      %v537 = vld [vmem:[#allocation4 + $0x568] sm:$0xff]
      %v538 = vld [vmem:[#allocation4 + $0x570] sm:$0xff]
      %v539 = vld [vmem:[#allocation4 + $0x578] sm:$0xff]
      %v540 = vld [vmem:[#allocation4 + $0x580] sm:$0xff]
      %v541 = vld [vmem:[#allocation4 + $0x588] sm:$0xff]
      %v542 = vld [vmem:[#allocation4 + $0x590] sm:$0xff]
      %v543 = vld [vmem:[#allocation4 + $0x598] sm:$0xff]
      %v544 = vld [vmem:[#allocation4 + $0x5a0] sm:$0xff]
      %v545 = vld [vmem:[#allocation4 + $0x5a8] sm:$0xff]
      %v546 = vld [vmem:[#allocation4 + $0x5b0] sm:$0xff]
      %v547 = vld [vmem:[#allocation4 + $0x5b8] sm:$0xff]
      %v548 = vld [vmem:[#allocation4 + $0x5c0] sm:$0xff]
      %v549 = vld [vmem:[#allocation4 + $0x5c8] sm:$0xff]
      %v550 = vld [vmem:[#allocation4 + $0x5d0] sm:$0xff]
      %v551 = vld [vmem:[#allocation4 + $0x5d8] sm:$0xff]
      %v552 = vld [vmem:[#allocation4 + $0x5e0] sm:$0xff]
      %v553 = vld [vmem:[#allocation4 + $0x5e8] sm:$0xff]
      %v554 = vld [vmem:[#allocation4 + $0x5f0] sm:$0xff]
      %v555 = vld [vmem:[#allocation4 + $0x5f8] sm:$0xff]
      %v556 = vld [vmem:[#allocation4 + $0x600] sm:$0xff]
      %v557 = vld [vmem:[#allocation4 + $0x608] sm:$0xff]
      %v558 = vld [vmem:[#allocation4 + $0x610] sm:$0xff]
      %v559 = vld [vmem:[#allocation4 + $0x618] sm:$0xff]
      %v560 = vld [vmem:[#allocation4 + $0x620] sm:$0xff]
      %v561 = vld [vmem:[#allocation4 + $0x628] sm:$0xff]
      %v562 = vld [vmem:[#allocation4 + $0x630] sm:$0xff]
      %v563 = vld [vmem:[#allocation4 + $0x638] sm:$0xff]
      %v564 = vld [vmem:[#allocation4 + $0x640] sm:$0xff]
      %v565 = vld [vmem:[#allocation4 + $0x648] sm:$0xff]
      %v566 = vld [vmem:[#allocation4 + $0x650] sm:$0xff]
      %v567 = vld [vmem:[#allocation4 + $0x658] sm:$0xff]
      %v568 = vld [vmem:[#allocation4 + $0x660] sm:$0xff]
      %v569 = vld [vmem:[#allocation4 + $0x668] sm:$0xff]
      %v570 = vld [vmem:[#allocation4 + $0x670] sm:$0xff]
      %v571 = vld [vmem:[#allocation4 + $0x678] sm:$0xff]
      %v572 = vld [vmem:[#allocation4 + $0x680] sm:$0xff]
      %v573 = vld [vmem:[#allocation4 + $0x688] sm:$0xff]
      %v574 = vld [vmem:[#allocation4 + $0x690] sm:$0xff]
      %v575 = vld [vmem:[#allocation4 + $0x698] sm:$0xff]
      %v576 = vld [vmem:[#allocation4 + $0x6a0] sm:$0xff]
      %v577 = vld [vmem:[#allocation4 + $0x6a8] sm:$0xff]
      %v578 = vld [vmem:[#allocation4 + $0x6b0] sm:$0xff]
      %v579 = vld [vmem:[#allocation4 + $0x6b8] sm:$0xff]
      %v580 = vld [vmem:[#allocation4 + $0x6c0] sm:$0xff]
      %v581 = vld [vmem:[#allocation4 + $0x6c8] sm:$0xff]
      %v582 = vld [vmem:[#allocation4 + $0x6d0] sm:$0xff]
      %v583 = vld [vmem:[#allocation4 + $0x6d8] sm:$0xff]
      %v584 = vld [vmem:[#allocation4 + $0x6e0] sm:$0xff]
      %v585 = vld [vmem:[#allocation4 + $0x6e8] sm:$0xff]
      %v586 = vld [vmem:[#allocation4 + $0x6f0] sm:$0xff]
      %v587 = vld [vmem:[#allocation4 + $0x6f8] sm:$0xff]
      %v588 = vld [vmem:[#allocation4 + $0x700] sm:$0xff]
      %v589 = vld [vmem:[#allocation4 + $0x708] sm:$0xff]
      %v590 = vld [vmem:[#allocation4 + $0x710] sm:$0xff]
      %v591 = vld [vmem:[#allocation4 + $0x718] sm:$0xff]
      %v592 = vld [vmem:[#allocation4 + $0x720] sm:$0xff]
      %v593 = vld [vmem:[#allocation4 + $0x728] sm:$0xff]
      %v594 = vld [vmem:[#allocation4 + $0x730] sm:$0xff]
      %v595 = vld [vmem:[#allocation4 + $0x738] sm:$0xff]
      %v596 = vld [vmem:[#allocation4 + $0x740] sm:$0xff]
      %v597 = vld [vmem:[#allocation4 + $0x748] sm:$0xff]
      %v598 = vld [vmem:[#allocation4 + $0x750] sm:$0xff]
      %v599 = vld [vmem:[#allocation4 + $0x758] sm:$0xff]
      %v600 = vld [vmem:[#allocation4 + $0x760] sm:$0xff]
      %v601 = vld [vmem:[#allocation4 + $0x768] sm:$0xff]
      %v602 = vld [vmem:[#allocation4 + $0x770] sm:$0xff]
      %v603 = vld [vmem:[#allocation4 + $0x778] sm:$0xff]
      %v604 = vld [vmem:[#allocation4 + $0x780] sm:$0xff]
      %v605 = vld [vmem:[#allocation4 + $0x788] sm:$0xff]
      %v606 = vld [vmem:[#allocation4 + $0x790] sm:$0xff]
      %v607 = vld [vmem:[#allocation4 + $0x798] sm:$0xff]
      %v608 = vld [vmem:[#allocation4 + $0x7a0] sm:$0xff]
      %v609 = vld [vmem:[#allocation4 + $0x7a8] sm:$0xff]
      %v610 = vld [vmem:[#allocation4 + $0x7b0] sm:$0xff]
      %v611 = vld [vmem:[#allocation4 + $0x7b8] sm:$0xff]
      %v612 = vld [vmem:[#allocation4 + $0x7c0] sm:$0xff]
      %v613 = vld [vmem:[#allocation4 + $0x7c8] sm:$0xff]
      %v614 = vld [vmem:[#allocation4 + $0x7d0] sm:$0xff]
      %v615 = vld [vmem:[#allocation4 + $0x7d8] sm:$0xff]
      %v616 = vld [vmem:[#allocation4 + $0x7e0] sm:$0xff]
      %v617 = vld [vmem:[#allocation4 + $0x7e8] sm:$0xff]
      %v618 = vld [vmem:[#allocation4 + $0x7f0] sm:$0xff]
      %v619 = vld [vmem:[#allocation4 + $0x7f8] sm:$0xff]
      %v622 = vunpack.c.l.s4 1983009808
      %v623 = vunpack.c.0.s8 %v622
      %v624 = vlaneseq
      %v625 = vshrl.u32 %v624, 7
      %v626 = vsub.s32 %v623, %v625
      %v627 = vrot.slane %v357, %v626
      %v628 = vcombine.high %v627, %v627
      %631 = vmatprep.subr.mxu0 %v365
      %632 = vmatpush1.msra.mxu0 %v364
      %633 = vmatprep.subr.mxu0 %v373
      %634 = vmatpush1.msra.mxu0 %v372
      %635 = vmatprep.subr.mxu0 %v381
      %636 = vmatpush1.msra.mxu0 %v380
      %637 = vmatprep.subr.mxu0 %v389
      %638 = vmatpush1.msra.mxu0 %v388
      %639 = vmatprep.subr.mxu0 %v397
      %640 = vmatpush1.msra.mxu0 %v396
      %641 = vmatprep.subr.mxu0 %v405
      %642 = vmatpush1.msra.mxu0 %v404
      %643 = vmatprep.subr.mxu0 %v413
      %644 = vmatpush1.msra.mxu0 %v412
      %645 = vmatprep.subr.mxu0 %v421
      %646 = vmatpush1.msra.mxu0 %v420
      %647 = vmatprep.subr.mxu0 %v429
      %648 = vmatpush1.msra.mxu0 %v428
      %649 = vmatprep.subr.mxu0 %v437
      %650 = vmatpush1.msra.mxu0 %v436
      %651 = vmatprep.subr.mxu0 %v445
      %652 = vmatpush1.msra.mxu0 %v444
      %653 = vmatprep.subr.mxu0 %v453
      %654 = vmatpush1.msra.mxu0 %v452
      %655 = vmatprep.subr.mxu0 %v461
      %656 = vmatpush1.msra.mxu0 %v460
      %657 = vmatprep.subr.mxu0 %v469
      %658 = vmatpush1.msra.mxu0 %v468
      %659 = vmatprep.subr.mxu0 %v477
      %660 = vmatpush1.msra.mxu0 %v476
      %661 = vmatprep.subr.mxu0 %v485
      %662 = vmatpush1.msra.mxu0 %v484
      %663 = vmatprep.subr.mxu0 %v493
      %664 = vmatpush1.msra.mxu0 %v492
      %665 = vmatprep.subr.mxu0 %v501
      %666 = vmatpush1.msra.mxu0 %v500
      %667 = vmatprep.subr.mxu0 %v509
      %668 = vmatpush1.msra.mxu0 %v508
      %669 = vmatprep.subr.mxu0 %v517
      %670 = vmatpush1.msra.mxu0 %v516
      %671 = vmatprep.subr.mxu0 %v525
      %672 = vmatpush1.msra.mxu0 %v524
      %673 = vmatprep.subr.mxu0 %v533
      %674 = vmatpush1.msra.mxu0 %v532
      %675 = vmatprep.subr.mxu0 %v541
      %676 = vmatpush1.msra.mxu0 %v540
      %677 = vmatprep.subr.mxu0 %v549
      %678 = vmatpush1.msra.mxu0 %v548
      %679 = vmatprep.subr.mxu0 %v557
      %680 = vmatpush1.msra.mxu0 %v556
      %681 = vmatprep.subr.mxu0 %v565
      %682 = vmatpush1.msra.mxu0 %v564
      %683 = vmatprep.subr.mxu0 %v573
      %684 = vmatpush1.msra.mxu0 %v572
      %685 = vmatprep.subr.mxu0 %v581
      %686 = vmatpush1.msra.mxu0 %v580
      %687 = vmatprep.subr.mxu0 %v589
      %688 = vmatpush1.msra.mxu0 %v588
      %689 = vmatprep.subr.mxu0 %v597
      %690 = vmatpush1.msra.mxu0 %v596
      %691 = vmatprep.subr.mxu0 %v605
      %692 = vmatpush1.msra.mxu0 %v604
      %693 = vmatprep.subr.mxu0 %v613
      %694 = vmatpush1.msra.mxu0 %v612
      %695 = vmatprep.mubr.f32.mxu0 %v628
      %696 = vmatmul.mubr.f32.gmra.mrb[0].mxu0 %v627
      %v697 = vpop.f32.mrb[0].mxu0
      %v698 = vadd.f32 0.0, %v697
      %v699 = vpop.f32.mrb[0].mxu0
      %v700 = vadd.f32 0.0, %v699
      %701 = vdwg.mxu0
      %702 = vmatprep.subr.mxu0 %v367
      %703 = vmatpush1.msra.mxu0 %v366
      %704 = vmatprep.subr.mxu0 %v375
      %705 = vmatpush1.msra.mxu0 %v374
      %706 = vmatprep.subr.mxu0 %v383
      %707 = vmatpush1.msra.mxu0 %v382
      %708 = vmatprep.subr.mxu0 %v391
      %709 = vmatpush1.msra.mxu0 %v390
      %710 = vmatprep.subr.mxu0 %v399
      %711 = vmatpush1.msra.mxu0 %v398
      %712 = vmatprep.subr.mxu0 %v407
      %713 = vmatpush1.msra.mxu0 %v406
      %714 = vmatprep.subr.mxu0 %v415
      %715 = vmatpush1.msra.mxu0 %v414
      %716 = vmatprep.subr.mxu0 %v423
      %717 = vmatpush1.msra.mxu0 %v422
      %718 = vmatprep.subr.mxu0 %v431
      %719 = vmatpush1.msra.mxu0 %v430
      %720 = vmatprep.subr.mxu0 %v439
      %721 = vmatpush1.msra.mxu0 %v438
      %722 = vmatprep.subr.mxu0 %v447
      %723 = vmatpush1.msra.mxu0 %v446
      %724 = vmatprep.subr.mxu0 %v455
      %725 = vmatpush1.msra.mxu0 %v454
      %726 = vmatprep.subr.mxu0 %v463
      %727 = vmatpush1.msra.mxu0 %v462
      %728 = vmatprep.subr.mxu0 %v471
      %729 = vmatpush1.msra.mxu0 %v470
      %730 = vmatprep.subr.mxu0 %v479
      %731 = vmatpush1.msra.mxu0 %v478
      %732 = vmatprep.subr.mxu0 %v487
      %733 = vmatpush1.msra.mxu0 %v486
      %734 = vmatprep.subr.mxu0 %v495
      %735 = vmatpush1.msra.mxu0 %v494
      %736 = vmatprep.subr.mxu0 %v503
      %737 = vmatpush1.msra.mxu0 %v502
      %738 = vmatprep.subr.mxu0 %v511
      %739 = vmatpush1.msra.mxu0 %v510
      %740 = vmatprep.subr.mxu0 %v519
      %741 = vmatpush1.msra.mxu0 %v518
      %742 = vmatprep.subr.mxu0 %v527
      %743 = vmatpush1.msra.mxu0 %v526
      %744 = vmatprep.subr.mxu0 %v535
      %745 = vmatpush1.msra.mxu0 %v534
      %746 = vmatprep.subr.mxu0 %v543
      %747 = vmatpush1.msra.mxu0 %v542
      %748 = vmatprep.subr.mxu0 %v551
      %749 = vmatpush1.msra.mxu0 %v550
      %750 = vmatprep.subr.mxu0 %v559
      %751 = vmatpush1.msra.mxu0 %v558
      %752 = vmatprep.subr.mxu0 %v567
      %753 = vmatpush1.msra.mxu0 %v566
      %754 = vmatprep.subr.mxu0 %v575
      %755 = vmatpush1.msra.mxu0 %v574
      %756 = vmatprep.subr.mxu0 %v583
      %757 = vmatpush1.msra.mxu0 %v582
      %758 = vmatprep.subr.mxu0 %v591
      %759 = vmatpush1.msra.mxu0 %v590
      %760 = vmatprep.subr.mxu0 %v599
      %761 = vmatpush1.msra.mxu0 %v598
      %762 = vmatprep.subr.mxu0 %v607
      %763 = vmatpush1.msra.mxu0 %v606
      %764 = vmatprep.subr.mxu0 %v615
      %765 = vmatpush1.msra.mxu0 %v614
      %766 = vmatprep.mubr.f32.mxu0 %v628
      %767 = vmatmul.mubr.f32.gmra.mrb[0].mxu0 %v627
      %v768 = vpop.f32.mrb[0].mxu0
      %v769 = vadd.f32 0.0, %v768
      %v770 = vpop.f32.mrb[0].mxu0
      %v771 = vadd.f32 0.0, %v770
      %772 = vdwg.mxu0
      %773 = vmatprep.subr.mxu0 %v369
      %774 = vmatpush1.msra.mxu0 %v368
      %775 = vmatprep.subr.mxu0 %v377
      %776 = vmatpush1.msra.mxu0 %v376
      %777 = vmatprep.subr.mxu0 %v385
      %778 = vmatpush1.msra.mxu0 %v384
      %779 = vmatprep.subr.mxu0 %v393
      %780 = vmatpush1.msra.mxu0 %v392
      %781 = vmatprep.subr.mxu0 %v401
      %782 = vmatpush1.msra.mxu0 %v400
      %783 = vmatprep.subr.mxu0 %v409
      %784 = vmatpush1.msra.mxu0 %v408
      %785 = vmatprep.subr.mxu0 %v417
      %786 = vmatpush1.msra.mxu0 %v416
      %787 = vmatprep.subr.mxu0 %v425
      %788 = vmatpush1.msra.mxu0 %v424
      %789 = vmatprep.subr.mxu0 %v433
      %790 = vmatpush1.msra.mxu0 %v432
      %791 = vmatprep.subr.mxu0 %v441
      %792 = vmatpush1.msra.mxu0 %v440
      %793 = vmatprep.subr.mxu0 %v449
      %794 = vmatpush1.msra.mxu0 %v448
      %795 = vmatprep.subr.mxu0 %v457
      %796 = vmatpush1.msra.mxu0 %v456
      %797 = vmatprep.subr.mxu0 %v465
      %798 = vmatpush1.msra.mxu0 %v464
      %799 = vmatprep.subr.mxu0 %v473
      %800 = vmatpush1.msra.mxu0 %v472
      %801 = vmatprep.subr.mxu0 %v481
      %802 = vmatpush1.msra.mxu0 %v480
      %803 = vmatprep.subr.mxu0 %v489
      %804 = vmatpush1.msra.mxu0 %v488
      %805 = vmatprep.subr.mxu0 %v497
      %806 = vmatpush1.msra.mxu0 %v496
      %807 = vmatprep.subr.mxu0 %v505
      %808 = vmatpush1.msra.mxu0 %v504
      %809 = vmatprep.subr.mxu0 %v513
      %810 = vmatpush1.msra.mxu0 %v512
      %811 = vmatprep.subr.mxu0 %v521
      %812 = vmatpush1.msra.mxu0 %v520
      %813 = vmatprep.subr.mxu0 %v529
      %814 = vmatpush1.msra.mxu0 %v528
      %815 = vmatprep.subr.mxu0 %v537
      %816 = vmatpush1.msra.mxu0 %v536
      %817 = vmatprep.subr.mxu0 %v545
      %818 = vmatpush1.msra.mxu0 %v544
      %819 = vmatprep.subr.mxu0 %v553
      %820 = vmatpush1.msra.mxu0 %v552
      %821 = vmatprep.subr.mxu0 %v561
      %822 = vmatpush1.msra.mxu0 %v560
      %823 = vmatprep.subr.mxu0 %v569
      %824 = vmatpush1.msra.mxu0 %v568
      %825 = vmatprep.subr.mxu0 %v577
      %826 = vmatpush1.msra.mxu0 %v576
      %827 = vmatprep.subr.mxu0 %v585
      %828 = vmatpush1.msra.mxu0 %v584
      %829 = vmatprep.subr.mxu0 %v593
      %830 = vmatpush1.msra.mxu0 %v592
      %831 = vmatprep.subr.mxu0 %v601
      %832 = vmatpush1.msra.mxu0 %v600
      %833 = vmatprep.subr.mxu0 %v609
      %834 = vmatpush1.msra.mxu0 %v608
      %835 = vmatprep.subr.mxu0 %v617
      %836 = vmatpush1.msra.mxu0 %v616
      %837 = vmatprep.mubr.f32.mxu0 %v628
      %838 = vmatmul.mubr.f32.gmra.mrb[0].mxu0 %v627
      %v839 = vpop.f32.mrb[0].mxu0
      %v840 = vadd.f32 0.0, %v839
      %v841 = vpop.f32.mrb[0].mxu0
      %v842 = vadd.f32 0.0, %v841
      %843 = vdwg.mxu0
      %844 = vmatprep.subr.mxu0 %v371
      %845 = vmatpush1.msra.mxu0 %v370
      %846 = vmatprep.subr.mxu0 %v379
      %847 = vmatpush1.msra.mxu0 %v378
      %848 = vmatprep.subr.mxu0 %v387
      %849 = vmatpush1.msra.mxu0 %v386
      %850 = vmatprep.subr.mxu0 %v395
      %851 = vmatpush1.msra.mxu0 %v394
      %852 = vmatprep.subr.mxu0 %v403
      %853 = vmatpush1.msra.mxu0 %v402
      %854 = vmatprep.subr.mxu0 %v411
      %855 = vmatpush1.msra.mxu0 %v410
      %856 = vmatprep.subr.mxu0 %v419
      %857 = vmatpush1.msra.mxu0 %v418
      %858 = vmatprep.subr.mxu0 %v427
      %859 = vmatpush1.msra.mxu0 %v426
      %860 = vmatprep.subr.mxu0 %v435
      %861 = vmatpush1.msra.mxu0 %v434
      %862 = vmatprep.subr.mxu0 %v443
      %863 = vmatpush1.msra.mxu0 %v442
      %864 = vmatprep.subr.mxu0 %v451
      %865 = vmatpush1.msra.mxu0 %v450
      %866 = vmatprep.subr.mxu0 %v459
      %867 = vmatpush1.msra.mxu0 %v458
      %868 = vmatprep.subr.mxu0 %v467
      %869 = vmatpush1.msra.mxu0 %v466
      %870 = vmatprep.subr.mxu0 %v475
      %871 = vmatpush1.msra.mxu0 %v474
      %872 = vmatprep.subr.mxu0 %v483
      %873 = vmatpush1.msra.mxu0 %v482
      %874 = vmatprep.subr.mxu0 %v491
      %875 = vmatpush1.msra.mxu0 %v490
      %876 = vmatprep.subr.mxu0 %v499
      %877 = vmatpush1.msra.mxu0 %v498
      %878 = vmatprep.subr.mxu0 %v507
      %879 = vmatpush1.msra.mxu0 %v506
      %880 = vmatprep.subr.mxu0 %v515
      %881 = vmatpush1.msra.mxu0 %v514
      %882 = vmatprep.subr.mxu0 %v523
      %883 = vmatpush1.msra.mxu0 %v522
      %884 = vmatprep.subr.mxu0 %v531
      %885 = vmatpush1.msra.mxu0 %v530
      %886 = vmatprep.subr.mxu0 %v539
      %887 = vmatpush1.msra.mxu0 %v538
      %888 = vmatprep.subr.mxu0 %v547
      %889 = vmatpush1.msra.mxu0 %v546
      %890 = vmatprep.subr.mxu0 %v555
      %891 = vmatpush1.msra.mxu0 %v554
      %892 = vmatprep.subr.mxu0 %v563
      %893 = vmatpush1.msra.mxu0 %v562
      %894 = vmatprep.subr.mxu0 %v571
      %895 = vmatpush1.msra.mxu0 %v570
      %896 = vmatprep.subr.mxu0 %v579
      %897 = vmatpush1.msra.mxu0 %v578
      %898 = vmatprep.subr.mxu0 %v587
      %899 = vmatpush1.msra.mxu0 %v586
      %900 = vmatprep.subr.mxu0 %v595
      %901 = vmatpush1.msra.mxu0 %v594
      %902 = vmatprep.subr.mxu0 %v603
      %903 = vmatpush1.msra.mxu0 %v602
      %904 = vmatprep.subr.mxu0 %v611
      %905 = vmatpush1.msra.mxu0 %v610
      %906 = vmatprep.subr.mxu0 %v619
      %907 = vmatpush1.msra.mxu0 %v618
      %908 = vmatprep.mubr.f32.mxu0 %v628
      %909 = vmatmul.mubr.f32.gmra.mrb[0].mxu0 %v627
      %v910 = vpop.f32.mrb[0].mxu0
      %v911 = vadd.f32 0.0, %v910
      %v912 = vpop.f32.mrb[0].mxu0
      %v913 = vadd.f32 0.0, %v912
      %914 = vdwg.mxu0
      %v923 = vcombine.low %v698, %v700
      %v924 = vcombine.low %v769, %v771
      %v926 = vunpack.c.l.s4 1983009808
      %v927 = vunpack.c.0.s8 %v926
      %v928 = vlaneseq
      %v929 = vshrl.u32 %v928, 7
      %v930 = vsub.s32 %v927, %v929
      %v931 = vrot.slane %v923, %v930
      %v933 = vunpack.c.l.s4 1983009808
      %v934 = vunpack.c.0.s8 %v933
      %v935 = vlaneseq
      %v936 = vshrl.u32 %v935, 7
      %v937 = vsub.s32 %v934, %v936
      %v938 = vrot.slane %v924, %v937
      %v939 = vcombine.low %v931, %v938
      %v940 = vcombine.low %v840, %v842
      %v941 = vcombine.low %v911, %v913
      %v943 = vunpack.c.l.s4 1983009808
      %v944 = vunpack.c.0.s8 %v943
      %v945 = vlaneseq
      %v946 = vshrl.u32 %v945, 7
      %v947 = vsub.s32 %v944, %v946
      %v948 = vrot.slane %v940, %v947
      %v950 = vunpack.c.l.s4 1983009808
      %v951 = vunpack.c.0.s8 %v950
      %v952 = vlaneseq
      %v953 = vshrl.u32 %v952, 7
      %v954 = vsub.s32 %v951, %v953
      %v955 = vrot.slane %v941, %v954
      %v956 = vcombine.low %v948, %v955
      %v959 = vadd.f32 %v362, %v939
      %v960 = vadd.f32 %v363, %v956
      %v961 = vxor.u32 %v959, 2147483648
      %v962 = vmul.f32 %v961, 1.442695
      %v963 = vpow.pop %v962
      %v964 = vadd.f32 %v963, 1.0
      %v965 = vrcp.pop %v964
      %v966 = vmul.f32 1.0, %v965
      %v968 = vrot.slane %v959, 4
      %v970 = vxor.u32 %v968, 2147483648
      %v971 = vmul.f32 %v970, 1.442695
      %v972 = vpow.pop %v971
      %v973 = vadd.f32 %v972, 1.0
      %v974 = vrcp.pop %v973
      %v975 = vmul.f32 1.0, %v974
      %v976 = vtanh.pop %v960
      %v978 = vrot.slane %v960, 4
      %v980 = vxor.u32 %v978, 2147483648
      %v981 = vmul.f32 %v980, 1.442695
      %v982 = vpow.pop %v981
      %v983 = vadd.f32 %v982, 1.0
      %v984 = vrcp.pop %v983
      %v985 = vmul.f32 1.0, %v984
      %v986 = vmul.f32 %v975, %v358
      %v987 = vmul.f32 %v966, %v976
      %v988 = vadd.f32 %v986, %v987
      %v989 = vtanh.pop %v988
      %v990 = vmul.f32 %v985, %v989
      %v991 = vld [vmem:[%s3] sm:$0xff]
      %v992 = vld [vmem:[%s3 + $0x8] sm:$0xff]
      %v993 = vld [vmem:[%s3 + $0x10] sm:$0xff]
      %v994 = vld [vmem:[%s3 + $0x18] sm:$0xff]
      %v995 = vld [vmem:[%s3 + $0x20] sm:$0xff]
      %v996 = vld [vmem:[%s3 + $0x28] sm:$0xff]
      %v997 = vld [vmem:[%s3 + $0x30] sm:$0xff]
      %v998 = vld [vmem:[%s3 + $0x38] sm:$0xff]
      %v999 = vld [vmem:[%s3 + $0x40] sm:$0xff]
      %v1000 = vld [vmem:[%s3 + $0x48] sm:$0xff]
      %v1001 = vld [vmem:[%s3 + $0x50] sm:$0xff]
      %v1002 = vld [vmem:[%s3 + $0x58] sm:$0xff]
      %v1003 = vld [vmem:[%s3 + $0x60] sm:$0xff]
      %v1004 = vld [vmem:[%s3 + $0x68] sm:$0xff]
      %v1005 = vld [vmem:[%s3 + $0x70] sm:$0xff]
      %v1006 = vld [vmem:[%s3 + $0x78] sm:$0xff]
      %v1007 = vld [vmem:[%s3 + $0x80] sm:$0xff]
      %v1008 = vld [vmem:[%s3 + $0x88] sm:$0xff]
      %v1009 = vld [vmem:[%s3 + $0x90] sm:$0xff]
      %v1010 = vld [vmem:[%s3 + $0x98] sm:$0xff]
      %v1011 = vld [vmem:[%s3 + $0xa0] sm:$0xff]
      %v1012 = vld [vmem:[%s3 + $0xa8] sm:$0xff]
      %v1013 = vld [vmem:[%s3 + $0xb0] sm:$0xff]
      %v1014 = vld [vmem:[%s3 + $0xb8] sm:$0xff]
      %v1015 = vld [vmem:[%s3 + $0xc0] sm:$0xff]
      %v1016 = vld [vmem:[%s3 + $0xc8] sm:$0xff]
      %v1017 = vld [vmem:[%s3 + $0xd0] sm:$0xff]
      %v1018 = vld [vmem:[%s3 + $0xd8] sm:$0xff]
      %v1019 = vld [vmem:[%s3 + $0xe0] sm:$0xff]
      %v1020 = vld [vmem:[%s3 + $0xe8] sm:$0xff]
      %v1021 = vld [vmem:[%s3 + $0xf0] sm:$0xff]
      %v1022 = vld [vmem:[%s3 + $0xf8] sm:$0xff]
      %v1023 = vld [vmem:[#allocation6] sm:$0x1]
      %v1025 = vlaneseq
      %v1026 = vshrl.u32 %v1025, 7
      %v1027 = vsub.s32 0, %v1026
      %v1028 = vrot.slane %v1023, %v1027
      %v1032 = vunpack.c.l.s4 1983009808
      %v1033 = vunpack.c.0.s8 %v1032
      %v1034 = vlaneseq
      %v1035 = vshrl.u32 %v1034, 7
      %v1036 = vsub.s32 %v1033, %v1035
      %v1037 = vrot.slane %v990, %v1036
      %v1038 = vcombine.high %v1037, %v1037
      %1041 = vmatprep.subr.mxu0 0.0
      %1042 = vmatpush1.msra.mxu0 %v991
      %1043 = vmatprep.subr.mxu0 0.0
      %1044 = vmatpush1.msra.mxu0 %v992
      %1045 = vmatprep.subr.mxu0 0.0
      %1046 = vmatpush1.msra.mxu0 %v993
      %1047 = vmatprep.subr.mxu0 0.0
      %1048 = vmatpush1.msra.mxu0 %v994
      %1049 = vmatprep.subr.mxu0 0.0
      %1050 = vmatpush1.msra.mxu0 %v995
      %1051 = vmatprep.subr.mxu0 0.0
      %1052 = vmatpush1.msra.mxu0 %v996
      %1053 = vmatprep.subr.mxu0 0.0
      %1054 = vmatpush1.msra.mxu0 %v997
      %1055 = vmatprep.subr.mxu0 0.0
      %1056 = vmatpush1.msra.mxu0 %v998
      %1057 = vmatprep.subr.mxu0 0.0
      %1058 = vmatpush1.msra.mxu0 %v999
      %1059 = vmatprep.subr.mxu0 0.0
      %1060 = vmatpush1.msra.mxu0 %v1000
      %1061 = vmatprep.subr.mxu0 0.0
      %1062 = vmatpush1.msra.mxu0 %v1001
      %1063 = vmatprep.subr.mxu0 0.0
      %1064 = vmatpush1.msra.mxu0 %v1002
      %1065 = vmatprep.subr.mxu0 0.0
      %1066 = vmatpush1.msra.mxu0 %v1003
      %1067 = vmatprep.subr.mxu0 0.0
      %1068 = vmatpush1.msra.mxu0 %v1004
      %1069 = vmatprep.subr.mxu0 0.0
      %1070 = vmatpush1.msra.mxu0 %v1005
      %1071 = vmatprep.subr.mxu0 0.0
      %1072 = vmatpush1.msra.mxu0 %v1006
      %1073 = vmatprep.subr.mxu0 0.0
      %1074 = vmatpush1.msra.mxu0 %v1007
      %1075 = vmatprep.subr.mxu0 0.0
      %1076 = vmatpush1.msra.mxu0 %v1008
      %1077 = vmatprep.subr.mxu0 0.0
      %1078 = vmatpush1.msra.mxu0 %v1009
      %1079 = vmatprep.subr.mxu0 0.0
      %1080 = vmatpush1.msra.mxu0 %v1010
      %1081 = vmatprep.subr.mxu0 0.0
      %1082 = vmatpush1.msra.mxu0 %v1011
      %1083 = vmatprep.subr.mxu0 0.0
      %1084 = vmatpush1.msra.mxu0 %v1012
      %1085 = vmatprep.subr.mxu0 0.0
      %1086 = vmatpush1.msra.mxu0 %v1013
      %1087 = vmatprep.subr.mxu0 0.0
      %1088 = vmatpush1.msra.mxu0 %v1014
      %1089 = vmatprep.subr.mxu0 0.0
      %1090 = vmatpush1.msra.mxu0 %v1015
      %1091 = vmatprep.subr.mxu0 0.0
      %1092 = vmatpush1.msra.mxu0 %v1016
      %1093 = vmatprep.subr.mxu0 0.0
      %1094 = vmatpush1.msra.mxu0 %v1017
      %1095 = vmatprep.subr.mxu0 0.0
      %1096 = vmatpush1.msra.mxu0 %v1018
      %1097 = vmatprep.subr.mxu0 0.0
      %1098 = vmatpush1.msra.mxu0 %v1019
      %1099 = vmatprep.subr.mxu0 0.0
      %1100 = vmatpush1.msra.mxu0 %v1020
      %1101 = vmatprep.subr.mxu0 0.0
      %1102 = vmatpush1.msra.mxu0 %v1021
      %1103 = vmatprep.subr.mxu0 0.0
      %1104 = vmatpush1.msra.mxu0 %v1022
      %1105 = vmatprep.mubr.f32.mxu0 %v1038
      %1106 = vmatmul.mubr.f32.gmra.mrb[0].mxu0 %v1037
      %v1107 = vpop.f32.mrb[0].mxu0
      %v1108 = vadd.f32 %v1028, %v1107
      %v1109 = vpop.f32.mrb[0].mxu0
      %1110 = vdwg.mxu0
      %s1111 = smul.u32 %s352, 2
      %s1112 = scalar_lea.vmem %s1, %s1111
      %v1113 = vld [vmem:[%s1112] sm:$0x3]
      %v1114 = vadd.f32 %v1108, %v1113
      %v1115 = vsel %vm346, %v1114, -inf
      %1116 = vmax.xlane.f32.xlu0 %v1115
      %v1117 = vpop.xlane.xlu0 %1116
      %v1118 = vsub.f32 %v1114, %v1117
      %v1119 = vmul.f32 %v1118, 1.442695
      %v1120 = vpow.pop %v1119
      %v1121 = vsel %vm346, %v1120, 0.0
      %1122 = vadd.xlane.f32.xlu0 %v1121
      %v1123 = vpop.xlane.xlu0 %1122
      %v1124 = vrcp.pop %v1123
      %v1125 = vmul.f32 %v1120, %v1124
      %1127 = vset.pattern.permute.xlu0 0
      %1128 = vperm.xlu0 %1127, %v1125
      %v1129 = vpop.permute.xlu0 %1128
      %v1131 = vunpack.c.l.s4 269488144
      %v1132 = vunpack.c.0.s8 %v1131
      %v1133 = vlaneseq
      %v1134 = vshrl.u32 %v1133, 7
      %v1135 = vsub.s32 %v1132, %v1134
      %v1136 = vrot.slane %v1129, %v1135
      %v1138 = vmul.f32 %v357, %v1136
      %1139 = vset.pattern.permute.xlu0 1
      %1140 = vperm.xlu0 %1139, %v1125
      %v1141 = vpop.permute.xlu0 %1140
      %v1143 = vunpack.c.l.s4 269488144
      %v1144 = vunpack.c.0.s8 %v1143
      %v1145 = vlaneseq
      %v1146 = vshrl.u32 %v1145, 7
      %v1147 = vsub.s32 %v1144, %v1146
      %v1148 = vrot.slane %v1141, %v1147
      %v1150 = vmul.f32 %v990, %v1148
      %v1151 = vadd.f32 %v1138, %v1150
      %s1152 = scalar_lea.vmem %s11, %s1111
      %1153 = vst.msk [vmem:[%s1152] sm:$0x3] %vm346, %v1125
      %v1154 = vld [vmem:[%s5] sm:$0xff]
      %v1155 = vld [vmem:[%s5 + $0x8] sm:$0xff]
      %v1156 = vld [vmem:[%s5 + $0x10] sm:$0xff]
      %v1157 = vld [vmem:[%s5 + $0x18] sm:$0xff]
      %v1158 = vld [vmem:[%s5 + $0x20] sm:$0xff]
      %v1159 = vld [vmem:[%s5 + $0x28] sm:$0xff]
      %v1160 = vld [vmem:[%s5 + $0x30] sm:$0xff]
      %v1161 = vld [vmem:[%s5 + $0x38] sm:$0xff]
      %v1162 = vld [vmem:[%s5 + $0x40] sm:$0xff]
      %v1163 = vld [vmem:[%s5 + $0x48] sm:$0xff]
      %v1164 = vld [vmem:[%s5 + $0x50] sm:$0xff]
      %v1165 = vld [vmem:[%s5 + $0x58] sm:$0xff]
      %v1166 = vld [vmem:[%s5 + $0x60] sm:$0xff]
      %v1167 = vld [vmem:[%s5 + $0x68] sm:$0xff]
      %v1168 = vld [vmem:[%s5 + $0x70] sm:$0xff]
      %v1169 = vld [vmem:[%s5 + $0x78] sm:$0xff]
      %v1170 = vld [vmem:[%s5 + $0x80] sm:$0xff]
      %v1171 = vld [vmem:[%s5 + $0x88] sm:$0xff]
      %v1172 = vld [vmem:[%s5 + $0x90] sm:$0xff]
      %v1173 = vld [vmem:[%s5 + $0x98] sm:$0xff]
      %v1174 = vld [vmem:[%s5 + $0xa0] sm:$0xff]
      %v1175 = vld [vmem:[%s5 + $0xa8] sm:$0xff]
      %v1176 = vld [vmem:[%s5 + $0xb0] sm:$0xff]
      %v1177 = vld [vmem:[%s5 + $0xb8] sm:$0xff]
      %v1178 = vld [vmem:[%s5 + $0xc0] sm:$0xff]
      %v1179 = vld [vmem:[%s5 + $0xc8] sm:$0xff]
      %v1180 = vld [vmem:[%s5 + $0xd0] sm:$0xff]
      %v1181 = vld [vmem:[%s5 + $0xd8] sm:$0xff]
      %v1182 = vld [vmem:[%s5 + $0xe0] sm:$0xff]
      %v1183 = vld [vmem:[%s5 + $0xe8] sm:$0xff]
      %v1184 = vld [vmem:[%s5 + $0xf0] sm:$0xff]
      %v1185 = vld [vmem:[%s5 + $0xf8] sm:$0xff]
      %v1186 = vld [vmem:[%s6] sm:$0x1]
      %v1188 = vlaneseq
      %v1189 = vshrl.u32 %v1188, 7
      %v1190 = vsub.s32 0, %v1189
      %v1191 = vrot.slane %v1186, %v1190
      %v1195 = vunpack.c.l.s4 1983009808
      %v1196 = vunpack.c.0.s8 %v1195
      %v1197 = vlaneseq
      %v1198 = vshrl.u32 %v1197, 7
      %v1199 = vsub.s32 %v1196, %v1198
      %v1200 = vrot.slane %v1151, %v1199
      %v1201 = vcombine.high %v1200, %v1200
      %1204 = vmatprep.subr.mxu0 0.0
      %1205 = vmatpush1.msra.mxu0 %v1154
      %1206 = vmatprep.subr.mxu0 0.0
      %1207 = vmatpush1.msra.mxu0 %v1155
      %1208 = vmatprep.subr.mxu0 0.0
      %1209 = vmatpush1.msra.mxu0 %v1156
      %1210 = vmatprep.subr.mxu0 0.0
      %1211 = vmatpush1.msra.mxu0 %v1157
      %1212 = vmatprep.subr.mxu0 0.0
      %1213 = vmatpush1.msra.mxu0 %v1158
      %1214 = vmatprep.subr.mxu0 0.0
      %1215 = vmatpush1.msra.mxu0 %v1159
      %1216 = vmatprep.subr.mxu0 0.0
      %1217 = vmatpush1.msra.mxu0 %v1160
      %1218 = vmatprep.subr.mxu0 0.0
      %1219 = vmatpush1.msra.mxu0 %v1161
      %1220 = vmatprep.subr.mxu0 0.0
      %1221 = vmatpush1.msra.mxu0 %v1162
      %1222 = vmatprep.subr.mxu0 0.0
      %1223 = vmatpush1.msra.mxu0 %v1163
      %1224 = vmatprep.subr.mxu0 0.0
      %1225 = vmatpush1.msra.mxu0 %v1164
      %1226 = vmatprep.subr.mxu0 0.0
      %1227 = vmatpush1.msra.mxu0 %v1165
      %1228 = vmatprep.subr.mxu0 0.0
      %1229 = vmatpush1.msra.mxu0 %v1166
      %1230 = vmatprep.subr.mxu0 0.0
      %1231 = vmatpush1.msra.mxu0 %v1167
      %1232 = vmatprep.subr.mxu0 0.0
      %1233 = vmatpush1.msra.mxu0 %v1168
      %1234 = vmatprep.subr.mxu0 0.0
      %1235 = vmatpush1.msra.mxu0 %v1169
      %1236 = vmatprep.subr.mxu0 0.0
      %1237 = vmatpush1.msra.mxu0 %v1170
      %1238 = vmatprep.subr.mxu0 0.0
      %1239 = vmatpush1.msra.mxu0 %v1171
      %1240 = vmatprep.subr.mxu0 0.0
      %1241 = vmatpush1.msra.mxu0 %v1172
      %1242 = vmatprep.subr.mxu0 0.0
      %1243 = vmatpush1.msra.mxu0 %v1173
      %1244 = vmatprep.subr.mxu0 0.0
      %1245 = vmatpush1.msra.mxu0 %v1174
      %1246 = vmatprep.subr.mxu0 0.0
      %1247 = vmatpush1.msra.mxu0 %v1175
      %1248 = vmatprep.subr.mxu0 0.0
      %1249 = vmatpush1.msra.mxu0 %v1176
      %1250 = vmatprep.subr.mxu0 0.0
      %1251 = vmatpush1.msra.mxu0 %v1177
      %1252 = vmatprep.subr.mxu0 0.0
      %1253 = vmatpush1.msra.mxu0 %v1178
      %1254 = vmatprep.subr.mxu0 0.0
      %1255 = vmatpush1.msra.mxu0 %v1179
      %1256 = vmatprep.subr.mxu0 0.0
      %1257 = vmatpush1.msra.mxu0 %v1180
      %1258 = vmatprep.subr.mxu0 0.0
      %1259 = vmatpush1.msra.mxu0 %v1181
      %1260 = vmatprep.subr.mxu0 0.0
      %1261 = vmatpush1.msra.mxu0 %v1182
      %1262 = vmatprep.subr.mxu0 0.0
      %1263 = vmatpush1.msra.mxu0 %v1183
      %1264 = vmatprep.subr.mxu0 0.0
      %1265 = vmatpush1.msra.mxu0 %v1184
      %1266 = vmatprep.subr.mxu0 0.0
      %1267 = vmatpush1.msra.mxu0 %v1185
      %1268 = vmatprep.mubr.f32.mxu0 %v1201
      %1269 = vmatmul.mubr.f32.gmra.mrb[0].mxu0 %v1200
      %v1270 = vpop.f32.mrb[0].mxu0
      %v1271 = vadd.f32 %v1191, %v1270
      %v1272 = vpop.f32.mrb[0].mxu0
      %1273 = vdwg.mxu0
      %s1274 = scalar_lea.vmem %s9, %s1111
      %1275 = vst.msk [vmem:[%s1274] sm:$0x3] %vm224, %v1271
      %v1276 = vld [vmem:[%s7] sm:$0xff]
      %v1277 = vld [vmem:[%s7 + $0x8] sm:$0xff]
      %v1278 = vld [vmem:[%s7 + $0x10] sm:$0xff]
      %v1279 = vld [vmem:[%s7 + $0x18] sm:$0xff]
      %v1280 = vld [vmem:[%s7 + $0x20] sm:$0xff]
      %v1281 = vld [vmem:[%s7 + $0x28] sm:$0xff]
      %v1282 = vld [vmem:[%s7 + $0x30] sm:$0xff]
      %v1283 = vld [vmem:[%s7 + $0x38] sm:$0xff]
      %v1284 = vld [vmem:[%s7 + $0x40] sm:$0xff]
      %v1285 = vld [vmem:[%s7 + $0x48] sm:$0xff]
      %v1286 = vld [vmem:[%s7 + $0x50] sm:$0xff]
      %v1287 = vld [vmem:[%s7 + $0x58] sm:$0xff]
      %v1288 = vld [vmem:[%s7 + $0x60] sm:$0xff]
      %v1289 = vld [vmem:[%s7 + $0x68] sm:$0xff]
      %v1290 = vld [vmem:[%s7 + $0x70] sm:$0xff]
      %v1291 = vld [vmem:[%s7 + $0x78] sm:$0xff]
      %v1292 = vld [vmem:[%s7 + $0x80] sm:$0xff]
      %v1293 = vld [vmem:[%s7 + $0x88] sm:$0xff]
      %v1294 = vld [vmem:[%s7 + $0x90] sm:$0xff]
      %v1295 = vld [vmem:[%s7 + $0x98] sm:$0xff]
      %v1296 = vld [vmem:[%s7 + $0xa0] sm:$0xff]
      %v1297 = vld [vmem:[%s7 + $0xa8] sm:$0xff]
      %v1298 = vld [vmem:[%s7 + $0xb0] sm:$0xff]
      %v1299 = vld [vmem:[%s7 + $0xb8] sm:$0xff]
      %v1300 = vld [vmem:[%s7 + $0xc0] sm:$0xff]
      %v1301 = vld [vmem:[%s7 + $0xc8] sm:$0xff]
      %v1302 = vld [vmem:[%s7 + $0xd0] sm:$0xff]
      %v1303 = vld [vmem:[%s7 + $0xd8] sm:$0xff]
      %v1304 = vld [vmem:[%s7 + $0xe0] sm:$0xff]
      %v1305 = vld [vmem:[%s7 + $0xe8] sm:$0xff]
      %v1306 = vld [vmem:[%s7 + $0xf0] sm:$0xff]
      %v1307 = vld [vmem:[%s7 + $0xf8] sm:$0xff]
      %v1308 = vld [vmem:[#allocation8] sm:$0x1]
      %v1310 = vlaneseq
      %v1311 = vshrl.u32 %v1310, 7
      %v1312 = vsub.s32 0, %v1311
      %v1313 = vrot.slane %v1308, %v1312
      %v1317 = vunpack.c.l.s4 1983009808
      %v1318 = vunpack.c.0.s8 %v1317
      %v1319 = vlaneseq
      %v1320 = vshrl.u32 %v1319, 7
      %v1321 = vsub.s32 %v1318, %v1320
      %v1322 = vrot.slane %v988, %v1321
      %v1323 = vcombine.high %v1322, %v1322
      %1326 = vmatprep.subr.mxu0 0.0
      %1327 = vmatpush1.msra.mxu0 %v1276
      %1328 = vmatprep.subr.mxu0 0.0
      %1329 = vmatpush1.msra.mxu0 %v1277
      %1330 = vmatprep.subr.mxu0 0.0
      %1331 = vmatpush1.msra.mxu0 %v1278
      %1332 = vmatprep.subr.mxu0 0.0
      %1333 = vmatpush1.msra.mxu0 %v1279
      %1334 = vmatprep.subr.mxu0 0.0
      %1335 = vmatpush1.msra.mxu0 %v1280
      %1336 = vmatprep.subr.mxu0 0.0
      %1337 = vmatpush1.msra.mxu0 %v1281
      %1338 = vmatprep.subr.mxu0 0.0
      %1339 = vmatpush1.msra.mxu0 %v1282
      %1340 = vmatprep.subr.mxu0 0.0
      %1341 = vmatpush1.msra.mxu0 %v1283
      %1342 = vmatprep.subr.mxu0 0.0
      %1343 = vmatpush1.msra.mxu0 %v1284
      %1344 = vmatprep.subr.mxu0 0.0
      %1345 = vmatpush1.msra.mxu0 %v1285
      %1346 = vmatprep.subr.mxu0 0.0
      %1347 = vmatpush1.msra.mxu0 %v1286
      %1348 = vmatprep.subr.mxu0 0.0
      %1349 = vmatpush1.msra.mxu0 %v1287
      %1350 = vmatprep.subr.mxu0 0.0
      %1351 = vmatpush1.msra.mxu0 %v1288
      %1352 = vmatprep.subr.mxu0 0.0
      %1353 = vmatpush1.msra.mxu0 %v1289
      %1354 = vmatprep.subr.mxu0 0.0
      %1355 = vmatpush1.msra.mxu0 %v1290
      %1356 = vmatprep.subr.mxu0 0.0
      %1357 = vmatpush1.msra.mxu0 %v1291
      %1358 = vmatprep.subr.mxu0 0.0
      %1359 = vmatpush1.msra.mxu0 %v1292
      %1360 = vmatprep.subr.mxu0 0.0
      %1361 = vmatpush1.msra.mxu0 %v1293
      %1362 = vmatprep.subr.mxu0 0.0
      %1363 = vmatpush1.msra.mxu0 %v1294
      %1364 = vmatprep.subr.mxu0 0.0
      %1365 = vmatpush1.msra.mxu0 %v1295
      %1366 = vmatprep.subr.mxu0 0.0
      %1367 = vmatpush1.msra.mxu0 %v1296
      %1368 = vmatprep.subr.mxu0 0.0
      %1369 = vmatpush1.msra.mxu0 %v1297
      %1370 = vmatprep.subr.mxu0 0.0
      %1371 = vmatpush1.msra.mxu0 %v1298
      %1372 = vmatprep.subr.mxu0 0.0
      %1373 = vmatpush1.msra.mxu0 %v1299
      %1374 = vmatprep.subr.mxu0 0.0
      %1375 = vmatpush1.msra.mxu0 %v1300
      %1376 = vmatprep.subr.mxu0 0.0
      %1377 = vmatpush1.msra.mxu0 %v1301
      %1378 = vmatprep.subr.mxu0 0.0
      %1379 = vmatpush1.msra.mxu0 %v1302
      %1380 = vmatprep.subr.mxu0 0.0
      %1381 = vmatpush1.msra.mxu0 %v1303
      %1382 = vmatprep.subr.mxu0 0.0
      %1383 = vmatpush1.msra.mxu0 %v1304
      %1384 = vmatprep.subr.mxu0 0.0
      %1385 = vmatpush1.msra.mxu0 %v1305
      %1386 = vmatprep.subr.mxu0 0.0
      %1387 = vmatpush1.msra.mxu0 %v1306
      %1388 = vmatprep.subr.mxu0 0.0
      %1389 = vmatpush1.msra.mxu0 %v1307
      %1390 = vmatprep.mubr.f32.mxu0 %v1323
      %1391 = vmatmul.mubr.f32.gmra.mrb[0].mxu0 %v1322
      %v1392 = vpop.f32.mrb[0].mxu0
      %v1393 = vadd.f32 %v1313, %v1392
      %v1394 = vpop.f32.mrb[0].mxu0
      %1395 = vdwg.mxu0
      %s1396 = scalar_lea.vmem %s10, %s1111
      %1397 = vst.msk [vmem:[%s1396] sm:$0x3] %vm346, %v1393
      %1398 = vst [vmem:[#allocation2] sm:$0xf] %v1151
      %1399 = vst [vmem:[#allocation3] sm:$0xf] %v988
    $region54: #{ada_forward.3} parent=1 // loop_footer
      %s356 = sadd.s32 1, %s352
    $region55: #{ada_forward.3} parent=1 // loop_footer_branch
      %351 = sbr.rel target = $region51
    $region56: #{ada_forward.3} parent=1 // loop_exit
      _
    // Predicated region
    $region57: #{ada_forward.3} parent=1 // pred_check
      _
    $region58: #{ada_forward.3} parent=1 // pred_check_branch
      %1401 = sbr.rel (0) target = $region60
    $region59: #{ada_forward.3} parent=1 // pred_region
      _
    $region60: #{ada_forward.3} parent=1 // pred_fallthru
      _
    // Predicated region
    $region61: #{ada_forward.3} parent=1 // pred_check
      _
    $region62: #{ada_forward.3} parent=1 // pred_check_branch
      %1403 = sbr.rel (0) target = $region64
    $region63: #{ada_forward.3} parent=1 // pred_region
      _
    $region64: #{ada_forward.3} parent=1 // pred_fallthru
      _
    // Predicated region
    $region65: #{ada_forward.3} parent=1 // pred_check
      _
    $region66: #{ada_forward.3} parent=1 // pred_check_branch
      %1405 = sbr.rel (0) target = $region68
    $region67: #{ada_forward.3} parent=1 // pred_region
      _
    $region68: #{ada_forward.3} parent=1 // pred_fallthru
      _
    // Predicated region
    $region69: #{ada_forward.3} parent=1 // pred_check
      _
    $region70: #{ada_forward.3} parent=1 // pred_check_branch
      %1407 = sbr.rel (0) target = $region72
    $region71: #{ada_forward.3} parent=1 // pred_region
      _
    $region72: #{ada_forward.3} parent=1 // pred_fallthru
      _
    // Predicated region
    $region73: #{ada_forward.3} parent=1 // pred_check
      _
    $region74: #{ada_forward.3} parent=1 // pred_check_branch
      %1409 = sbr.rel (0) target = $region76
    $region75: #{ada_forward.3} parent=1 // pred_region
      _
    $region76: #{ada_forward.3} parent=1 // pred_fallthru
      _
    // Predicated region
    $region77: #{ada_forward.3} parent=1 // pred_check
      _
    $region78: #{ada_forward.3} parent=1 // pred_check_branch
      %1411 = sbr.rel (0) target = $region80
    $region79: #{ada_forward.3} parent=1 // pred_region
      _
    $region80: #{ada_forward.3} parent=1 // pred_fallthru
      _
    %1412 = vsyncpa [#allocation5], 1
    %1413 = vsyncpa [#allocation7], 1

</llo_original>
